<compile_context>
chip_gen: v7x
topology: tpu7x:2x2x1
jax: 0.10.0
libtpu: 0.0.40
codegen_flags: <defaults>
</compile_context>

<pallas_src>
import jax
import jax.numpy as jnp
from jax.experimental import pallas as pl
from jax.experimental.pallas import tpu as pltpu

_LANE = 128


def _ceil_to(v, m):
    return ((v + m - 1) // m) * m


def _pad_axis(a, axis, target):
    pad = target - a.shape[axis]
    if pad <= 0:
        return a
    widths = [(0, 0)] * a.ndim
    widths[axis] = (0, pad)
    return jnp.pad(a, widths)


def _basic_block_kernel(x_ref, w1_ref, w2_ref, s1_ref, b1_ref, s2_ref, b2_ref, o_ref):
    """Fused conv3x3+bn+relu -> conv3x3+bn+residual+relu on one NHWC image block."""
    H, W, Cp = x_ref.shape[1], x_ref.shape[2], x_ref.shape[3]

    def pad_hw(a):
        # 1-pixel zero halo on (H, W) of an (H, W, Cp) value, built in VMEM.
        zr = jnp.zeros((1, W, Cp), a.dtype)
        a = jnp.concatenate([zr, a, zr], axis=0)
        zc = jnp.zeros((H + 2, 1, Cp), a.dtype)
        return jnp.concatenate([zc, a, zc], axis=1)

    def conv3x3(a_bf16, w_ref):
        # im2col: concat the 9 shifted taps along the lane axis -> one MXU dot
        # with K = 9*Cp (row order of w_ref is (kh, kw, cin), matching this concat).
        p = pad_hw(a_bf16)                                       # (H+2, W+2, Cp)
        cols = [p[dy:dy + H, dx:dx + W, :] for dy in range(3) for dx in range(3)]
        patch = jnp.concatenate(cols, axis=-1).reshape(H * W, 9 * Cp)
        return jnp.dot(patch, w_ref[...], preferred_element_type=jnp.float32)

    x = x_ref[0]                                                 # (H, W, Cp) bf16

    # conv1 -> bn1 -> relu  (intermediate stays in VMEM, bf16)
    y = conv3x3(x, w1_ref)                                       # (H*W, Cp) f32
    y = jnp.maximum(y * s1_ref[...] + b1_ref[...], 0.0)
    y = y.astype(jnp.bfloat16).reshape(H, W, Cp)

    # conv2 -> bn2 -> (+ residual) -> relu
    z = conv3x3(y, w2_ref)                                       # (H*W, Cp) f32
    z = z * s2_ref[...] + b2_ref[...]
    z = z + x.reshape(H * W, Cp).astype(jnp.float32)
    z = jnp.maximum(z, 0.0)

    o_ref[...] = z.reshape(1, H, W, Cp).astype(o_ref.dtype)


def basic_block_forward_nhwc(x, params):
    """BasicBlock.forward on NHWC input (native layout of the fused kernel)."""
    N, H, W, C = x.shape
    assert params["w1"].shape == (3, 3, C, C), "BasicBlock assumes Cin == Cout, stride=1"
    Cp = max(_LANE, _ceil_to(C, _LANE))  # lane-dense channel axis

    # bf16 activations; padded channels are zero so they stay zero through both convs.
    x_p = _pad_axis(x, 3, Cp).astype(jnp.bfloat16)

    def prep_w(w):  # (3,3,C,C) -> lane-dense 2-D im2col slab (9*Cp, Cp), bf16
        wp = _pad_axis(_pad_axis(w, 2, Cp), 3, Cp)
        return wp.reshape(9 * Cp, Cp).astype(jnp.bfloat16)

    def prep_v(v):  # (C,) -> (1, Cp) f32 (zero-padded)
        return _pad_axis(v, 0, Cp).reshape(1, Cp).astype(jnp.float32)

    w1 = prep_w(params["w1"])
    w2 = prep_w(params["w2"])
    s1 = prep_v(params["bn1_scale"])
    b1 = prep_v(params["bn1_bias"])
    s2 = prep_v(params["bn2_scale"])
    b2 = prep_v(params["bn2_bias"])

    out_p = pl.pallas_call(
        _basic_block_kernel,
        out_shape=jax.ShapeDtypeStruct((N, H, W, Cp), jnp.float32),
        grid_spec=pltpu.PrefetchScalarGridSpec(
            num_scalar_prefetch=0,
            grid=(N,),
            in_specs=[
                pl.BlockSpec((1, H, W, Cp), lambda n: (n, 0, 0, 0)),
                pl.BlockSpec((9 * Cp, Cp), lambda n: (0, 0)),
                pl.BlockSpec((9 * Cp, Cp), lambda n: (0, 0)),
                pl.BlockSpec((1, Cp), lambda n: (0, 0)),
                pl.BlockSpec((1, Cp), lambda n: (0, 0)),
                pl.BlockSpec((1, Cp), lambda n: (0, 0)),
                pl.BlockSpec((1, Cp), lambda n: (0, 0)),
            ],
            out_specs=pl.BlockSpec((1, H, W, Cp), lambda n: (n, 0, 0, 0)),
        ),
        compiler_params=pltpu.CompilerParams(
            dimension_semantics=("parallel",),
            vmem_limit_bytes=32 * 1024 * 1024,
        ),
    )(x_p, w1, w2, s1, b1, s2, b2)

    return out_p[:, :, :, :C]


@jax.jit
def basic_block_forward(x_nchw, params):
    """BasicBlock.forward on NCHW input (boundary layout plumbing only)."""
    x = jnp.transpose(x_nchw, (0, 2, 3, 1))        # NCHW -> NHWC
    out = basic_block_forward_nhwc(x, params)
    return jnp.transpose(out, (0, 3, 1, 2))        # NHWC -> NCHW


def _fold_bn(gamma, beta, running_mean, running_var, eps=1e-5):
    scale = gamma / jnp.sqrt(running_var + eps)
    bias = beta - running_mean * scale
    return scale, bias


def _init_params(key, inplanes, planes):
    k1, k2 = jax.random.split(key)
    # PyTorch conv weight layout (Cout, Cin, 3, 3) -> (3, 3, Cin, Cout)
    w1_t = jax.random.normal(k1, (planes, inplanes, 3, 3), jnp.float32) * 0.1
    w2_t = jax.random.normal(k2, (planes, planes, 3, 3), jnp.float32) * 0.1
    w1 = jnp.transpose(w1_t, (2, 3, 1, 0))
    w2 = jnp.transpose(w2_t, (2, 3, 1, 0))

    # BatchNorm2d defaults (eval mode): weight=1, bias=0, running_mean=0, running_var=1
    ones = jnp.ones((planes,), jnp.float32)
    zeros = jnp.zeros((planes,), jnp.float32)
    bn1_scale, bn1_bias = _fold_bn(ones, zeros, zeros, ones)
    bn2_scale, bn2_bias = _fold_bn(ones, zeros, zeros, ones)

    return dict(w1=w1, w2=w2,
                bn1_scale=bn1_scale, bn1_bias=bn1_bias,
                bn2_scale=bn2_scale, bn2_bias=bn2_bias)


def _reference(x_nchw, params):
    """Plain-JAX reference mirroring the kernel's bf16 input / bf16 intermediate casts."""
    f32 = jnp.float32
    xq = x_nchw.astype(jnp.bfloat16).astype(f32)
    w1q = params["w1"].astype(jnp.bfloat16).astype(f32)
    w2q = params["w2"].astype(jnp.bfloat16).astype(f32)

    def conv(x, w):  # x NCHW, w (3,3,Cin,Cout)
        w_oihw = jnp.transpose(w, (3, 2, 0, 1))
        return jax.lax.conv_general_dilated(
            x, w_oihw, window_strides=(1, 1), padding=((1, 1), (1, 1)),
            dimension_numbers=("NCHW", "OIHW", "NCHW"),
            precision=jax.lax.Precision.HIGHEST)

    def bn(x, s, b):
        return x * s[None, :, None, None] + b[None, :, None, None]

    out = jax.nn.relu(bn(conv(xq, w1q), params["bn1_scale"], params["bn1_bias"]))
    out = out.astype(jnp.bfloat16).astype(f32)     # kernel keeps intermediate in bf16
    out = bn(conv(out, w2q), params["bn2_scale"], params["bn2_bias"])
    out = jax.nn.relu(out + xq)
    return out


if __name__ == "__main__":
    key = jax.random.PRNGKey(0)
    kx, kp = jax.random.split(key)

    N, C, H, W = 2, 4, 16, 16          # inplanes = planes = 4, stride = 1
    x = jax.random.normal(kx, (N, C, H, W), jnp.float32)
    params = _init_params(kp, inplanes=C, planes=C)

    out = jax.block_until_ready(basic_block_forward(x, params))

    ref = _reference(x, params)
    assert out.shape == (N, C, H, W)
    max_err = float(jnp.max(jnp.abs(out - ref)))
    assert jnp.allclose(out, ref, atol=1e-3, rtol=1e-3), f"max abs err {max_err}"

    print("KERNEL_OK")
</pallas_src>

<mosaic_0001>
module attributes {stable_mosaic.version = 11 : i64} {
  func.func @_basic_block_kernel(%arg0: i32, %arg1: memref<1x16x16x128xbf16, #tpu.memory_space<vmem>>, %arg2: memref<1152x128xbf16, #tpu.memory_space<vmem>>, %arg3: memref<1152x128xbf16, #tpu.memory_space<vmem>>, %arg4: memref<1x128xf32, #tpu.memory_space<vmem>>, %arg5: memref<1x128xf32, #tpu.memory_space<vmem>>, %arg6: memref<1x128xf32, #tpu.memory_space<vmem>>, %arg7: memref<1x128xf32, #tpu.memory_space<vmem>>, %arg8: memref<1x16x16x128xf32, #tpu.memory_space<vmem>>) attributes {dimension_semantics = [#tpu.dimension_semantics<parallel>], iteration_bounds = array<i64: 2>, scalar_prefetch = 0 : i64, scratch_operands = 0 : i64, tpu.core_type = #tpu.core_type<tc>, window_params = [{transform_indices = @transform_0, window_bounds = array<i64: 1, 16, 16, 128>}, {pipeline_mode = #tpu.pipeline_mode<synchronous>, transform_indices = @transform_1, window_bounds = array<i64: 1152, 128>}, {pipeline_mode = #tpu.pipeline_mode<synchronous>, transform_indices = @transform_2, window_bounds = array<i64: 1152, 128>}, {pipeline_mode = #tpu.pipeline_mode<synchronous>, transform_indices = @transform_3, window_bounds = array<i64: 1, 128>}, {pipeline_mode = #tpu.pipeline_mode<synchronous>, transform_indices = @transform_4, window_bounds = array<i64: 1, 128>}, {pipeline_mode = #tpu.pipeline_mode<synchronous>, transform_indices = @transform_5, window_bounds = array<i64: 1, 128>}, {pipeline_mode = #tpu.pipeline_mode<synchronous>, transform_indices = @transform_6, window_bounds = array<i64: 1, 128>}, {transform_indices = @transform_7, window_bounds = array<i64: 1, 16, 16, 128>}]} {
    %c0 = arith.constant 0 : index
    %c0_0 = arith.constant 0 : index
    %c0_1 = arith.constant 0 : index
    %c0_2 = arith.constant 0 : index
    %0 = vector.load %arg1[%c0, %c0_0, %c0_1, %c0_2] : memref<1x16x16x128xbf16, #tpu.memory_space<vmem>>, vector<1x16x16x128xbf16>
    %1 = vector.shape_cast %0 : vector<1x16x16x128xbf16> to vector<16x16x128xbf16>
    %cst = arith.constant 0.000000e+00 : bf16
    %2 = vector.broadcast %cst : bf16 to vector<1x16x128xbf16>
    %3 = tpu.concatenate %2, %1, %2 in 0 : vector<1x16x128xbf16>, vector<16x16x128xbf16>, vector<1x16x128xbf16> -> vector<18x16x128xbf16>
    %cst_3 = arith.constant 0.000000e+00 : bf16
    %4 = vector.broadcast %cst_3 : bf16 to vector<18x1x128xbf16>
    %5 = tpu.concatenate %4, %3, %4 in 1 : vector<18x1x128xbf16>, vector<18x16x128xbf16>, vector<18x1x128xbf16> -> vector<18x18x128xbf16>
    %6 = vector.extract_strided_slice %5 {offsets = [0, 0, 0], sizes = [16, 16, 128], strides = [1, 1, 1]} : vector<18x18x128xbf16> to vector<16x16x128xbf16>
    %7 = vector.extract_strided_slice %5 {offsets = [0, 1, 0], sizes = [16, 16, 128], strides = [1, 1, 1]} : vector<18x18x128xbf16> to vector<16x16x128xbf16>
    %8 = vector.extract_strided_slice %5 {offsets = [0, 2, 0], sizes = [16, 16, 128], strides = [1, 1, 1]} : vector<18x18x128xbf16> to vector<16x16x128xbf16>
    %9 = vector.extract_strided_slice %5 {offsets = [1, 0, 0], sizes = [16, 16, 128], strides = [1, 1, 1]} : vector<18x18x128xbf16> to vector<16x16x128xbf16>
    %10 = vector.extract_strided_slice %5 {offsets = [1, 1, 0], sizes = [16, 16, 128], strides = [1, 1, 1]} : vector<18x18x128xbf16> to vector<16x16x128xbf16>
    %11 = vector.extract_strided_slice %5 {offsets = [1, 2, 0], sizes = [16, 16, 128], strides = [1, 1, 1]} : vector<18x18x128xbf16> to vector<16x16x128xbf16>
    %12 = vector.extract_strided_slice %5 {offsets = [2, 0, 0], sizes = [16, 16, 128], strides = [1, 1, 1]} : vector<18x18x128xbf16> to vector<16x16x128xbf16>
    %13 = vector.extract_strided_slice %5 {offsets = [2, 1, 0], sizes = [16, 16, 128], strides = [1, 1, 1]} : vector<18x18x128xbf16> to vector<16x16x128xbf16>
    %14 = vector.extract_strided_slice %5 {offsets = [2, 2, 0], sizes = [16, 16, 128], strides = [1, 1, 1]} : vector<18x18x128xbf16> to vector<16x16x128xbf16>
    %15 = tpu.concatenate %6, %7, %8, %9, %10, %11, %12, %13, %14 in 2 : vector<16x16x128xbf16>, vector<16x16x128xbf16>, vector<16x16x128xbf16>, vector<16x16x128xbf16>, vector<16x16x128xbf16>, vector<16x16x128xbf16>, vector<16x16x128xbf16>, vector<16x16x128xbf16>, vector<16x16x128xbf16> -> vector<16x16x1152xbf16>
    %16 = vector.shape_cast %15 : vector<16x16x1152xbf16> to vector<256x1152xbf16>
    %c0_4 = arith.constant 0 : index
    %c0_5 = arith.constant 0 : index
    %17 = vector.load %arg2[%c0_4, %c0_5] : memref<1152x128xbf16, #tpu.memory_space<vmem>>, vector<1152x128xbf16>
    %cst_6 = arith.constant dense<0.000000e+00> : vector<256x128xf32>
    %18 = tpu.matmul %16, %17, %cst_6 {dimension_numbers = #tpu.dot_dimension_numbers<[1], [0], [0], [1], [0, 0, 1, 1], [], []>} : vector<256x1152xbf16>, vector<1152x128xbf16>, vector<256x128xf32> -> vector<256x128xf32>
    %c0_7 = arith.constant 0 : index
    %c0_8 = arith.constant 0 : index
    %19 = vector.load %arg4[%c0_7, %c0_8] : memref<1x128xf32, #tpu.memory_space<vmem>>, vector<1x128xf32>
    %20 = vector.broadcast %19 : vector<1x128xf32> to vector<256x128xf32>
    %21 = arith.mulf %18, %20 : vector<256x128xf32>
    %c0_9 = arith.constant 0 : index
    %c0_10 = arith.constant 0 : index
    %22 = vector.load %arg5[%c0_9, %c0_10] : memref<1x128xf32, #tpu.memory_space<vmem>>, vector<1x128xf32>
    %23 = vector.broadcast %22 : vector<1x128xf32> to vector<256x128xf32>
    %24 = arith.addf %21, %23 : vector<256x128xf32>
    %cst_11 = arith.constant 0.000000e+00 : f32
    %25 = vector.broadcast %cst_11 : f32 to vector<256x128xf32>
    %26 = arith.maximumf %24, %25 : vector<256x128xf32>
    %27 = arith.truncf %26 : vector<256x128xf32> to vector<256x128xbf16>
    %28 = vector.shape_cast %27 : vector<256x128xbf16> to vector<16x16x128xbf16>
    %cst_12 = arith.constant 0.000000e+00 : bf16
    %29 = vector.broadcast %cst_12 : bf16 to vector<1x16x128xbf16>
    %30 = tpu.concatenate %29, %28, %29 in 0 : vector<1x16x128xbf16>, vector<16x16x128xbf16>, vector<1x16x128xbf16> -> vector<18x16x128xbf16>
    %cst_13 = arith.constant 0.000000e+00 : bf16
    %31 = vector.broadcast %cst_13 : bf16 to vector<18x1x128xbf16>
    %32 = tpu.concatenate %31, %30, %31 in 1 : vector<18x1x128xbf16>, vector<18x16x128xbf16>, vector<18x1x128xbf16> -> vector<18x18x128xbf16>
    %33 = vector.extract_strided_slice %32 {offsets = [0, 0, 0], sizes = [16, 16, 128], strides = [1, 1, 1]} : vector<18x18x128xbf16> to vector<16x16x128xbf16>
    %34 = vector.extract_strided_slice %32 {offsets = [0, 1, 0], sizes = [16, 16, 128], strides = [1, 1, 1]} : vector<18x18x128xbf16> to vector<16x16x128xbf16>
    %35 = vector.extract_strided_slice %32 {offsets = [0, 2, 0], sizes = [16, 16, 128], strides = [1, 1, 1]} : vector<18x18x128xbf16> to vector<16x16x128xbf16>
    %36 = vector.extract_strided_slice %32 {offsets = [1, 0, 0], sizes = [16, 16, 128], strides = [1, 1, 1]} : vector<18x18x128xbf16> to vector<16x16x128xbf16>
    %37 = vector.extract_strided_slice %32 {offsets = [1, 1, 0], sizes = [16, 16, 128], strides = [1, 1, 1]} : vector<18x18x128xbf16> to vector<16x16x128xbf16>
    %38 = vector.extract_strided_slice %32 {offsets = [1, 2, 0], sizes = [16, 16, 128], strides = [1, 1, 1]} : vector<18x18x128xbf16> to vector<16x16x128xbf16>
    %39 = vector.extract_strided_slice %32 {offsets = [2, 0, 0], sizes = [16, 16, 128], strides = [1, 1, 1]} : vector<18x18x128xbf16> to vector<16x16x128xbf16>
    %40 = vector.extract_strided_slice %32 {offsets = [2, 1, 0], sizes = [16, 16, 128], strides = [1, 1, 1]} : vector<18x18x128xbf16> to vector<16x16x128xbf16>
    %41 = vector.extract_strided_slice %32 {offsets = [2, 2, 0], sizes = [16, 16, 128], strides = [1, 1, 1]} : vector<18x18x128xbf16> to vector<16x16x128xbf16>
    %42 = tpu.concatenate %33, %34, %35, %36, %37, %38, %39, %40, %41 in 2 : vector<16x16x128xbf16>, vector<16x16x128xbf16>, vector<16x16x128xbf16>, vector<16x16x128xbf16>, vector<16x16x128xbf16>, vector<16x16x128xbf16>, vector<16x16x128xbf16>, vector<16x16x128xbf16>, vector<16x16x128xbf16> -> vector<16x16x1152xbf16>
    %43 = vector.shape_cast %42 : vector<16x16x1152xbf16> to vector<256x1152xbf16>
    %c0_14 = arith.constant 0 : index
    %c0_15 = arith.constant 0 : index
    %44 = vector.load %arg3[%c0_14, %c0_15] : memref<1152x128xbf16, #tpu.memory_space<vmem>>, vector<1152x128xbf16>
    %cst_16 = arith.constant dense<0.000000e+00> : vector<256x128xf32>
    %45 = tpu.matmul %43, %44, %cst_16 {dimension_numbers = #tpu.dot_dimension_numbers<[1], [0], [0], [1], [0, 0, 1, 1], [], []>} : vector<256x1152xbf16>, vector<1152x128xbf16>, vector<256x128xf32> -> vector<256x128xf32>
    %c0_17 = arith.constant 0 : index
    %c0_18 = arith.constant 0 : index
    %46 = vector.load %arg6[%c0_17, %c0_18] : memref<1x128xf32, #tpu.memory_space<vmem>>, vector<1x128xf32>
    %47 = vector.broadcast %46 : vector<1x128xf32> to vector<256x128xf32>
    %48 = arith.mulf %45, %47 : vector<256x128xf32>
    %c0_19 = arith.constant 0 : index
    %c0_20 = arith.constant 0 : index
    %49 = vector.load %arg7[%c0_19, %c0_20] : memref<1x128xf32, #tpu.memory_space<vmem>>, vector<1x128xf32>
    %50 = vector.broadcast %49 : vector<1x128xf32> to vector<256x128xf32>
    %51 = arith.addf %48, %50 : vector<256x128xf32>
    %52 = vector.shape_cast %1 : vector<16x16x128xbf16> to vector<256x128xbf16>
    %53 = arith.extf %52 : vector<256x128xbf16> to vector<256x128xf32>
    %54 = arith.addf %51, %53 : vector<256x128xf32>
    %cst_21 = arith.constant 0.000000e+00 : f32
    %55 = vector.broadcast %cst_21 : f32 to vector<256x128xf32>
    %56 = arith.maximumf %54, %55 : vector<256x128xf32>
    %57 = vector.shape_cast %56 : vector<256x128xf32> to vector<1x16x16x128xf32>
    %c0_22 = arith.constant 0 : index
    %c0_23 = arith.constant 0 : index
    %c0_24 = arith.constant 0 : index
    %c0_25 = arith.constant 0 : index
    %58 = vector.load %arg8[%c0_22, %c0_23, %c0_24, %c0_25] : memref<1x16x16x128xf32, #tpu.memory_space<vmem>>, vector<1x16x16x128xf32>
    tpu.vector_store %arg8[%c0_22, %c0_23, %c0_24, %c0_25], %57 {strides = array<i32>} : memref<1x16x16x128xf32, #tpu.memory_space<vmem>>, vector<1x16x16x128xf32>,
    return
  }
  func.func @transform_0(%arg0: i32) -> (i32, i32, i32, i32) {
    %c0_i32 = arith.constant 0 : i32
    %c0_i32_0 = arith.constant 0 : i32
    %c0_i32_1 = arith.constant 0 : i32
    %c0_i32_2 = arith.constant 0 : i32
    return %arg0, %c0_i32, %c0_i32_0, %c0_i32_1 : i32, i32, i32, i32
  }
  func.func @transform_1(%arg0: i32) -> (i32, i32) {
    %c0_i32 = arith.constant 0 : i32
    %c0_i32_0 = arith.constant 0 : i32
    %c0_i32_1 = arith.constant 0 : i32
    return %c0_i32, %c0_i32_0 : i32, i32
  }
  func.func @transform_2(%arg0: i32) -> (i32, i32) {
    %c0_i32 = arith.constant 0 : i32
    %c0_i32_0 = arith.constant 0 : i32
    %c0_i32_1 = arith.constant 0 : i32
    return %c0_i32, %c0_i32_0 : i32, i32
  }
  func.func @transform_3(%arg0: i32) -> (i32, i32) {
    %c0_i32 = arith.constant 0 : i32
    %c0_i32_0 = arith.constant 0 : i32
    %c0_i32_1 = arith.constant 0 : i32
    return %c0_i32, %c0_i32_0 : i32, i32
  }
  func.func @transform_4(%arg0: i32) -> (i32, i32) {
    %c0_i32 = arith.constant 0 : i32
    %c0_i32_0 = arith.constant 0 : i32
    %c0_i32_1 = arith.constant 0 : i32
    return %c0_i32, %c0_i32_0 : i32, i32
  }
  func.func @transform_5(%arg0: i32) -> (i32, i32) {
    %c0_i32 = arith.constant 0 : i32
    %c0_i32_0 = arith.constant 0 : i32
    %c0_i32_1 = arith.constant 0 : i32
    return %c0_i32, %c0_i32_0 : i32, i32
  }
  func.func @transform_6(%arg0: i32) -> (i32, i32) {
    %c0_i32 = arith.constant 0 : i32
    %c0_i32_0 = arith.constant 0 : i32
    %c0_i32_1 = arith.constant 0 : i32
    return %c0_i32, %c0_i32_0 : i32, i32
  }
  func.func @transform_7(%arg0: i32) -> (i32, i32, i32, i32) {
    %c0_i32 = arith.constant 0 : i32
    %c0_i32_0 = arith.constant 0 : i32
    %c0_i32_1 = arith.constant 0 : i32
    %c0_i32_2 = arith.constant 0 : i32
    return %arg0, %c0_i32, %c0_i32_0, %c0_i32_1 : i32, i32, i32, i32
  }
}

</mosaic_0001>

<llo_original>
// kernel: basic_block_forward.1
$region0: #{basic_block_forward.1}
  #allocation0 [shape = 'u32[]', space=smem, size = 0x4, offset = 0x4, fixed_abs, tag = 'smem constant byte address 0x4 - core index']
  #allocation1 [shape = 'u32[144,128]{1,0:T(1,128)}', space=vmem, size = 0x12000, scoped, tag = 'internal scratch']
  %s0 = inlined_call_operand.vmem [shape: bf16[2,16,16,128], index: 0, kind: input, shape index: {}]
  %s1 = inlined_call_operand.vmem [shape: bf16[1152,128], index: 1, kind: input, shape index: {}]
  %s2 = inlined_call_operand.vmem [shape: bf16[1152,128], index: 2, kind: input, shape index: {}]
  %s3 = inlined_call_operand.vmem [shape: f32[1,128], index: 3, kind: input, shape index: {}]
  %s4 = inlined_call_operand.vmem [shape: f32[1,128], index: 4, kind: input, shape index: {}]
  %s5 = inlined_call_operand.vmem [shape: f32[1,128], index: 5, kind: input, shape index: {}]
  %s6 = inlined_call_operand.vmem [shape: f32[1,128], index: 6, kind: input, shape index: {}]
  %s7 = inlined_call_operand.vmem [shape: f32[2,16,16,128], index: 7, kind: output, shape index: {}]
  %s8 = sld [smem:[#allocation0]]
  $region61: #{basic_block_forward.1} parent=0
    _
  %s10 = ssub.s32 1, %s8
  %s11 = scalar_select 0, %s10, %s8
  loop: start=0, step=1, limit=4
  $region2: #{basic_block_forward.1} parent=0 // loop_pre_header
    _
  $region3: #{basic_block_forward.1} parent=0 // loop_header
    %s13 = sphi 0, %s17
    %p14 = scmp.ge.s32.totalorder %s13, 4
    %s23 = sphi 0, %s25
    %s26 = sphi 0, %s23
    %s27 = sphi 0, %s26
    %s43 = sphi 0, %s27
    %s47 = sphi 0, %s47
    %s49 = sphi 0, %s47
    %s50 = sphi 0, %s49
    %s64 = sphi 0, %s50
    %s68 = sphi 0, %s68
    %s70 = sphi 0, %s68
    %s71 = sphi 0, %s70
    %s85 = sphi 0, %s71
    %s89 = sphi 0, %s89
    %s91 = sphi 0, %s89
    %s92 = sphi 0, %s91
    %s106 = sphi 0, %s92
    %s110 = sphi 0, %s110
    %s112 = sphi 0, %s110
    %s113 = sphi 0, %s112
    %s127 = sphi 0, %s113
    %s131 = sphi 0, %s131
    %s133 = sphi 0, %s131
    %s134 = sphi 0, %s133
    %s148 = sphi 0, %s134
    %s152 = sphi 0, %s152
    %s154 = sphi 0, %s152
    %s155 = sphi 0, %s154
    %s169 = sphi 0, %s155
    %s175 = sphi 0, %s177
    %s178 = sphi 0, %s175
    %s179 = sphi 0, %s178
    %s195 = sphi 0, %s179
  $region4: #{basic_block_forward.1} parent=0 // loop_header_branch
    %16 = sbr.rel (%p14) target = $region8
  $region5: #{basic_block_forward.1} parent=0 // loop_body
    %s18 = ssub.s32 %s13, 1
    %s19 = ssub.s32 %s13, 2
    %s20 = sadd.s32 %s13, 1
    %s21 = ssub.s32 %s13, %s20
    %p22 = scmp.eq.s32.totalorder %s21, 0
    %s24 = sadd.s32 %s23, 1
    %s25 = scalar_select %p22, %s23, %s24
    %p28 = pneg %p22
    %p29 = scmp.eq.s32.totalorder %s13, 1
    %p30 = por %p28, %p29
    %p31 = scmp.ne.s32.totalorder %s23, %s26
    %p32 = scmp.eq.s32.totalorder %s13, 0
    %p33 = por %p31, %p32
    %p34 = scmp.ne.s32.totalorder %s23, %s26
    %p35 = scmp.eq.s32.totalorder %s18, 1
    %p36 = por %p34, %p35
    %p37 = scmp.ne.s32.totalorder %s26, %s27
    %p38 = scmp.eq.s32.totalorder %s18, 0
    %p39 = por %p37, %p38
    %p40 = scmp.ne.s32.totalorder %s26, %s27
    %p41 = scmp.eq.s32.totalorder %s19, 1
    %p42 = por %p40, %p41
    %p44 = scmp.ne.s32.totalorder %s27, %s43
    %p45 = scmp.eq.s32.totalorder %s19, 0
    %p46 = por %p44, %p45
    %s48 = sadd.s32 %s47, 1
    %p51 = scmp.eq.s32.totalorder %s13, 1
    %p52 = scmp.ne.s32.totalorder %s47, %s49
    %p53 = scmp.eq.s32.totalorder %s13, 0
    %p54 = por %p52, %p53
    %p55 = scmp.ne.s32.totalorder %s47, %s49
    %p56 = scmp.eq.s32.totalorder %s18, 1
    %p57 = por %p55, %p56
    %p58 = scmp.ne.s32.totalorder %s49, %s50
    %p59 = scmp.eq.s32.totalorder %s18, 0
    %p60 = por %p58, %p59
    %p61 = scmp.ne.s32.totalorder %s49, %s50
    %p62 = scmp.eq.s32.totalorder %s19, 1
    %p63 = por %p61, %p62
    %p65 = scmp.ne.s32.totalorder %s50, %s64
    %p66 = scmp.eq.s32.totalorder %s19, 0
    %p67 = por %p65, %p66
    %s69 = sadd.s32 %s68, 1
    %p72 = scmp.eq.s32.totalorder %s13, 1
    %p73 = scmp.ne.s32.totalorder %s68, %s70
    %p74 = scmp.eq.s32.totalorder %s13, 0
    %p75 = por %p73, %p74
    %p76 = scmp.ne.s32.totalorder %s68, %s70
    %p77 = scmp.eq.s32.totalorder %s18, 1
    %p78 = por %p76, %p77
    %p79 = scmp.ne.s32.totalorder %s70, %s71
    %p80 = scmp.eq.s32.totalorder %s18, 0
    %p81 = por %p79, %p80
    %p82 = scmp.ne.s32.totalorder %s70, %s71
    %p83 = scmp.eq.s32.totalorder %s19, 1
    %p84 = por %p82, %p83
    %p86 = scmp.ne.s32.totalorder %s71, %s85
    %p87 = scmp.eq.s32.totalorder %s19, 0
    %p88 = por %p86, %p87
    %s90 = sadd.s32 %s89, 1
    %p93 = scmp.eq.s32.totalorder %s13, 1
    %p94 = scmp.ne.s32.totalorder %s89, %s91
    %p95 = scmp.eq.s32.totalorder %s13, 0
    %p96 = por %p94, %p95
    %p97 = scmp.ne.s32.totalorder %s89, %s91
    %p98 = scmp.eq.s32.totalorder %s18, 1
    %p99 = por %p97, %p98
    %p100 = scmp.ne.s32.totalorder %s91, %s92
    %p101 = scmp.eq.s32.totalorder %s18, 0
    %p102 = por %p100, %p101
    %p103 = scmp.ne.s32.totalorder %s91, %s92
    %p104 = scmp.eq.s32.totalorder %s19, 1
    %p105 = por %p103, %p104
    %p107 = scmp.ne.s32.totalorder %s92, %s106
    %p108 = scmp.eq.s32.totalorder %s19, 0
    %p109 = por %p107, %p108
    %s111 = sadd.s32 %s110, 1
    %p114 = scmp.eq.s32.totalorder %s13, 1
    %p115 = scmp.ne.s32.totalorder %s110, %s112
    %p116 = scmp.eq.s32.totalorder %s13, 0
    %p117 = por %p115, %p116
    %p118 = scmp.ne.s32.totalorder %s110, %s112
    %p119 = scmp.eq.s32.totalorder %s18, 1
    %p120 = por %p118, %p119
    %p121 = scmp.ne.s32.totalorder %s112, %s113
    %p122 = scmp.eq.s32.totalorder %s18, 0
    %p123 = por %p121, %p122
    %p124 = scmp.ne.s32.totalorder %s112, %s113
    %p125 = scmp.eq.s32.totalorder %s19, 1
    %p126 = por %p124, %p125
    %p128 = scmp.ne.s32.totalorder %s113, %s127
    %p129 = scmp.eq.s32.totalorder %s19, 0
    %p130 = por %p128, %p129
    %s132 = sadd.s32 %s131, 1
    %p135 = scmp.eq.s32.totalorder %s13, 1
    %p136 = scmp.ne.s32.totalorder %s131, %s133
    %p137 = scmp.eq.s32.totalorder %s13, 0
    %p138 = por %p136, %p137
    %p139 = scmp.ne.s32.totalorder %s131, %s133
    %p140 = scmp.eq.s32.totalorder %s18, 1
    %p141 = por %p139, %p140
    %p142 = scmp.ne.s32.totalorder %s133, %s134
    %p143 = scmp.eq.s32.totalorder %s18, 0
    %p144 = por %p142, %p143
    %p145 = scmp.ne.s32.totalorder %s133, %s134
    %p146 = scmp.eq.s32.totalorder %s19, 1
    %p147 = por %p145, %p146
    %p149 = scmp.ne.s32.totalorder %s134, %s148
    %p150 = scmp.eq.s32.totalorder %s19, 0
    %p151 = por %p149, %p150
    %s153 = sadd.s32 %s152, 1
    %p156 = scmp.eq.s32.totalorder %s13, 1
    %p157 = scmp.ne.s32.totalorder %s152, %s154
    %p158 = scmp.eq.s32.totalorder %s13, 0
    %p159 = por %p157, %p158
    %p160 = scmp.ne.s32.totalorder %s152, %s154
    %p161 = scmp.eq.s32.totalorder %s18, 1
    %p162 = por %p160, %p161
    %p163 = scmp.ne.s32.totalorder %s154, %s155
    %p164 = scmp.eq.s32.totalorder %s18, 0
    %p165 = por %p163, %p164
    %p166 = scmp.ne.s32.totalorder %s154, %s155
    %p167 = scmp.eq.s32.totalorder %s19, 1
    %p168 = por %p166, %p167
    %p170 = scmp.ne.s32.totalorder %s155, %s169
    %p171 = scmp.eq.s32.totalorder %s19, 0
    %p172 = por %p170, %p171
    %s173 = ssub.s32 %s13, %s20
    %p174 = scmp.eq.s32.totalorder %s173, 0
    %s176 = sadd.s32 %s175, 1
    %s177 = scalar_select %p174, %s175, %s176
    %p180 = pneg %p174
    %p181 = scmp.eq.s32.totalorder %s13, 1
    %p182 = por %p180, %p181
    %p183 = scmp.ne.s32.totalorder %s175, %s178
    %p184 = scmp.eq.s32.totalorder %s13, 0
    %p185 = por %p183, %p184
    %p186 = scmp.ne.s32.totalorder %s175, %s178
    %p187 = scmp.eq.s32.totalorder %s18, 1
    %p188 = por %p186, %p187
    %p189 = scmp.ne.s32.totalorder %s178, %s179
    %p190 = scmp.eq.s32.totalorder %s18, 0
    %p191 = por %p189, %p190
    %p192 = scmp.ne.s32.totalorder %s178, %s179
    %p193 = scmp.eq.s32.totalorder %s19, 1
    %p194 = por %p192, %p193
    %p196 = scmp.ne.s32.totalorder %s179, %s195
    %p197 = scmp.eq.s32.totalorder %s19, 0
    %p198 = por %p196, %p197
    %p199 = scmp.le.s32.totalorder 1, %s13
    %p200 = scmp.lt.s32.totalorder %s13, 3
    %p201 = pnand %p199, %p200
    %p202 = pneg %p201
    // Predicated region
    $region9: #{basic_block_forward.1} parent=5 // pred_check
      _
    $region10: #{basic_block_forward.1} parent=5 // pred_check_branch
      %204 = sbr.rel (%p201) target = $region12
    $region11: #{basic_block_forward.1} parent=5 // pred_region
      %s205 = ssub.s32 %s13, 1
      // Predicated region
      $region13: #{basic_block_forward.1} parent=11 // pred_check
        %p206 = pneg %p60
      $region14: #{basic_block_forward.1} parent=11 // pred_check_branch
        %208 = sbr.rel (%p206) target = $region16
      $region15: #{basic_block_forward.1} parent=11 // pred_region
        _
      $region16: #{basic_block_forward.1} parent=11 // pred_fallthru
        _
      // Predicated region
      $region17: #{basic_block_forward.1} parent=11 // pred_check
        %p209 = pneg %p81
      $region18: #{basic_block_forward.1} parent=11 // pred_check_branch
        %211 = sbr.rel (%p209) target = $region20
      $region19: #{basic_block_forward.1} parent=11 // pred_region
        _
      $region20: #{basic_block_forward.1} parent=11 // pred_fallthru
        _
      // Predicated region
      $region21: #{basic_block_forward.1} parent=11 // pred_check
        %p212 = pneg %p102
      $region22: #{basic_block_forward.1} parent=11 // pred_check_branch
        %214 = sbr.rel (%p212) target = $region24
      $region23: #{basic_block_forward.1} parent=11 // pred_region
        _
      $region24: #{basic_block_forward.1} parent=11 // pred_fallthru
        _
      // Predicated region
      $region25: #{basic_block_forward.1} parent=11 // pred_check
        %p215 = pneg %p123
      $region26: #{basic_block_forward.1} parent=11 // pred_check_branch
        %217 = sbr.rel (%p215) target = $region28
      $region27: #{basic_block_forward.1} parent=11 // pred_region
        _
      $region28: #{basic_block_forward.1} parent=11 // pred_fallthru
        _
      // Predicated region
      $region29: #{basic_block_forward.1} parent=11 // pred_check
        %p218 = pneg %p144
      $region30: #{basic_block_forward.1} parent=11 // pred_check_branch
        %220 = sbr.rel (%p218) target = $region32
      $region31: #{basic_block_forward.1} parent=11 // pred_region
        _
      $region32: #{basic_block_forward.1} parent=11 // pred_fallthru
        _
      // Predicated region
      $region33: #{basic_block_forward.1} parent=11 // pred_check
        %p221 = pneg %p165
      $region34: #{basic_block_forward.1} parent=11 // pred_check_branch
        %223 = sbr.rel (%p221) target = $region36
      $region35: #{basic_block_forward.1} parent=11 // pred_region
        _
      $region36: #{basic_block_forward.1} parent=11 // pred_fallthru
        _
    $region12: #{basic_block_forward.1} parent=5 // pred_fallthru
      _
    %p224 = scmp.lt.s32.totalorder %s13, 2
    // Predicated region
    $region37: #{basic_block_forward.1} parent=5 // pred_check
      %p225 = pneg %p224
    $region38: #{basic_block_forward.1} parent=5 // pred_check_branch
      %227 = sbr.rel (%p225) target = $region40
    $region39: #{basic_block_forward.1} parent=5 // pred_region
      // Predicated region
      $region41: #{basic_block_forward.1} parent=39 // pred_check
        %p228 = pneg %p33
      $region42: #{basic_block_forward.1} parent=39 // pred_check_branch
        %230 = sbr.rel (%p228) target = $region44
      $region43: #{basic_block_forward.1} parent=39 // pred_region
        %p231 = scmp.lt.s32.totalorder %s13, 1
        %s232 = scalar_select %p231, %s13, 1
        %s233 = smul.addr %s232, 32
        %s234 = smul.addr %s233, 4
        %s235 = scalar_lea.vmem %s0, %s234
      $region44: #{basic_block_forward.1} parent=39 // pred_fallthru
        _
    $region40: #{basic_block_forward.1} parent=5 // pred_fallthru
      _
    %p236 = scmp.le.s32.totalorder 1, %s13
    %p237 = scmp.lt.s32.totalorder %s13, 3
    %p238 = pnand %p236, %p237
    %p239 = pneg %p238
    // Predicated region
    $region45: #{basic_block_forward.1} parent=5 // pred_check
      _
    $region46: #{basic_block_forward.1} parent=5 // pred_check_branch
      %241 = sbr.rel (%p238) target = $region48
    $region47: #{basic_block_forward.1} parent=5 // pred_region
      %s242 = ssub.s32 %s13, 1
      %p243 = scmp.lt.s32.totalorder %s18, 1
      %s244 = scalar_select %p243, %s18, 1
      %s245 = smul.addr %s244, 32
      %s246 = smul.addr %s245, 4
      %s247 = scalar_lea.vmem %s0, %s246
      %p248 = pneg %p39
      %p249 = pneg %p36
      %p250 = pneg %p60
      %p251 = pneg %p57
      %p252 = pneg %p81
      %p253 = pneg %p78
      %p254 = pneg %p102
      %p255 = pneg %p99
      %p256 = pneg %p123
      %p257 = pneg %p120
      %p258 = pneg %p144
      %p259 = pneg %p141
      %p260 = pneg %p165
      %p261 = pneg %p162
      %p262 = pneg %p191
      %p263 = pneg %p188
      %p264 = scmp.lt.s32.totalorder %s18, 1
      %s265 = scalar_select %p264, %s18, 1
      %s266 = smul.addr %s265, 32
      %s267 = smul.addr %s266, 8
      %s268 = scalar_lea.vmem %s7, %s267
      %p269 = scmp.lt.s32.totalorder %s18, 1
      %s270 = scalar_select %p269, %s18, 1
      %s271 = smul.addr %s270, 32
      %s272 = smul.addr %s271, 4
      %s273 = scalar_lea.vmem %s0, %s272
      %p274 = scmp.lt.s32.totalorder %s18, 1
      %s275 = scalar_select %p274, %s18, 1
      %s276 = smul.addr %s275, 32
      %s277 = smul.addr %s276, 8
      %s278 = scalar_lea.vmem %s7, %s277
      %v280 = vld [vmem:[%s273] sm:$0xf]
      %v281 = vld [vmem:[%s273 + $0x4] sm:$0xf]
      %v282 = vld [vmem:[%s273 + $0x8] sm:$0xf]
      %v283 = vld [vmem:[%s273 + $0xc] sm:$0xf]
      %v284 = vld [vmem:[%s273 + $0x10] sm:$0xf]
      %v285 = vld [vmem:[%s273 + $0x14] sm:$0xf]
      %v286 = vld [vmem:[%s273 + $0x18] sm:$0xf]
      %v287 = vld [vmem:[%s273 + $0x1c] sm:$0xf]
      %v288 = vld [vmem:[%s273 + $0x20] sm:$0xf]
      %v289 = vld [vmem:[%s273 + $0x24] sm:$0xf]
      %v290 = vld [vmem:[%s273 + $0x28] sm:$0xf]
      %v291 = vld [vmem:[%s273 + $0x2c] sm:$0xf]
      %v292 = vld [vmem:[%s273 + $0x30] sm:$0xf]
      %v293 = vld [vmem:[%s273 + $0x34] sm:$0xf]
      %v294 = vld [vmem:[%s273 + $0x38] sm:$0xf]
      %v295 = vld [vmem:[%s273 + $0x3c] sm:$0xf]
      %v296 = vld [vmem:[%s273 + $0x40] sm:$0xf]
      %v297 = vld [vmem:[%s273 + $0x44] sm:$0xf]
      %v298 = vld [vmem:[%s273 + $0x48] sm:$0xf]
      %v299 = vld [vmem:[%s273 + $0x4c] sm:$0xf]
      %v300 = vld [vmem:[%s273 + $0x50] sm:$0xf]
      %v301 = vld [vmem:[%s273 + $0x54] sm:$0xf]
      %v302 = vld [vmem:[%s273 + $0x58] sm:$0xf]
      %v303 = vld [vmem:[%s273 + $0x5c] sm:$0xf]
      %v304 = vld [vmem:[%s273 + $0x60] sm:$0xf]
      %v305 = vld [vmem:[%s273 + $0x64] sm:$0xf]
      %v306 = vld [vmem:[%s273 + $0x68] sm:$0xf]
      %v307 = vld [vmem:[%s273 + $0x6c] sm:$0xf]
      %v308 = vld [vmem:[%s273 + $0x70] sm:$0xf]
      %v309 = vld [vmem:[%s273 + $0x74] sm:$0xf]
      %v310 = vld [vmem:[%s273 + $0x78] sm:$0xf]
      %v311 = vld [vmem:[%s273 + $0x7c] sm:$0xf]
      %v344 = vunpack.c.l.b16 %v280
      %v345 = vunpack.c.l.b16 %v281
      %v346 = vunpack.c.l.b16 %v282
      %v347 = vunpack.c.l.b16 %v283
      %v348 = vunpack.c.l.b16 %v284
      %v349 = vunpack.c.l.b16 %v285
      %v350 = vunpack.c.l.b16 %v286
      %v351 = vunpack.c.l.b16 %v287
      %v352 = vunpack.c.l.b16 %v288
      %v353 = vunpack.c.l.b16 %v289
      %v354 = vunpack.c.l.b16 %v290
      %v355 = vunpack.c.l.b16 %v291
      %v356 = vunpack.c.l.b16 %v292
      %v357 = vunpack.c.l.b16 %v293
      %v358 = vunpack.c.l.b16 %v294
      %v359 = vunpack.c.l.b16 %v295
      %v360 = vunpack.c.l.b16 %v296
      %v361 = vunpack.c.l.b16 %v297
      %v362 = vunpack.c.l.b16 %v298
      %v363 = vunpack.c.l.b16 %v299
      %v364 = vunpack.c.l.b16 %v300
      %v365 = vunpack.c.l.b16 %v301
      %v366 = vunpack.c.l.b16 %v302
      %v367 = vunpack.c.l.b16 %v303
      %v368 = vunpack.c.l.b16 %v304
      %v369 = vunpack.c.l.b16 %v305
      %v370 = vunpack.c.l.b16 %v306
      %v371 = vunpack.c.l.b16 %v307
      %v372 = vunpack.c.l.b16 %v308
      %v373 = vunpack.c.l.b16 %v309
      %v374 = vunpack.c.l.b16 %v310
      %v375 = vunpack.c.l.b16 %v311
      %v376 = vpack.c.b16 %v345, %v344
      %v377 = vpack.c.b16 %v347, %v346
      %v378 = vpack.c.b16 %v349, %v348
      %v379 = vpack.c.b16 %v351, %v350
      %v380 = vpack.c.b16 %v353, %v352
      %v381 = vpack.c.b16 %v355, %v354
      %v382 = vpack.c.b16 %v357, %v356
      %v383 = vpack.c.b16 %v359, %v358
      %v384 = vpack.c.b16 %v361, %v360
      %v385 = vpack.c.b16 %v363, %v362
      %v386 = vpack.c.b16 %v365, %v364
      %v387 = vpack.c.b16 %v367, %v366
      %v388 = vpack.c.b16 %v369, %v368
      %v389 = vpack.c.b16 %v371, %v370
      %v390 = vpack.c.b16 %v373, %v372
      %v391 = vpack.c.b16 %v375, %v374
      %v393 = vshrl.u32 0, 16
      %v395 = vrot.slane %v393, 7
      %v396 = vshll.u32 0, 16
      %v398 = vor.u32 %v395, %v396
      %v400 = vshrl.u32 %v376, 16
      %v402 = vrot.slane %v400, 7
      %v403 = vshll.u32 %v376, 16
      %v405 = vor.u32 %v402, %v403
      %v407 = vshrl.u32 %v377, 16
      %v409 = vrot.slane %v407, 7
      %v410 = vshll.u32 %v377, 16
      %v412 = vor.u32 %v409, %v410
      %v414 = vshrl.u32 %v378, 16
      %v416 = vrot.slane %v414, 7
      %v417 = vshll.u32 %v378, 16
      %v419 = vor.u32 %v416, %v417
      %v421 = vshrl.u32 %v379, 16
      %v423 = vrot.slane %v421, 7
      %v424 = vshll.u32 %v379, 16
      %v426 = vor.u32 %v423, %v424
      %v428 = vshrl.u32 %v380, 16
      %v430 = vrot.slane %v428, 7
      %v431 = vshll.u32 %v380, 16
      %v433 = vor.u32 %v430, %v431
      %v435 = vshrl.u32 %v381, 16
      %v437 = vrot.slane %v435, 7
      %v438 = vshll.u32 %v381, 16
      %v440 = vor.u32 %v437, %v438
      %v442 = vshrl.u32 %v382, 16
      %v444 = vrot.slane %v442, 7
      %v445 = vshll.u32 %v382, 16
      %v447 = vor.u32 %v444, %v445
      %v449 = vshrl.u32 %v383, 16
      %v451 = vrot.slane %v449, 7
      %v452 = vshll.u32 %v383, 16
      %v454 = vor.u32 %v451, %v452
      %v456 = vshrl.u32 %v384, 16
      %v458 = vrot.slane %v456, 7
      %v459 = vshll.u32 %v384, 16
      %v461 = vor.u32 %v458, %v459
      %v463 = vshrl.u32 %v385, 16
      %v465 = vrot.slane %v463, 7
      %v466 = vshll.u32 %v385, 16
      %v468 = vor.u32 %v465, %v466
      %v470 = vshrl.u32 %v386, 16
      %v472 = vrot.slane %v470, 7
      %v473 = vshll.u32 %v386, 16
      %v475 = vor.u32 %v472, %v473
      %v477 = vshrl.u32 %v387, 16
      %v479 = vrot.slane %v477, 7
      %v480 = vshll.u32 %v387, 16
      %v482 = vor.u32 %v479, %v480
      %v484 = vshrl.u32 %v388, 16
      %v486 = vrot.slane %v484, 7
      %v487 = vshll.u32 %v388, 16
      %v489 = vor.u32 %v486, %v487
      %v491 = vshrl.u32 %v389, 16
      %v493 = vrot.slane %v491, 7
      %v494 = vshll.u32 %v389, 16
      %v496 = vor.u32 %v493, %v494
      %v498 = vshrl.u32 %v390, 16
      %v500 = vrot.slane %v498, 7
      %v501 = vshll.u32 %v390, 16
      %v503 = vor.u32 %v500, %v501
      %v505 = vshrl.u32 %v391, 16
      %v507 = vrot.slane %v505, 7
      %v508 = vshll.u32 %v391, 16
      %v510 = vor.u32 %v507, %v508
      %vm545 = vcmask 1040384
      %vm546 = vsmask.f32 256
      %vm547 = vmand %vm545, %vm546
      %v548 = vsel %vm547, 0, %v398
      %v549 = vsel %vm547, 0, %v405
      %v550 = vsel %vm547, 0, %v412
      %v551 = vsel %vm547, 0, %v419
      %v552 = vsel %vm547, 0, %v426
      %v553 = vsel %vm547, 0, %v433
      %v554 = vsel %vm547, 0, %v440
      %v555 = vsel %vm547, 0, %v447
      %v556 = vsel %vm547, 0, %v454
      %v557 = vsel %vm547, 0, %v461
      %v558 = vsel %vm547, 0, %v468
      %v559 = vsel %vm547, 0, %v475
      %v560 = vsel %vm547, 0, %v482
      %v561 = vsel %vm547, 0, %v489
      %v562 = vsel %vm547, 0, %v496
      %v563 = vsel %vm547, 0, %v503
      %v564 = vsel %vm547, 0, %v510
      %v565 = vsel %vm547, %v395, 0
      %v566 = vsel %vm547, %v402, 0
      %v567 = vsel %vm547, %v409, 0
      %v568 = vsel %vm547, %v416, 0
      %v569 = vsel %vm547, %v423, 0
      %v570 = vsel %vm547, %v430, 0
      %v571 = vsel %vm547, %v437, 0
      %v572 = vsel %vm547, %v444, 0
      %v573 = vsel %vm547, %v451, 0
      %v574 = vsel %vm547, %v458, 0
      %v575 = vsel %vm547, %v465, 0
      %v576 = vsel %vm547, %v472, 0
      %v577 = vsel %vm547, %v479, 0
      %v578 = vsel %vm547, %v486, 0
      %v579 = vsel %vm547, %v493, 0
      %v580 = vsel %vm547, %v500, 0
      %v581 = vsel %vm547, %v507, 0
      %vm582 = vsmask.f32 7424
      %v584 = vshrl.u32 %v548, 16
      %v586 = vshll.u32 %v548, 16
      %v588 = vrot.slane %v586, 1
      %v589 = vor.u32 %v584, %v588
      %v591 = vshll.u32 %v565, 16
      %v593 = vrot.slane %v591, 1
      %v594 = vsel %vm582, %v589, %v593
      %v596 = vshrl.u32 %v549, 16
      %v598 = vshll.u32 %v549, 16
      %v600 = vrot.slane %v598, 1
      %v601 = vor.u32 %v596, %v600
      %v603 = vshll.u32 %v566, 16
      %v605 = vrot.slane %v603, 1
      %v606 = vsel %vm582, %v601, %v605
      %v608 = vshrl.u32 %v550, 16
      %v610 = vshll.u32 %v550, 16
      %v612 = vrot.slane %v610, 1
      %v613 = vor.u32 %v608, %v612
      %v615 = vshll.u32 %v567, 16
      %v617 = vrot.slane %v615, 1
      %v618 = vsel %vm582, %v613, %v617
      %v620 = vshrl.u32 %v551, 16
      %v622 = vshll.u32 %v551, 16
      %v624 = vrot.slane %v622, 1
      %v625 = vor.u32 %v620, %v624
      %v627 = vshll.u32 %v568, 16
      %v629 = vrot.slane %v627, 1
      %v630 = vsel %vm582, %v625, %v629
      %v632 = vshrl.u32 %v552, 16
      %v634 = vshll.u32 %v552, 16
      %v636 = vrot.slane %v634, 1
      %v637 = vor.u32 %v632, %v636
      %v639 = vshll.u32 %v569, 16
      %v641 = vrot.slane %v639, 1
      %v642 = vsel %vm582, %v637, %v641
      %v644 = vshrl.u32 %v553, 16
      %v646 = vshll.u32 %v553, 16
      %v648 = vrot.slane %v646, 1
      %v649 = vor.u32 %v644, %v648
      %v651 = vshll.u32 %v570, 16
      %v653 = vrot.slane %v651, 1
      %v654 = vsel %vm582, %v649, %v653
      %v656 = vshrl.u32 %v554, 16
      %v658 = vshll.u32 %v554, 16
      %v660 = vrot.slane %v658, 1
      %v661 = vor.u32 %v656, %v660
      %v663 = vshll.u32 %v571, 16
      %v665 = vrot.slane %v663, 1
      %v666 = vsel %vm582, %v661, %v665
      %v668 = vshrl.u32 %v555, 16
      %v670 = vshll.u32 %v555, 16
      %v672 = vrot.slane %v670, 1
      %v673 = vor.u32 %v668, %v672
      %v675 = vshll.u32 %v572, 16
      %v677 = vrot.slane %v675, 1
      %v678 = vsel %vm582, %v673, %v677
      %v680 = vshrl.u32 %v556, 16
      %v682 = vshll.u32 %v556, 16
      %v684 = vrot.slane %v682, 1
      %v685 = vor.u32 %v680, %v684
      %v687 = vshll.u32 %v573, 16
      %v689 = vrot.slane %v687, 1
      %v690 = vsel %vm582, %v685, %v689
      %v692 = vshrl.u32 %v557, 16
      %v694 = vshll.u32 %v557, 16
      %v696 = vrot.slane %v694, 1
      %v697 = vor.u32 %v692, %v696
      %v699 = vshll.u32 %v574, 16
      %v701 = vrot.slane %v699, 1
      %v702 = vsel %vm582, %v697, %v701
      %v704 = vshrl.u32 %v558, 16
      %v706 = vshll.u32 %v558, 16
      %v708 = vrot.slane %v706, 1
      %v709 = vor.u32 %v704, %v708
      %v711 = vshll.u32 %v575, 16
      %v713 = vrot.slane %v711, 1
      %v714 = vsel %vm582, %v709, %v713
      %v716 = vshrl.u32 %v559, 16
      %v718 = vshll.u32 %v559, 16
      %v720 = vrot.slane %v718, 1
      %v721 = vor.u32 %v716, %v720
      %v723 = vshll.u32 %v576, 16
      %v725 = vrot.slane %v723, 1
      %v726 = vsel %vm582, %v721, %v725
      %v728 = vshrl.u32 %v560, 16
      %v730 = vshll.u32 %v560, 16
      %v732 = vrot.slane %v730, 1
      %v733 = vor.u32 %v728, %v732
      %v735 = vshll.u32 %v577, 16
      %v737 = vrot.slane %v735, 1
      %v738 = vsel %vm582, %v733, %v737
      %v740 = vshrl.u32 %v561, 16
      %v742 = vshll.u32 %v561, 16
      %v744 = vrot.slane %v742, 1
      %v745 = vor.u32 %v740, %v744
      %v747 = vshll.u32 %v578, 16
      %v749 = vrot.slane %v747, 1
      %v750 = vsel %vm582, %v745, %v749
      %v752 = vshrl.u32 %v562, 16
      %v754 = vshll.u32 %v562, 16
      %v756 = vrot.slane %v754, 1
      %v757 = vor.u32 %v752, %v756
      %v759 = vshll.u32 %v579, 16
      %v761 = vrot.slane %v759, 1
      %v762 = vsel %vm582, %v757, %v761
      %v764 = vshrl.u32 %v563, 16
      %v766 = vshll.u32 %v563, 16
      %v768 = vrot.slane %v766, 1
      %v769 = vor.u32 %v764, %v768
      %v771 = vshll.u32 %v580, 16
      %v773 = vrot.slane %v771, 1
      %v774 = vsel %vm582, %v769, %v773
      %vm823 = vcmask 1046528
      %v824 = vrot.slane %v548, 1
      %v825 = vrot.slane %v565, 1
      %v826 = vsel %vm823, %v824, %v825
      %v827 = vrot.slane %v549, 1
      %v828 = vrot.slane %v566, 1
      %v829 = vsel %vm823, %v827, %v828
      %v830 = vrot.slane %v550, 1
      %v831 = vrot.slane %v567, 1
      %v832 = vsel %vm823, %v830, %v831
      %v833 = vrot.slane %v551, 1
      %v834 = vrot.slane %v568, 1
      %v835 = vsel %vm823, %v833, %v834
      %v836 = vrot.slane %v552, 1
      %v837 = vrot.slane %v569, 1
      %v838 = vsel %vm823, %v836, %v837
      %v839 = vrot.slane %v553, 1
      %v840 = vrot.slane %v570, 1
      %v841 = vsel %vm823, %v839, %v840
      %v842 = vrot.slane %v554, 1
      %v843 = vrot.slane %v571, 1
      %v844 = vsel %vm823, %v842, %v843
      %v845 = vrot.slane %v555, 1
      %v846 = vrot.slane %v572, 1
      %v847 = vsel %vm823, %v845, %v846
      %v848 = vrot.slane %v556, 1
      %v849 = vrot.slane %v573, 1
      %v850 = vsel %vm823, %v848, %v849
      %v851 = vrot.slane %v557, 1
      %v852 = vrot.slane %v574, 1
      %v853 = vsel %vm823, %v851, %v852
      %v854 = vrot.slane %v558, 1
      %v855 = vrot.slane %v575, 1
      %v856 = vsel %vm823, %v854, %v855
      %v857 = vrot.slane %v559, 1
      %v858 = vrot.slane %v576, 1
      %v859 = vsel %vm823, %v857, %v858
      %v860 = vrot.slane %v560, 1
      %v861 = vrot.slane %v577, 1
      %v862 = vsel %vm823, %v860, %v861
      %v863 = vrot.slane %v561, 1
      %v864 = vrot.slane %v578, 1
      %v865 = vsel %vm823, %v863, %v864
      %v866 = vrot.slane %v562, 1
      %v867 = vrot.slane %v579, 1
      %v868 = vsel %vm823, %v866, %v867
      %v869 = vrot.slane %v563, 1
      %v870 = vrot.slane %v580, 1
      %v871 = vsel %vm823, %v869, %v870
      %v889 = vshrl.u32 %v564, 16
      %v891 = vshll.u32 %v564, 16
      %v893 = vrot.slane %v891, 1
      %v894 = vor.u32 %v889, %v893
      %v896 = vshll.u32 %v581, 16
      %v898 = vrot.slane %v896, 1
      %v899 = vsel %vm582, %v894, %v898
      %v903 = vrot.slane %v564, 1
      %v904 = vrot.slane %v581, 1
      %v905 = vsel %vm823, %v903, %v904
      %v907 = vld [vmem:[%s1] sm:$0xf]
      %v908 = vld [vmem:[%s1 + $0x4] sm:$0xf]
      %v909 = vld [vmem:[%s1 + $0x8] sm:$0xf]
      %v910 = vld [vmem:[%s1 + $0xc] sm:$0xf]
      %v911 = vld [vmem:[%s1 + $0x10] sm:$0xf]
      %v912 = vld [vmem:[%s1 + $0x14] sm:$0xf]
      %v913 = vld [vmem:[%s1 + $0x18] sm:$0xf]
      %v914 = vld [vmem:[%s1 + $0x1c] sm:$0xf]
      %v915 = vld [vmem:[%s1 + $0x20] sm:$0xf]
      %v916 = vld [vmem:[%s1 + $0x24] sm:$0xf]
      %v917 = vld [vmem:[%s1 + $0x28] sm:$0xf]
      %v918 = vld [vmem:[%s1 + $0x2c] sm:$0xf]
      %v919 = vld [vmem:[%s1 + $0x30] sm:$0xf]
      %v920 = vld [vmem:[%s1 + $0x34] sm:$0xf]
      %v921 = vld [vmem:[%s1 + $0x38] sm:$0xf]
      %v922 = vld [vmem:[%s1 + $0x3c] sm:$0xf]
      %v923 = vld [vmem:[%s1 + $0x40] sm:$0xf]
      %v924 = vld [vmem:[%s1 + $0x44] sm:$0xf]
      %v925 = vld [vmem:[%s1 + $0x48] sm:$0xf]
      %v926 = vld [vmem:[%s1 + $0x4c] sm:$0xf]
      %v927 = vld [vmem:[%s1 + $0x50] sm:$0xf]
      %v928 = vld [vmem:[%s1 + $0x54] sm:$0xf]
      %v929 = vld [vmem:[%s1 + $0x58] sm:$0xf]
      %v930 = vld [vmem:[%s1 + $0x5c] sm:$0xf]
      %v931 = vld [vmem:[%s1 + $0x60] sm:$0xf]
      %v932 = vld [vmem:[%s1 + $0x64] sm:$0xf]
      %v933 = vld [vmem:[%s1 + $0x68] sm:$0xf]
      %v934 = vld [vmem:[%s1 + $0x6c] sm:$0xf]
      %v935 = vld [vmem:[%s1 + $0x70] sm:$0xf]
      %v936 = vld [vmem:[%s1 + $0x74] sm:$0xf]
      %v937 = vld [vmem:[%s1 + $0x78] sm:$0xf]
      %v938 = vld [vmem:[%s1 + $0x7c] sm:$0xf]
      %v939 = vld [vmem:[%s1 + $0x80] sm:$0xf]
      %v940 = vld [vmem:[%s1 + $0x84] sm:$0xf]
      %v941 = vld [vmem:[%s1 + $0x88] sm:$0xf]
      %v942 = vld [vmem:[%s1 + $0x8c] sm:$0xf]
      %v943 = vld [vmem:[%s1 + $0x90] sm:$0xf]
      %v944 = vld [vmem:[%s1 + $0x94] sm:$0xf]
      %v945 = vld [vmem:[%s1 + $0x98] sm:$0xf]
      %v946 = vld [vmem:[%s1 + $0x9c] sm:$0xf]
      %v947 = vld [vmem:[%s1 + $0xa0] sm:$0xf]
      %v948 = vld [vmem:[%s1 + $0xa4] sm:$0xf]
      %v949 = vld [vmem:[%s1 + $0xa8] sm:$0xf]
      %v950 = vld [vmem:[%s1 + $0xac] sm:$0xf]
      %v951 = vld [vmem:[%s1 + $0xb0] sm:$0xf]
      %v952 = vld [vmem:[%s1 + $0xb4] sm:$0xf]
      %v953 = vld [vmem:[%s1 + $0xb8] sm:$0xf]
      %v954 = vld [vmem:[%s1 + $0xbc] sm:$0xf]
      %v955 = vld [vmem:[%s1 + $0xc0] sm:$0xf]
      %v956 = vld [vmem:[%s1 + $0xc4] sm:$0xf]
      %v957 = vld [vmem:[%s1 + $0xc8] sm:$0xf]
      %v958 = vld [vmem:[%s1 + $0xcc] sm:$0xf]
      %v959 = vld [vmem:[%s1 + $0xd0] sm:$0xf]
      %v960 = vld [vmem:[%s1 + $0xd4] sm:$0xf]
      %v961 = vld [vmem:[%s1 + $0xd8] sm:$0xf]
      %v962 = vld [vmem:[%s1 + $0xdc] sm:$0xf]
      %v963 = vld [vmem:[%s1 + $0xe0] sm:$0xf]
      %v964 = vld [vmem:[%s1 + $0xe4] sm:$0xf]
      %v965 = vld [vmem:[%s1 + $0xe8] sm:$0xf]
      %v966 = vld [vmem:[%s1 + $0xec] sm:$0xf]
      %v967 = vld [vmem:[%s1 + $0xf0] sm:$0xf]
      %v968 = vld [vmem:[%s1 + $0xf4] sm:$0xf]
      %v969 = vld [vmem:[%s1 + $0xf8] sm:$0xf]
      %v970 = vld [vmem:[%s1 + $0xfc] sm:$0xf]
      %v971 = vld [vmem:[%s1 + $0x100] sm:$0xf]
      %v972 = vld [vmem:[%s1 + $0x104] sm:$0xf]
      %v973 = vld [vmem:[%s1 + $0x108] sm:$0xf]
      %v974 = vld [vmem:[%s1 + $0x10c] sm:$0xf]
      %v975 = vld [vmem:[%s1 + $0x110] sm:$0xf]
      %v976 = vld [vmem:[%s1 + $0x114] sm:$0xf]
      %v977 = vld [vmem:[%s1 + $0x118] sm:$0xf]
      %v978 = vld [vmem:[%s1 + $0x11c] sm:$0xf]
      %v979 = vld [vmem:[%s1 + $0x120] sm:$0xf]
      %v980 = vld [vmem:[%s1 + $0x124] sm:$0xf]
      %v981 = vld [vmem:[%s1 + $0x128] sm:$0xf]
      %v982 = vld [vmem:[%s1 + $0x12c] sm:$0xf]
      %v983 = vld [vmem:[%s1 + $0x130] sm:$0xf]
      %v984 = vld [vmem:[%s1 + $0x134] sm:$0xf]
      %v985 = vld [vmem:[%s1 + $0x138] sm:$0xf]
      %v986 = vld [vmem:[%s1 + $0x13c] sm:$0xf]
      %v987 = vld [vmem:[%s1 + $0x140] sm:$0xf]
      %v988 = vld [vmem:[%s1 + $0x144] sm:$0xf]
      %v989 = vld [vmem:[%s1 + $0x148] sm:$0xf]
      %v990 = vld [vmem:[%s1 + $0x14c] sm:$0xf]
      %v991 = vld [vmem:[%s1 + $0x150] sm:$0xf]
      %v992 = vld [vmem:[%s1 + $0x154] sm:$0xf]
      %v993 = vld [vmem:[%s1 + $0x158] sm:$0xf]
      %v994 = vld [vmem:[%s1 + $0x15c] sm:$0xf]
      %v995 = vld [vmem:[%s1 + $0x160] sm:$0xf]
      %v996 = vld [vmem:[%s1 + $0x164] sm:$0xf]
      %v997 = vld [vmem:[%s1 + $0x168] sm:$0xf]
      %v998 = vld [vmem:[%s1 + $0x16c] sm:$0xf]
      %v999 = vld [vmem:[%s1 + $0x170] sm:$0xf]
      %v1000 = vld [vmem:[%s1 + $0x174] sm:$0xf]
      %v1001 = vld [vmem:[%s1 + $0x178] sm:$0xf]
      %v1002 = vld [vmem:[%s1 + $0x17c] sm:$0xf]
      %v1003 = vld [vmem:[%s1 + $0x180] sm:$0xf]
      %v1004 = vld [vmem:[%s1 + $0x184] sm:$0xf]
      %v1005 = vld [vmem:[%s1 + $0x188] sm:$0xf]
      %v1006 = vld [vmem:[%s1 + $0x18c] sm:$0xf]
      %v1007 = vld [vmem:[%s1 + $0x190] sm:$0xf]
      %v1008 = vld [vmem:[%s1 + $0x194] sm:$0xf]
      %v1009 = vld [vmem:[%s1 + $0x198] sm:$0xf]
      %v1010 = vld [vmem:[%s1 + $0x19c] sm:$0xf]
      %v1011 = vld [vmem:[%s1 + $0x1a0] sm:$0xf]
      %v1012 = vld [vmem:[%s1 + $0x1a4] sm:$0xf]
      %v1013 = vld [vmem:[%s1 + $0x1a8] sm:$0xf]
      %v1014 = vld [vmem:[%s1 + $0x1ac] sm:$0xf]
      %v1015 = vld [vmem:[%s1 + $0x1b0] sm:$0xf]
      %v1016 = vld [vmem:[%s1 + $0x1b4] sm:$0xf]
      %v1017 = vld [vmem:[%s1 + $0x1b8] sm:$0xf]
      %v1018 = vld [vmem:[%s1 + $0x1bc] sm:$0xf]
      %v1019 = vld [vmem:[%s1 + $0x1c0] sm:$0xf]
      %v1020 = vld [vmem:[%s1 + $0x1c4] sm:$0xf]
      %v1021 = vld [vmem:[%s1 + $0x1c8] sm:$0xf]
      %v1022 = vld [vmem:[%s1 + $0x1cc] sm:$0xf]
      %v1023 = vld [vmem:[%s1 + $0x1d0] sm:$0xf]
      %v1024 = vld [vmem:[%s1 + $0x1d4] sm:$0xf]
      %v1025 = vld [vmem:[%s1 + $0x1d8] sm:$0xf]
      %v1026 = vld [vmem:[%s1 + $0x1dc] sm:$0xf]
      %v1027 = vld [vmem:[%s1 + $0x1e0] sm:$0xf]
      %v1028 = vld [vmem:[%s1 + $0x1e4] sm:$0xf]
      %v1029 = vld [vmem:[%s1 + $0x1e8] sm:$0xf]
      %v1030 = vld [vmem:[%s1 + $0x1ec] sm:$0xf]
      %v1031 = vld [vmem:[%s1 + $0x1f0] sm:$0xf]
      %v1032 = vld [vmem:[%s1 + $0x1f4] sm:$0xf]
      %v1033 = vld [vmem:[%s1 + $0x1f8] sm:$0xf]
      %v1034 = vld [vmem:[%s1 + $0x1fc] sm:$0xf]
      %v1035 = vld [vmem:[%s1 + $0x200] sm:$0xf]
      %v1036 = vld [vmem:[%s1 + $0x204] sm:$0xf]
      %v1037 = vld [vmem:[%s1 + $0x208] sm:$0xf]
      %v1038 = vld [vmem:[%s1 + $0x20c] sm:$0xf]
      %v1039 = vld [vmem:[%s1 + $0x210] sm:$0xf]
      %v1040 = vld [vmem:[%s1 + $0x214] sm:$0xf]
      %v1041 = vld [vmem:[%s1 + $0x218] sm:$0xf]
      %v1042 = vld [vmem:[%s1 + $0x21c] sm:$0xf]
      %v1043 = vld [vmem:[%s1 + $0x220] sm:$0xf]
      %v1044 = vld [vmem:[%s1 + $0x224] sm:$0xf]
      %v1045 = vld [vmem:[%s1 + $0x228] sm:$0xf]
      %v1046 = vld [vmem:[%s1 + $0x22c] sm:$0xf]
      %v1047 = vld [vmem:[%s1 + $0x230] sm:$0xf]
      %v1048 = vld [vmem:[%s1 + $0x234] sm:$0xf]
      %v1049 = vld [vmem:[%s1 + $0x238] sm:$0xf]
      %v1050 = vld [vmem:[%s1 + $0x23c] sm:$0xf]
      %v1195 = vunpack.c.l.b16 %v907
      %v1196 = vunpack.c.l.b16 %v908
      %v1197 = vunpack.c.l.b16 %v909
      %v1198 = vunpack.c.l.b16 %v910
      %v1199 = vunpack.c.l.b16 %v911
      %v1200 = vunpack.c.l.b16 %v912
      %v1201 = vunpack.c.l.b16 %v913
      %v1202 = vunpack.c.l.b16 %v914
      %v1203 = vunpack.c.l.b16 %v915
      %v1204 = vunpack.c.l.b16 %v916
      %v1205 = vunpack.c.l.b16 %v917
      %v1206 = vunpack.c.l.b16 %v918
      %v1207 = vunpack.c.l.b16 %v919
      %v1208 = vunpack.c.l.b16 %v920
      %v1209 = vunpack.c.l.b16 %v921
      %v1210 = vunpack.c.l.b16 %v922
      %v1211 = vunpack.c.l.b16 %v923
      %v1212 = vunpack.c.l.b16 %v924
      %v1213 = vunpack.c.l.b16 %v925
      %v1214 = vunpack.c.l.b16 %v926
      %v1215 = vunpack.c.l.b16 %v927
      %v1216 = vunpack.c.l.b16 %v928
      %v1217 = vunpack.c.l.b16 %v929
      %v1218 = vunpack.c.l.b16 %v930
      %v1219 = vunpack.c.l.b16 %v931
      %v1220 = vunpack.c.l.b16 %v932
      %v1221 = vunpack.c.l.b16 %v933
      %v1222 = vunpack.c.l.b16 %v934
      %v1223 = vunpack.c.l.b16 %v935
      %v1224 = vunpack.c.l.b16 %v936
      %v1225 = vunpack.c.l.b16 %v937
      %v1226 = vunpack.c.l.b16 %v938
      %v1227 = vunpack.c.l.b16 %v939
      %v1228 = vunpack.c.l.b16 %v940
      %v1229 = vunpack.c.l.b16 %v941
      %v1230 = vunpack.c.l.b16 %v942
      %v1231 = vunpack.c.l.b16 %v943
      %v1232 = vunpack.c.l.b16 %v944
      %v1233 = vunpack.c.l.b16 %v945
      %v1234 = vunpack.c.l.b16 %v946
      %v1235 = vunpack.c.l.b16 %v947
      %v1236 = vunpack.c.l.b16 %v948
      %v1237 = vunpack.c.l.b16 %v949
      %v1238 = vunpack.c.l.b16 %v950
      %v1239 = vunpack.c.l.b16 %v951
      %v1240 = vunpack.c.l.b16 %v952
      %v1241 = vunpack.c.l.b16 %v953
      %v1242 = vunpack.c.l.b16 %v954
      %v1243 = vunpack.c.l.b16 %v955
      %v1244 = vunpack.c.l.b16 %v956
      %v1245 = vunpack.c.l.b16 %v957
      %v1246 = vunpack.c.l.b16 %v958
      %v1247 = vunpack.c.l.b16 %v959
      %v1248 = vunpack.c.l.b16 %v960
      %v1249 = vunpack.c.l.b16 %v961
      %v1250 = vunpack.c.l.b16 %v962
      %v1251 = vunpack.c.l.b16 %v963
      %v1252 = vunpack.c.l.b16 %v964
      %v1253 = vunpack.c.l.b16 %v965
      %v1254 = vunpack.c.l.b16 %v966
      %v1255 = vunpack.c.l.b16 %v967
      %v1256 = vunpack.c.l.b16 %v968
      %v1257 = vunpack.c.l.b16 %v969
      %v1258 = vunpack.c.l.b16 %v970
      %v1259 = vunpack.c.l.b16 %v971
      %v1260 = vunpack.c.l.b16 %v972
      %v1261 = vunpack.c.l.b16 %v973
      %v1262 = vunpack.c.l.b16 %v974
      %v1263 = vunpack.c.l.b16 %v975
      %v1264 = vunpack.c.l.b16 %v976
      %v1265 = vunpack.c.l.b16 %v977
      %v1266 = vunpack.c.l.b16 %v978
      %v1267 = vunpack.c.l.b16 %v979
      %v1268 = vunpack.c.l.b16 %v980
      %v1269 = vunpack.c.l.b16 %v981
      %v1270 = vunpack.c.l.b16 %v982
      %v1271 = vunpack.c.l.b16 %v983
      %v1272 = vunpack.c.l.b16 %v984
      %v1273 = vunpack.c.l.b16 %v985
      %v1274 = vunpack.c.l.b16 %v986
      %v1275 = vunpack.c.l.b16 %v987
      %v1276 = vunpack.c.l.b16 %v988
      %v1277 = vunpack.c.l.b16 %v989
      %v1278 = vunpack.c.l.b16 %v990
      %v1279 = vunpack.c.l.b16 %v991
      %v1280 = vunpack.c.l.b16 %v992
      %v1281 = vunpack.c.l.b16 %v993
      %v1282 = vunpack.c.l.b16 %v994
      %v1283 = vunpack.c.l.b16 %v995
      %v1284 = vunpack.c.l.b16 %v996
      %v1285 = vunpack.c.l.b16 %v997
      %v1286 = vunpack.c.l.b16 %v998
      %v1287 = vunpack.c.l.b16 %v999
      %v1288 = vunpack.c.l.b16 %v1000
      %v1289 = vunpack.c.l.b16 %v1001
      %v1290 = vunpack.c.l.b16 %v1002
      %v1291 = vunpack.c.l.b16 %v1003
      %v1292 = vunpack.c.l.b16 %v1004
      %v1293 = vunpack.c.l.b16 %v1005
      %v1294 = vunpack.c.l.b16 %v1006
      %v1295 = vunpack.c.l.b16 %v1007
      %v1296 = vunpack.c.l.b16 %v1008
      %v1297 = vunpack.c.l.b16 %v1009
      %v1298 = vunpack.c.l.b16 %v1010
      %v1299 = vunpack.c.l.b16 %v1011
      %v1300 = vunpack.c.l.b16 %v1012
      %v1301 = vunpack.c.l.b16 %v1013
      %v1302 = vunpack.c.l.b16 %v1014
      %v1303 = vunpack.c.l.b16 %v1015
      %v1304 = vunpack.c.l.b16 %v1016
      %v1305 = vunpack.c.l.b16 %v1017
      %v1306 = vunpack.c.l.b16 %v1018
      %v1307 = vunpack.c.l.b16 %v1019
      %v1308 = vunpack.c.l.b16 %v1020
      %v1309 = vunpack.c.l.b16 %v1021
      %v1310 = vunpack.c.l.b16 %v1022
      %v1311 = vunpack.c.l.b16 %v1023
      %v1312 = vunpack.c.l.b16 %v1024
      %v1313 = vunpack.c.l.b16 %v1025
      %v1314 = vunpack.c.l.b16 %v1026
      %v1315 = vunpack.c.l.b16 %v1027
      %v1316 = vunpack.c.l.b16 %v1028
      %v1317 = vunpack.c.l.b16 %v1029
      %v1318 = vunpack.c.l.b16 %v1030
      %v1319 = vunpack.c.l.b16 %v1031
      %v1320 = vunpack.c.l.b16 %v1032
      %v1321 = vunpack.c.l.b16 %v1033
      %v1322 = vunpack.c.l.b16 %v1034
      %v1323 = vunpack.c.l.b16 %v1035
      %v1324 = vunpack.c.l.b16 %v1036
      %v1325 = vunpack.c.l.b16 %v1037
      %v1326 = vunpack.c.l.b16 %v1038
      %v1327 = vunpack.c.l.b16 %v1039
      %v1328 = vunpack.c.l.b16 %v1040
      %v1329 = vunpack.c.l.b16 %v1041
      %v1330 = vunpack.c.l.b16 %v1042
      %v1331 = vunpack.c.l.b16 %v1043
      %v1332 = vunpack.c.l.b16 %v1044
      %v1333 = vunpack.c.l.b16 %v1045
      %v1334 = vunpack.c.l.b16 %v1046
      %v1335 = vunpack.c.l.b16 %v1047
      %v1336 = vunpack.c.l.b16 %v1048
      %v1337 = vunpack.c.l.b16 %v1049
      %v1338 = vunpack.c.l.b16 %v1050
      %v1339 = vpack.c.b16 %v1196, %v1195
      %v1340 = vpack.c.b16 %v1198, %v1197
      %v1341 = vpack.c.b16 %v1200, %v1199
      %v1342 = vpack.c.b16 %v1202, %v1201
      %v1343 = vpack.c.b16 %v1204, %v1203
      %v1344 = vpack.c.b16 %v1206, %v1205
      %v1345 = vpack.c.b16 %v1208, %v1207
      %v1346 = vpack.c.b16 %v1210, %v1209
      %v1347 = vpack.c.b16 %v1212, %v1211
      %v1348 = vpack.c.b16 %v1214, %v1213
      %v1349 = vpack.c.b16 %v1216, %v1215
      %v1350 = vpack.c.b16 %v1218, %v1217
      %v1351 = vpack.c.b16 %v1220, %v1219
      %v1352 = vpack.c.b16 %v1222, %v1221
      %v1353 = vpack.c.b16 %v1224, %v1223
      %v1354 = vpack.c.b16 %v1226, %v1225
      %v1355 = vpack.c.b16 %v1228, %v1227
      %v1356 = vpack.c.b16 %v1230, %v1229
      %v1357 = vpack.c.b16 %v1232, %v1231
      %v1358 = vpack.c.b16 %v1234, %v1233
      %v1359 = vpack.c.b16 %v1236, %v1235
      %v1360 = vpack.c.b16 %v1238, %v1237
      %v1361 = vpack.c.b16 %v1240, %v1239
      %v1362 = vpack.c.b16 %v1242, %v1241
      %v1363 = vpack.c.b16 %v1244, %v1243
      %v1364 = vpack.c.b16 %v1246, %v1245
      %v1365 = vpack.c.b16 %v1248, %v1247
      %v1366 = vpack.c.b16 %v1250, %v1249
      %v1367 = vpack.c.b16 %v1252, %v1251
      %v1368 = vpack.c.b16 %v1254, %v1253
      %v1369 = vpack.c.b16 %v1256, %v1255
      %v1370 = vpack.c.b16 %v1258, %v1257
      %v1371 = vpack.c.b16 %v1260, %v1259
      %v1372 = vpack.c.b16 %v1262, %v1261
      %v1373 = vpack.c.b16 %v1264, %v1263
      %v1374 = vpack.c.b16 %v1266, %v1265
      %v1375 = vpack.c.b16 %v1268, %v1267
      %v1376 = vpack.c.b16 %v1270, %v1269
      %v1377 = vpack.c.b16 %v1272, %v1271
      %v1378 = vpack.c.b16 %v1274, %v1273
      %v1379 = vpack.c.b16 %v1276, %v1275
      %v1380 = vpack.c.b16 %v1278, %v1277
      %v1381 = vpack.c.b16 %v1280, %v1279
      %v1382 = vpack.c.b16 %v1282, %v1281
      %v1383 = vpack.c.b16 %v1284, %v1283
      %v1384 = vpack.c.b16 %v1286, %v1285
      %v1385 = vpack.c.b16 %v1288, %v1287
      %v1386 = vpack.c.b16 %v1290, %v1289
      %v1387 = vpack.c.b16 %v1292, %v1291
      %v1388 = vpack.c.b16 %v1294, %v1293
      %v1389 = vpack.c.b16 %v1296, %v1295
      %v1390 = vpack.c.b16 %v1298, %v1297
      %v1391 = vpack.c.b16 %v1300, %v1299
      %v1392 = vpack.c.b16 %v1302, %v1301
      %v1393 = vpack.c.b16 %v1304, %v1303
      %v1394 = vpack.c.b16 %v1306, %v1305
      %v1395 = vpack.c.b16 %v1308, %v1307
      %v1396 = vpack.c.b16 %v1310, %v1309
      %v1397 = vpack.c.b16 %v1312, %v1311
      %v1398 = vpack.c.b16 %v1314, %v1313
      %v1399 = vpack.c.b16 %v1316, %v1315
      %v1400 = vpack.c.b16 %v1318, %v1317
      %v1401 = vpack.c.b16 %v1320, %v1319
      %v1402 = vpack.c.b16 %v1322, %v1321
      %v1403 = vpack.c.b16 %v1324, %v1323
      %v1404 = vpack.c.b16 %v1326, %v1325
      %v1405 = vpack.c.b16 %v1328, %v1327
      %v1406 = vpack.c.b16 %v1330, %v1329
      %v1407 = vpack.c.b16 %v1332, %v1331
      %v1408 = vpack.c.b16 %v1334, %v1333
      %v1409 = vpack.c.b16 %v1336, %v1335
      %v1410 = vpack.c.b16 %v1338, %v1337
      %1483 = vmatprep.subr.bf16.mxu0 0
      %1484 = vmatpush1.bf16.msra.mxu0 %v1339
      %1485 = vmatprep.subr.bf16.mxu0 0
      %1486 = vmatpush1.bf16.msra.mxu0 %v1340
      %1487 = vmatprep.subr.bf16.mxu0 0
      %1488 = vmatpush1.bf16.msra.mxu0 %v1341
      %1489 = vmatprep.subr.bf16.mxu0 0
      %1490 = vmatpush1.bf16.msra.mxu0 %v1342
      %1491 = vmatprep.subr.bf16.mxu0 0
      %1492 = vmatpush1.bf16.msra.mxu0 %v1343
      %1493 = vmatprep.subr.bf16.mxu0 0
      %1494 = vmatpush1.bf16.msra.mxu0 %v1344
      %1495 = vmatprep.subr.bf16.mxu0 0
      %1496 = vmatpush1.bf16.msra.mxu0 %v1345
      %1497 = vmatprep.subr.bf16.mxu0 0
      %1498 = vmatpush1.bf16.msra.mxu0 %v1346
      %1499 = vmatprep.subr.bf16.mxu0 0
      %1500 = vmatpush1.bf16.msra.mxu0 %v1347
      %1501 = vmatprep.subr.bf16.mxu0 0
      %1502 = vmatpush1.bf16.msra.mxu0 %v1348
      %1503 = vmatprep.subr.bf16.mxu0 0
      %1504 = vmatpush1.bf16.msra.mxu0 %v1349
      %1505 = vmatprep.subr.bf16.mxu0 0
      %1506 = vmatpush1.bf16.msra.mxu0 %v1350
      %1507 = vmatprep.subr.bf16.mxu0 0
      %1508 = vmatpush1.bf16.msra.mxu0 %v1351
      %1509 = vmatprep.subr.bf16.mxu0 0
      %1510 = vmatpush1.bf16.msra.mxu0 %v1352
      %1511 = vmatprep.subr.bf16.mxu0 0
      %1512 = vmatpush1.bf16.msra.mxu0 %v1353
      %1513 = vmatprep.subr.bf16.mxu0 0
      %1514 = vmatpush1.bf16.msra.mxu0 %v1354
      %1515 = vmatprep.mubr.bf16.mxu0 %v594
      %1516 = vmatmul.mubr.bf16.gmra.mrb[0].mxu0 %v548
      %v1517 = vpop.f32.mrb[0].mxu0
      %v1518 = vadd.f32 0.0, %v1517
      %v1519 = vpop.f32.mrb[0].mxu0
      %v1520 = vpop.f32.mrb[0].mxu0
      %v1521 = vadd.f32 0.0, %v1520
      %v1522 = vpop.f32.mrb[0].mxu0
      %1523 = vmatprep.mubr.bf16.mxu0 %v606
      %1524 = vmatmul.mubr.bf16.gmra.mrb[0].mxu0 %v549
      %v1525 = vpop.f32.mrb[0].mxu0
      %v1526 = vadd.f32 0.0, %v1525
      %v1527 = vpop.f32.mrb[0].mxu0
      %v1528 = vpop.f32.mrb[0].mxu0
      %v1529 = vadd.f32 0.0, %v1528
      %v1530 = vpop.f32.mrb[0].mxu0
      %1531 = vmatprep.mubr.bf16.mxu0 %v618
      %1532 = vmatmul.mubr.bf16.gmra.mrb[0].mxu0 %v550
      %v1533 = vpop.f32.mrb[0].mxu0
      %v1534 = vadd.f32 0.0, %v1533
      %v1535 = vpop.f32.mrb[0].mxu0
      %v1536 = vpop.f32.mrb[0].mxu0
      %v1537 = vadd.f32 0.0, %v1536
      %v1538 = vpop.f32.mrb[0].mxu0
      %1539 = vmatprep.mubr.bf16.mxu0 %v630
      %1540 = vmatmul.mubr.bf16.gmra.mrb[0].mxu0 %v551
      %v1541 = vpop.f32.mrb[0].mxu0
      %v1542 = vadd.f32 0.0, %v1541
      %v1543 = vpop.f32.mrb[0].mxu0
      %v1544 = vpop.f32.mrb[0].mxu0
      %v1545 = vadd.f32 0.0, %v1544
      %v1546 = vpop.f32.mrb[0].mxu0
      %1547 = vmatprep.mubr.bf16.mxu0 %v642
      %1548 = vmatmul.mubr.bf16.gmra.mrb[0].mxu0 %v552
      %v1549 = vpop.f32.mrb[0].mxu0
      %v1550 = vadd.f32 0.0, %v1549
      %v1551 = vpop.f32.mrb[0].mxu0
      %v1552 = vpop.f32.mrb[0].mxu0
      %v1553 = vadd.f32 0.0, %v1552
      %v1554 = vpop.f32.mrb[0].mxu0
      %1555 = vmatprep.mubr.bf16.mxu0 %v654
      %1556 = vmatmul.mubr.bf16.gmra.mrb[0].mxu0 %v553
      %v1557 = vpop.f32.mrb[0].mxu0
      %v1558 = vadd.f32 0.0, %v1557
      %v1559 = vpop.f32.mrb[0].mxu0
      %v1560 = vpop.f32.mrb[0].mxu0
      %v1561 = vadd.f32 0.0, %v1560
      %v1562 = vpop.f32.mrb[0].mxu0
      %1563 = vmatprep.mubr.bf16.mxu0 %v666
      %1564 = vmatmul.mubr.bf16.gmra.mrb[0].mxu0 %v554
      %v1565 = vpop.f32.mrb[0].mxu0
      %v1566 = vadd.f32 0.0, %v1565
      %v1567 = vpop.f32.mrb[0].mxu0
      %v1568 = vpop.f32.mrb[0].mxu0
      %v1569 = vadd.f32 0.0, %v1568
      %v1570 = vpop.f32.mrb[0].mxu0
      %1571 = vmatprep.mubr.bf16.mxu0 %v678
      %1572 = vmatmul.mubr.bf16.gmra.mrb[0].mxu0 %v555
      %v1573 = vpop.f32.mrb[0].mxu0
      %v1574 = vadd.f32 0.0, %v1573
      %v1575 = vpop.f32.mrb[0].mxu0
      %v1576 = vpop.f32.mrb[0].mxu0
      %v1577 = vadd.f32 0.0, %v1576
      %v1578 = vpop.f32.mrb[0].mxu0
      %1579 = vmatprep.mubr.bf16.mxu0 %v690
      %1580 = vmatmul.mubr.bf16.gmra.mrb[0].mxu0 %v556
      %v1581 = vpop.f32.mrb[0].mxu0
      %v1582 = vadd.f32 0.0, %v1581
      %v1583 = vpop.f32.mrb[0].mxu0
      %v1584 = vpop.f32.mrb[0].mxu0
      %v1585 = vadd.f32 0.0, %v1584
      %v1586 = vpop.f32.mrb[0].mxu0
      %1587 = vmatprep.mubr.bf16.mxu0 %v702
      %1588 = vmatmul.mubr.bf16.gmra.mrb[0].mxu0 %v557
      %v1589 = vpop.f32.mrb[0].mxu0
      %v1590 = vadd.f32 0.0, %v1589
      %v1591 = vpop.f32.mrb[0].mxu0
      %v1592 = vpop.f32.mrb[0].mxu0
      %v1593 = vadd.f32 0.0, %v1592
      %v1594 = vpop.f32.mrb[0].mxu0
      %1595 = vmatprep.mubr.bf16.mxu0 %v714
      %1596 = vmatmul.mubr.bf16.gmra.mrb[0].mxu0 %v558
      %v1597 = vpop.f32.mrb[0].mxu0
      %v1598 = vadd.f32 0.0, %v1597
      %v1599 = vpop.f32.mrb[0].mxu0
      %v1600 = vpop.f32.mrb[0].mxu0
      %v1601 = vadd.f32 0.0, %v1600
      %v1602 = vpop.f32.mrb[0].mxu0
      %1603 = vmatprep.mubr.bf16.mxu0 %v726
      %1604 = vmatmul.mubr.bf16.gmra.mrb[0].mxu0 %v559
      %v1605 = vpop.f32.mrb[0].mxu0
      %v1606 = vadd.f32 0.0, %v1605
      %v1607 = vpop.f32.mrb[0].mxu0
      %v1608 = vpop.f32.mrb[0].mxu0
      %v1609 = vadd.f32 0.0, %v1608
      %v1610 = vpop.f32.mrb[0].mxu0
      %1611 = vmatprep.mubr.bf16.mxu0 %v738
      %1612 = vmatmul.mubr.bf16.gmra.mrb[0].mxu0 %v560
      %v1613 = vpop.f32.mrb[0].mxu0
      %v1614 = vadd.f32 0.0, %v1613
      %v1615 = vpop.f32.mrb[0].mxu0
      %v1616 = vpop.f32.mrb[0].mxu0
      %v1617 = vadd.f32 0.0, %v1616
      %v1618 = vpop.f32.mrb[0].mxu0
      %1619 = vmatprep.mubr.bf16.mxu0 %v750
      %1620 = vmatmul.mubr.bf16.gmra.mrb[0].mxu0 %v561
      %v1621 = vpop.f32.mrb[0].mxu0
      %v1622 = vadd.f32 0.0, %v1621
      %v1623 = vpop.f32.mrb[0].mxu0
      %v1624 = vpop.f32.mrb[0].mxu0
      %v1625 = vadd.f32 0.0, %v1624
      %v1626 = vpop.f32.mrb[0].mxu0
      %1627 = vmatprep.mubr.bf16.mxu0 %v762
      %1628 = vmatmul.mubr.bf16.gmra.mrb[0].mxu0 %v562
      %v1629 = vpop.f32.mrb[0].mxu0
      %v1630 = vadd.f32 0.0, %v1629
      %v1631 = vpop.f32.mrb[0].mxu0
      %v1632 = vpop.f32.mrb[0].mxu0
      %v1633 = vadd.f32 0.0, %v1632
      %v1634 = vpop.f32.mrb[0].mxu0
      %1635 = vmatprep.mubr.bf16.mxu0 %v774
      %1636 = vmatmul.mubr.bf16.gmra.mrb[0].mxu0 %v563
      %v1637 = vpop.f32.mrb[0].mxu0
      %v1638 = vadd.f32 0.0, %v1637
      %v1639 = vpop.f32.mrb[0].mxu0
      %v1640 = vpop.f32.mrb[0].mxu0
      %v1641 = vadd.f32 0.0, %v1640
      %v1642 = vpop.f32.mrb[0].mxu0
      %1643 = vdwg.mxu0
      %1644 = vmatprep.subr.bf16.mxu0 0
      %1645 = vmatpush1.bf16.msra.mxu0 %v1355
      %1646 = vmatprep.subr.bf16.mxu0 0
      %1647 = vmatpush1.bf16.msra.mxu0 %v1356
      %1648 = vmatprep.subr.bf16.mxu0 0
      %1649 = vmatpush1.bf16.msra.mxu0 %v1357
      %1650 = vmatprep.subr.bf16.mxu0 0
      %1651 = vmatpush1.bf16.msra.mxu0 %v1358
      %1652 = vmatprep.subr.bf16.mxu0 0
      %1653 = vmatpush1.bf16.msra.mxu0 %v1359
      %1654 = vmatprep.subr.bf16.mxu0 0
      %1655 = vmatpush1.bf16.msra.mxu0 %v1360
      %1656 = vmatprep.subr.bf16.mxu0 0
      %1657 = vmatpush1.bf16.msra.mxu0 %v1361
      %1658 = vmatprep.subr.bf16.mxu0 0
      %1659 = vmatpush1.bf16.msra.mxu0 %v1362
      %1660 = vmatprep.subr.bf16.mxu0 0
      %1661 = vmatpush1.bf16.msra.mxu0 %v1363
      %1662 = vmatprep.subr.bf16.mxu0 0
      %1663 = vmatpush1.bf16.msra.mxu0 %v1364
      %1664 = vmatprep.subr.bf16.mxu0 0
      %1665 = vmatpush1.bf16.msra.mxu0 %v1365
      %1666 = vmatprep.subr.bf16.mxu0 0
      %1667 = vmatpush1.bf16.msra.mxu0 %v1366
      %1668 = vmatprep.subr.bf16.mxu0 0
      %1669 = vmatpush1.bf16.msra.mxu0 %v1367
      %1670 = vmatprep.subr.bf16.mxu0 0
      %1671 = vmatpush1.bf16.msra.mxu0 %v1368
      %1672 = vmatprep.subr.bf16.mxu0 0
      %1673 = vmatpush1.bf16.msra.mxu0 %v1369
      %1674 = vmatprep.subr.bf16.mxu0 0
      %1675 = vmatpush1.bf16.msra.mxu0 %v1370
      %1676 = vmatprep.mubr.bf16.mxu0 %v549
      %1677 = vmatmul.mubr.bf16.gmra.mrb[0].mxu0 %v826
      %v1678 = vpop.f32.mrb[0].mxu0
      %v1679 = vadd.f32 %v1518, %v1678
      %v1680 = vpop.f32.mrb[0].mxu0
      %v1681 = vpop.f32.mrb[0].mxu0
      %v1682 = vadd.f32 %v1521, %v1681
      %v1683 = vpop.f32.mrb[0].mxu0
      %1684 = vmatprep.mubr.bf16.mxu0 %v550
      %1685 = vmatmul.mubr.bf16.gmra.mrb[0].mxu0 %v829
      %v1686 = vpop.f32.mrb[0].mxu0
      %v1687 = vadd.f32 %v1526, %v1686
      %v1688 = vpop.f32.mrb[0].mxu0
      %v1689 = vpop.f32.mrb[0].mxu0
      %v1690 = vadd.f32 %v1529, %v1689
      %v1691 = vpop.f32.mrb[0].mxu0
      %1692 = vmatprep.mubr.bf16.mxu0 %v551
      %1693 = vmatmul.mubr.bf16.gmra.mrb[0].mxu0 %v832
      %v1694 = vpop.f32.mrb[0].mxu0
      %v1695 = vadd.f32 %v1534, %v1694
      %v1696 = vpop.f32.mrb[0].mxu0
      %v1697 = vpop.f32.mrb[0].mxu0
      %v1698 = vadd.f32 %v1537, %v1697
      %v1699 = vpop.f32.mrb[0].mxu0
      %1700 = vmatprep.mubr.bf16.mxu0 %v552
      %1701 = vmatmul.mubr.bf16.gmra.mrb[0].mxu0 %v835
      %v1702 = vpop.f32.mrb[0].mxu0
      %v1703 = vadd.f32 %v1542, %v1702
      %v1704 = vpop.f32.mrb[0].mxu0
      %v1705 = vpop.f32.mrb[0].mxu0
      %v1706 = vadd.f32 %v1545, %v1705
      %v1707 = vpop.f32.mrb[0].mxu0
      %1708 = vmatprep.mubr.bf16.mxu0 %v553
      %1709 = vmatmul.mubr.bf16.gmra.mrb[0].mxu0 %v838
      %v1710 = vpop.f32.mrb[0].mxu0
      %v1711 = vadd.f32 %v1550, %v1710
      %v1712 = vpop.f32.mrb[0].mxu0
      %v1713 = vpop.f32.mrb[0].mxu0
      %v1714 = vadd.f32 %v1553, %v1713
      %v1715 = vpop.f32.mrb[0].mxu0
      %1716 = vmatprep.mubr.bf16.mxu0 %v554
      %1717 = vmatmul.mubr.bf16.gmra.mrb[0].mxu0 %v841
      %v1718 = vpop.f32.mrb[0].mxu0
      %v1719 = vadd.f32 %v1558, %v1718
      %v1720 = vpop.f32.mrb[0].mxu0
      %v1721 = vpop.f32.mrb[0].mxu0
      %v1722 = vadd.f32 %v1561, %v1721
      %v1723 = vpop.f32.mrb[0].mxu0
      %1724 = vmatprep.mubr.bf16.mxu0 %v555
      %1725 = vmatmul.mubr.bf16.gmra.mrb[0].mxu0 %v844
      %v1726 = vpop.f32.mrb[0].mxu0
      %v1727 = vadd.f32 %v1566, %v1726
      %v1728 = vpop.f32.mrb[0].mxu0
      %v1729 = vpop.f32.mrb[0].mxu0
      %v1730 = vadd.f32 %v1569, %v1729
      %v1731 = vpop.f32.mrb[0].mxu0
      %1732 = vmatprep.mubr.bf16.mxu0 %v556
      %1733 = vmatmul.mubr.bf16.gmra.mrb[0].mxu0 %v847
      %v1734 = vpop.f32.mrb[0].mxu0
      %v1735 = vadd.f32 %v1574, %v1734
      %v1736 = vpop.f32.mrb[0].mxu0
      %v1737 = vpop.f32.mrb[0].mxu0
      %v1738 = vadd.f32 %v1577, %v1737
      %v1739 = vpop.f32.mrb[0].mxu0
      %1740 = vmatprep.mubr.bf16.mxu0 %v557
      %1741 = vmatmul.mubr.bf16.gmra.mrb[0].mxu0 %v850
      %v1742 = vpop.f32.mrb[0].mxu0
      %v1743 = vadd.f32 %v1582, %v1742
      %v1744 = vpop.f32.mrb[0].mxu0
      %v1745 = vpop.f32.mrb[0].mxu0
      %v1746 = vadd.f32 %v1585, %v1745
      %v1747 = vpop.f32.mrb[0].mxu0
      %1748 = vmatprep.mubr.bf16.mxu0 %v558
      %1749 = vmatmul.mubr.bf16.gmra.mrb[0].mxu0 %v853
      %v1750 = vpop.f32.mrb[0].mxu0
      %v1751 = vadd.f32 %v1590, %v1750
      %v1752 = vpop.f32.mrb[0].mxu0
      %v1753 = vpop.f32.mrb[0].mxu0
      %v1754 = vadd.f32 %v1593, %v1753
      %v1755 = vpop.f32.mrb[0].mxu0
      %1756 = vmatprep.mubr.bf16.mxu0 %v559
      %1757 = vmatmul.mubr.bf16.gmra.mrb[0].mxu0 %v856
      %v1758 = vpop.f32.mrb[0].mxu0
      %v1759 = vadd.f32 %v1598, %v1758
      %v1760 = vpop.f32.mrb[0].mxu0
      %v1761 = vpop.f32.mrb[0].mxu0
      %v1762 = vadd.f32 %v1601, %v1761
      %v1763 = vpop.f32.mrb[0].mxu0
      %1764 = vmatprep.mubr.bf16.mxu0 %v560
      %1765 = vmatmul.mubr.bf16.gmra.mrb[0].mxu0 %v859
      %v1766 = vpop.f32.mrb[0].mxu0
      %v1767 = vadd.f32 %v1606, %v1766
      %v1768 = vpop.f32.mrb[0].mxu0
      %v1769 = vpop.f32.mrb[0].mxu0
      %v1770 = vadd.f32 %v1609, %v1769
      %v1771 = vpop.f32.mrb[0].mxu0
      %1772 = vmatprep.mubr.bf16.mxu0 %v561
      %1773 = vmatmul.mubr.bf16.gmra.mrb[0].mxu0 %v862
      %v1774 = vpop.f32.mrb[0].mxu0
      %v1775 = vadd.f32 %v1614, %v1774
      %v1776 = vpop.f32.mrb[0].mxu0
      %v1777 = vpop.f32.mrb[0].mxu0
      %v1778 = vadd.f32 %v1617, %v1777
      %v1779 = vpop.f32.mrb[0].mxu0
      %1780 = vmatprep.mubr.bf16.mxu0 %v562
      %1781 = vmatmul.mubr.bf16.gmra.mrb[0].mxu0 %v865
      %v1782 = vpop.f32.mrb[0].mxu0
      %v1783 = vadd.f32 %v1622, %v1782
      %v1784 = vpop.f32.mrb[0].mxu0
      %v1785 = vpop.f32.mrb[0].mxu0
      %v1786 = vadd.f32 %v1625, %v1785
      %v1787 = vpop.f32.mrb[0].mxu0
      %1788 = vmatprep.mubr.bf16.mxu0 %v563
      %1789 = vmatmul.mubr.bf16.gmra.mrb[0].mxu0 %v868
      %v1790 = vpop.f32.mrb[0].mxu0
      %v1791 = vadd.f32 %v1630, %v1790
      %v1792 = vpop.f32.mrb[0].mxu0
      %v1793 = vpop.f32.mrb[0].mxu0
      %v1794 = vadd.f32 %v1633, %v1793
      %v1795 = vpop.f32.mrb[0].mxu0
      %1796 = vmatprep.mubr.bf16.mxu0 %v564
      %1797 = vmatmul.mubr.bf16.gmra.mrb[0].mxu0 %v871
      %v1798 = vpop.f32.mrb[0].mxu0
      %v1799 = vadd.f32 %v1638, %v1798
      %v1800 = vpop.f32.mrb[0].mxu0
      %v1801 = vpop.f32.mrb[0].mxu0
      %v1802 = vadd.f32 %v1641, %v1801
      %v1803 = vpop.f32.mrb[0].mxu0
      %1804 = vdwg.mxu0
      %1805 = vmatprep.subr.bf16.mxu0 0
      %1806 = vmatpush1.bf16.msra.mxu0 %v1371
      %1807 = vmatprep.subr.bf16.mxu0 0
      %1808 = vmatpush1.bf16.msra.mxu0 %v1372
      %1809 = vmatprep.subr.bf16.mxu0 0
      %1810 = vmatpush1.bf16.msra.mxu0 %v1373
      %1811 = vmatprep.subr.bf16.mxu0 0
      %1812 = vmatpush1.bf16.msra.mxu0 %v1374
      %1813 = vmatprep.subr.bf16.mxu0 0
      %1814 = vmatpush1.bf16.msra.mxu0 %v1375
      %1815 = vmatprep.subr.bf16.mxu0 0
      %1816 = vmatpush1.bf16.msra.mxu0 %v1376
      %1817 = vmatprep.subr.bf16.mxu0 0
      %1818 = vmatpush1.bf16.msra.mxu0 %v1377
      %1819 = vmatprep.subr.bf16.mxu0 0
      %1820 = vmatpush1.bf16.msra.mxu0 %v1378
      %1821 = vmatprep.subr.bf16.mxu0 0
      %1822 = vmatpush1.bf16.msra.mxu0 %v1379
      %1823 = vmatprep.subr.bf16.mxu0 0
      %1824 = vmatpush1.bf16.msra.mxu0 %v1380
      %1825 = vmatprep.subr.bf16.mxu0 0
      %1826 = vmatpush1.bf16.msra.mxu0 %v1381
      %1827 = vmatprep.subr.bf16.mxu0 0
      %1828 = vmatpush1.bf16.msra.mxu0 %v1382
      %1829 = vmatprep.subr.bf16.mxu0 0
      %1830 = vmatpush1.bf16.msra.mxu0 %v1383
      %1831 = vmatprep.subr.bf16.mxu0 0
      %1832 = vmatpush1.bf16.msra.mxu0 %v1384
      %1833 = vmatprep.subr.bf16.mxu0 0
      %1834 = vmatpush1.bf16.msra.mxu0 %v1385
      %1835 = vmatprep.subr.bf16.mxu0 0
      %1836 = vmatpush1.bf16.msra.mxu0 %v1386
      %1837 = vmatprep.mubr.bf16.mxu0 %v829
      %1838 = vmatmul.mubr.bf16.gmra.mrb[0].mxu0 %v606
      %v1839 = vpop.f32.mrb[0].mxu0
      %v1840 = vadd.f32 %v1679, %v1839
      %v1841 = vpop.f32.mrb[0].mxu0
      %v1842 = vpop.f32.mrb[0].mxu0
      %v1843 = vadd.f32 %v1682, %v1842
      %v1844 = vpop.f32.mrb[0].mxu0
      %1845 = vmatprep.mubr.bf16.mxu0 %v832
      %1846 = vmatmul.mubr.bf16.gmra.mrb[0].mxu0 %v618
      %v1847 = vpop.f32.mrb[0].mxu0
      %v1848 = vadd.f32 %v1687, %v1847
      %v1849 = vpop.f32.mrb[0].mxu0
      %v1850 = vpop.f32.mrb[0].mxu0
      %v1851 = vadd.f32 %v1690, %v1850
      %v1852 = vpop.f32.mrb[0].mxu0
      %1853 = vmatprep.mubr.bf16.mxu0 %v835
      %1854 = vmatmul.mubr.bf16.gmra.mrb[0].mxu0 %v630
      %v1855 = vpop.f32.mrb[0].mxu0
      %v1856 = vadd.f32 %v1695, %v1855
      %v1857 = vpop.f32.mrb[0].mxu0
      %v1858 = vpop.f32.mrb[0].mxu0
      %v1859 = vadd.f32 %v1698, %v1858
      %v1860 = vpop.f32.mrb[0].mxu0
      %1861 = vmatprep.mubr.bf16.mxu0 %v838
      %1862 = vmatmul.mubr.bf16.gmra.mrb[0].mxu0 %v642
      %v1863 = vpop.f32.mrb[0].mxu0
      %v1864 = vadd.f32 %v1703, %v1863
      %v1865 = vpop.f32.mrb[0].mxu0
      %v1866 = vpop.f32.mrb[0].mxu0
      %v1867 = vadd.f32 %v1706, %v1866
      %v1868 = vpop.f32.mrb[0].mxu0
      %1869 = vmatprep.mubr.bf16.mxu0 %v841
      %1870 = vmatmul.mubr.bf16.gmra.mrb[0].mxu0 %v654
      %v1871 = vpop.f32.mrb[0].mxu0
      %v1872 = vadd.f32 %v1711, %v1871
      %v1873 = vpop.f32.mrb[0].mxu0
      %v1874 = vpop.f32.mrb[0].mxu0
      %v1875 = vadd.f32 %v1714, %v1874
      %v1876 = vpop.f32.mrb[0].mxu0
      %1877 = vmatprep.mubr.bf16.mxu0 %v844
      %1878 = vmatmul.mubr.bf16.gmra.mrb[0].mxu0 %v666
      %v1879 = vpop.f32.mrb[0].mxu0
      %v1880 = vadd.f32 %v1719, %v1879
      %v1881 = vpop.f32.mrb[0].mxu0
      %v1882 = vpop.f32.mrb[0].mxu0
      %v1883 = vadd.f32 %v1722, %v1882
      %v1884 = vpop.f32.mrb[0].mxu0
      %1885 = vmatprep.mubr.bf16.mxu0 %v847
      %1886 = vmatmul.mubr.bf16.gmra.mrb[0].mxu0 %v678
      %v1887 = vpop.f32.mrb[0].mxu0
      %v1888 = vadd.f32 %v1727, %v1887
      %v1889 = vpop.f32.mrb[0].mxu0
      %v1890 = vpop.f32.mrb[0].mxu0
      %v1891 = vadd.f32 %v1730, %v1890
      %v1892 = vpop.f32.mrb[0].mxu0
      %1893 = vmatprep.mubr.bf16.mxu0 %v850
      %1894 = vmatmul.mubr.bf16.gmra.mrb[0].mxu0 %v690
      %v1895 = vpop.f32.mrb[0].mxu0
      %v1896 = vadd.f32 %v1735, %v1895
      %v1897 = vpop.f32.mrb[0].mxu0
      %v1898 = vpop.f32.mrb[0].mxu0
      %v1899 = vadd.f32 %v1738, %v1898
      %v1900 = vpop.f32.mrb[0].mxu0
      %1901 = vmatprep.mubr.bf16.mxu0 %v853
      %1902 = vmatmul.mubr.bf16.gmra.mrb[0].mxu0 %v702
      %v1903 = vpop.f32.mrb[0].mxu0
      %v1904 = vadd.f32 %v1743, %v1903
      %v1905 = vpop.f32.mrb[0].mxu0
      %v1906 = vpop.f32.mrb[0].mxu0
      %v1907 = vadd.f32 %v1746, %v1906
      %v1908 = vpop.f32.mrb[0].mxu0
      %1909 = vmatprep.mubr.bf16.mxu0 %v856
      %1910 = vmatmul.mubr.bf16.gmra.mrb[0].mxu0 %v714
      %v1911 = vpop.f32.mrb[0].mxu0
      %v1912 = vadd.f32 %v1751, %v1911
      %v1913 = vpop.f32.mrb[0].mxu0
      %v1914 = vpop.f32.mrb[0].mxu0
      %v1915 = vadd.f32 %v1754, %v1914
      %v1916 = vpop.f32.mrb[0].mxu0
      %1917 = vmatprep.mubr.bf16.mxu0 %v859
      %1918 = vmatmul.mubr.bf16.gmra.mrb[0].mxu0 %v726
      %v1919 = vpop.f32.mrb[0].mxu0
      %v1920 = vadd.f32 %v1759, %v1919
      %v1921 = vpop.f32.mrb[0].mxu0
      %v1922 = vpop.f32.mrb[0].mxu0
      %v1923 = vadd.f32 %v1762, %v1922
      %v1924 = vpop.f32.mrb[0].mxu0
      %1925 = vmatprep.mubr.bf16.mxu0 %v862
      %1926 = vmatmul.mubr.bf16.gmra.mrb[0].mxu0 %v738
      %v1927 = vpop.f32.mrb[0].mxu0
      %v1928 = vadd.f32 %v1767, %v1927
      %v1929 = vpop.f32.mrb[0].mxu0
      %v1930 = vpop.f32.mrb[0].mxu0
      %v1931 = vadd.f32 %v1770, %v1930
      %v1932 = vpop.f32.mrb[0].mxu0
      %1933 = vmatprep.mubr.bf16.mxu0 %v865
      %1934 = vmatmul.mubr.bf16.gmra.mrb[0].mxu0 %v750
      %v1935 = vpop.f32.mrb[0].mxu0
      %v1936 = vadd.f32 %v1775, %v1935
      %v1937 = vpop.f32.mrb[0].mxu0
      %v1938 = vpop.f32.mrb[0].mxu0
      %v1939 = vadd.f32 %v1778, %v1938
      %v1940 = vpop.f32.mrb[0].mxu0
      %1941 = vmatprep.mubr.bf16.mxu0 %v868
      %1942 = vmatmul.mubr.bf16.gmra.mrb[0].mxu0 %v762
      %v1943 = vpop.f32.mrb[0].mxu0
      %v1944 = vadd.f32 %v1783, %v1943
      %v1945 = vpop.f32.mrb[0].mxu0
      %v1946 = vpop.f32.mrb[0].mxu0
      %v1947 = vadd.f32 %v1786, %v1946
      %v1948 = vpop.f32.mrb[0].mxu0
      %1949 = vmatprep.mubr.bf16.mxu0 %v871
      %1950 = vmatmul.mubr.bf16.gmra.mrb[0].mxu0 %v774
      %v1951 = vpop.f32.mrb[0].mxu0
      %v1952 = vadd.f32 %v1791, %v1951
      %v1953 = vpop.f32.mrb[0].mxu0
      %v1954 = vpop.f32.mrb[0].mxu0
      %v1955 = vadd.f32 %v1794, %v1954
      %v1956 = vpop.f32.mrb[0].mxu0
      %1957 = vmatprep.mubr.bf16.mxu0 %v905
      %1958 = vmatmul.mubr.bf16.gmra.mrb[0].mxu0 %v899
      %v1959 = vpop.f32.mrb[0].mxu0
      %v1960 = vadd.f32 %v1799, %v1959
      %v1961 = vpop.f32.mrb[0].mxu0
      %v1962 = vpop.f32.mrb[0].mxu0
      %v1963 = vadd.f32 %v1802, %v1962
      %v1964 = vpop.f32.mrb[0].mxu0
      %1965 = vdwg.mxu0
      %1966 = vmatprep.subr.bf16.mxu0 0
      %1967 = vmatpush1.bf16.msra.mxu0 %v1387
      %1968 = vmatprep.subr.bf16.mxu0 0
      %1969 = vmatpush1.bf16.msra.mxu0 %v1388
      %1970 = vmatprep.subr.bf16.mxu0 0
      %1971 = vmatpush1.bf16.msra.mxu0 %v1389
      %1972 = vmatprep.subr.bf16.mxu0 0
      %1973 = vmatpush1.bf16.msra.mxu0 %v1390
      %1974 = vmatprep.subr.bf16.mxu0 0
      %1975 = vmatpush1.bf16.msra.mxu0 %v1391
      %1976 = vmatprep.subr.bf16.mxu0 0
      %1977 = vmatpush1.bf16.msra.mxu0 %v1392
      %1978 = vmatprep.subr.bf16.mxu0 0
      %1979 = vmatpush1.bf16.msra.mxu0 %v1393
      %1980 = vmatprep.subr.bf16.mxu0 0
      %1981 = vmatpush1.bf16.msra.mxu0 %v1394
      %1982 = vmatprep.subr.bf16.mxu0 0
      %1983 = vmatpush1.bf16.msra.mxu0 %v1395
      %1984 = vmatprep.subr.bf16.mxu0 0
      %1985 = vmatpush1.bf16.msra.mxu0 %v1396
      %1986 = vmatprep.subr.bf16.mxu0 0
      %1987 = vmatpush1.bf16.msra.mxu0 %v1397
      %1988 = vmatprep.subr.bf16.mxu0 0
      %1989 = vmatpush1.bf16.msra.mxu0 %v1398
      %1990 = vmatprep.subr.bf16.mxu0 0
      %1991 = vmatpush1.bf16.msra.mxu0 %v1399
      %1992 = vmatprep.subr.bf16.mxu0 0
      %1993 = vmatpush1.bf16.msra.mxu0 %v1400
      %1994 = vmatprep.subr.bf16.mxu0 0
      %1995 = vmatpush1.bf16.msra.mxu0 %v1401
      %1996 = vmatprep.subr.bf16.mxu0 0
      %1997 = vmatpush1.bf16.msra.mxu0 %v1402
      %1998 = vmatprep.mubr.bf16.mxu0 %v618
      %1999 = vmatmul.mubr.bf16.gmra.mrb[0].mxu0 %v550
      %v2000 = vpop.f32.mrb[0].mxu0
      %v2001 = vadd.f32 %v1840, %v2000
      %v2002 = vpop.f32.mrb[0].mxu0
      %v2003 = vpop.f32.mrb[0].mxu0
      %v2004 = vadd.f32 %v1843, %v2003
      %v2005 = vpop.f32.mrb[0].mxu0
      %2006 = vmatprep.mubr.bf16.mxu0 %v630
      %2007 = vmatmul.mubr.bf16.gmra.mrb[0].mxu0 %v551
      %v2008 = vpop.f32.mrb[0].mxu0
      %v2009 = vadd.f32 %v1848, %v2008
      %v2010 = vpop.f32.mrb[0].mxu0
      %v2011 = vpop.f32.mrb[0].mxu0
      %v2012 = vadd.f32 %v1851, %v2011
      %v2013 = vpop.f32.mrb[0].mxu0
      %2014 = vmatprep.mubr.bf16.mxu0 %v642
      %2015 = vmatmul.mubr.bf16.gmra.mrb[0].mxu0 %v552
      %v2016 = vpop.f32.mrb[0].mxu0
      %v2017 = vadd.f32 %v1856, %v2016
      %v2018 = vpop.f32.mrb[0].mxu0
      %v2019 = vpop.f32.mrb[0].mxu0
      %v2020 = vadd.f32 %v1859, %v2019
      %v2021 = vpop.f32.mrb[0].mxu0
      %2022 = vmatprep.mubr.bf16.mxu0 %v654
      %2023 = vmatmul.mubr.bf16.gmra.mrb[0].mxu0 %v553
      %v2024 = vpop.f32.mrb[0].mxu0
      %v2025 = vadd.f32 %v1864, %v2024
      %v2026 = vpop.f32.mrb[0].mxu0
      %v2027 = vpop.f32.mrb[0].mxu0
      %v2028 = vadd.f32 %v1867, %v2027
      %v2029 = vpop.f32.mrb[0].mxu0
      %2030 = vmatprep.mubr.bf16.mxu0 %v666
      %2031 = vmatmul.mubr.bf16.gmra.mrb[0].mxu0 %v554
      %v2032 = vpop.f32.mrb[0].mxu0
      %v2033 = vadd.f32 %v1872, %v2032
      %v2034 = vpop.f32.mrb[0].mxu0
      %v2035 = vpop.f32.mrb[0].mxu0
      %v2036 = vadd.f32 %v1875, %v2035
      %v2037 = vpop.f32.mrb[0].mxu0
      %2038 = vmatprep.mubr.bf16.mxu0 %v678
      %2039 = vmatmul.mubr.bf16.gmra.mrb[0].mxu0 %v555
      %v2040 = vpop.f32.mrb[0].mxu0
      %v2041 = vadd.f32 %v1880, %v2040
      %v2042 = vpop.f32.mrb[0].mxu0
      %v2043 = vpop.f32.mrb[0].mxu0
      %v2044 = vadd.f32 %v1883, %v2043
      %v2045 = vpop.f32.mrb[0].mxu0
      %2046 = vmatprep.mubr.bf16.mxu0 %v690
      %2047 = vmatmul.mubr.bf16.gmra.mrb[0].mxu0 %v556
      %v2048 = vpop.f32.mrb[0].mxu0
      %v2049 = vadd.f32 %v1888, %v2048
      %v2050 = vpop.f32.mrb[0].mxu0
      %v2051 = vpop.f32.mrb[0].mxu0
      %v2052 = vadd.f32 %v1891, %v2051
      %v2053 = vpop.f32.mrb[0].mxu0
      %2054 = vmatprep.mubr.bf16.mxu0 %v702
      %2055 = vmatmul.mubr.bf16.gmra.mrb[0].mxu0 %v557
      %v2056 = vpop.f32.mrb[0].mxu0
      %v2057 = vadd.f32 %v1896, %v2056
      %v2058 = vpop.f32.mrb[0].mxu0
      %v2059 = vpop.f32.mrb[0].mxu0
      %v2060 = vadd.f32 %v1899, %v2059
      %v2061 = vpop.f32.mrb[0].mxu0
      %2062 = vmatprep.mubr.bf16.mxu0 %v714
      %2063 = vmatmul.mubr.bf16.gmra.mrb[0].mxu0 %v558
      %v2064 = vpop.f32.mrb[0].mxu0
      %v2065 = vadd.f32 %v1904, %v2064
      %v2066 = vpop.f32.mrb[0].mxu0
      %v2067 = vpop.f32.mrb[0].mxu0
      %v2068 = vadd.f32 %v1907, %v2067
      %v2069 = vpop.f32.mrb[0].mxu0
      %2070 = vmatprep.mubr.bf16.mxu0 %v726
      %2071 = vmatmul.mubr.bf16.gmra.mrb[0].mxu0 %v559
      %v2072 = vpop.f32.mrb[0].mxu0
      %v2073 = vadd.f32 %v1912, %v2072
      %v2074 = vpop.f32.mrb[0].mxu0
      %v2075 = vpop.f32.mrb[0].mxu0
      %v2076 = vadd.f32 %v1915, %v2075
      %v2077 = vpop.f32.mrb[0].mxu0
      %2078 = vmatprep.mubr.bf16.mxu0 %v738
      %2079 = vmatmul.mubr.bf16.gmra.mrb[0].mxu0 %v560
      %v2080 = vpop.f32.mrb[0].mxu0
      %v2081 = vadd.f32 %v1920, %v2080
      %v2082 = vpop.f32.mrb[0].mxu0
      %v2083 = vpop.f32.mrb[0].mxu0
      %v2084 = vadd.f32 %v1923, %v2083
      %v2085 = vpop.f32.mrb[0].mxu0
      %2086 = vmatprep.mubr.bf16.mxu0 %v750
      %2087 = vmatmul.mubr.bf16.gmra.mrb[0].mxu0 %v561
      %v2088 = vpop.f32.mrb[0].mxu0
      %v2089 = vadd.f32 %v1928, %v2088
      %v2090 = vpop.f32.mrb[0].mxu0
      %v2091 = vpop.f32.mrb[0].mxu0
      %v2092 = vadd.f32 %v1931, %v2091
      %v2093 = vpop.f32.mrb[0].mxu0
      %2094 = vmatprep.mubr.bf16.mxu0 %v762
      %2095 = vmatmul.mubr.bf16.gmra.mrb[0].mxu0 %v562
      %v2096 = vpop.f32.mrb[0].mxu0
      %v2097 = vadd.f32 %v1936, %v2096
      %v2098 = vpop.f32.mrb[0].mxu0
      %v2099 = vpop.f32.mrb[0].mxu0
      %v2100 = vadd.f32 %v1939, %v2099
      %v2101 = vpop.f32.mrb[0].mxu0
      %2102 = vmatprep.mubr.bf16.mxu0 %v774
      %2103 = vmatmul.mubr.bf16.gmra.mrb[0].mxu0 %v563
      %v2104 = vpop.f32.mrb[0].mxu0
      %v2105 = vadd.f32 %v1944, %v2104
      %v2106 = vpop.f32.mrb[0].mxu0
      %v2107 = vpop.f32.mrb[0].mxu0
      %v2108 = vadd.f32 %v1947, %v2107
      %v2109 = vpop.f32.mrb[0].mxu0
      %2110 = vmatprep.mubr.bf16.mxu0 %v899
      %2111 = vmatmul.mubr.bf16.gmra.mrb[0].mxu0 %v564
      %v2112 = vpop.f32.mrb[0].mxu0
      %v2113 = vadd.f32 %v1952, %v2112
      %v2114 = vpop.f32.mrb[0].mxu0
      %v2115 = vpop.f32.mrb[0].mxu0
      %v2116 = vadd.f32 %v1955, %v2115
      %v2117 = vpop.f32.mrb[0].mxu0
      %2118 = vmatprep.mubr.bf16.mxu0 %v594
      %2119 = vmatmul.mubr.bf16.gmra.mrb[0].mxu0 %v548
      %v2120 = vpop.f32.mrb[0].mxu0
      %v2121 = vadd.f32 %v1960, %v2120
      %v2122 = vpop.f32.mrb[0].mxu0
      %v2123 = vpop.f32.mrb[0].mxu0
      %v2124 = vadd.f32 %v1963, %v2123
      %v2125 = vpop.f32.mrb[0].mxu0
      %2126 = vdwg.mxu0
      %2127 = vmatprep.subr.bf16.mxu0 0
      %2128 = vmatpush1.bf16.msra.mxu0 %v1403
      %2129 = vmatprep.subr.bf16.mxu0 0
      %2130 = vmatpush1.bf16.msra.mxu0 %v1404
      %2131 = vmatprep.subr.bf16.mxu0 0
      %2132 = vmatpush1.bf16.msra.mxu0 %v1405
      %2133 = vmatprep.subr.bf16.mxu0 0
      %2134 = vmatpush1.bf16.msra.mxu0 %v1406
      %2135 = vmatprep.subr.bf16.mxu0 0
      %2136 = vmatpush1.bf16.msra.mxu0 %v1407
      %2137 = vmatprep.subr.bf16.mxu0 0
      %2138 = vmatpush1.bf16.msra.mxu0 %v1408
      %2139 = vmatprep.subr.bf16.mxu0 0
      %2140 = vmatpush1.bf16.msra.mxu0 %v1409
      %2141 = vmatprep.subr.bf16.mxu0 0
      %2142 = vmatpush1.bf16.msra.mxu0 %v1410
      %2143 = vmatprep.subr.bf16.mxu0 0
      %2144 = vmatpush1.bf16.msra.mxu0 0
      %2145 = vmatprep.subr.bf16.mxu0 0
      %2146 = vmatpush1.bf16.msra.mxu0 0
      %2147 = vmatprep.subr.bf16.mxu0 0
      %2148 = vmatpush1.bf16.msra.mxu0 0
      %2149 = vmatprep.subr.bf16.mxu0 0
      %2150 = vmatpush1.bf16.msra.mxu0 0
      %2151 = vmatprep.subr.bf16.mxu0 0
      %2152 = vmatpush1.bf16.msra.mxu0 0
      %2153 = vmatprep.subr.bf16.mxu0 0
      %2154 = vmatpush1.bf16.msra.mxu0 0
      %2155 = vmatprep.subr.bf16.mxu0 0
      %2156 = vmatpush1.bf16.msra.mxu0 0
      %2157 = vmatprep.subr.bf16.mxu0 0
      %2158 = vmatpush1.bf16.msra.mxu0 0
      %2159 = vmatprep.mubr.bf16.mxu0 0
      %2160 = vmatmul.mubr.bf16.gmra.mrb[0].mxu0 %v832
      %v2161 = vpop.f32.mrb[0].mxu0
      %v2162 = vadd.f32 %v2001, %v2161
      %v2163 = vpop.f32.mrb[0].mxu0
      %v2164 = vpop.f32.mrb[0].mxu0
      %v2165 = vadd.f32 %v2004, %v2164
      %v2166 = vpop.f32.mrb[0].mxu0
      %2167 = vmatprep.mubr.bf16.mxu0 0
      %2168 = vmatmul.mubr.bf16.gmra.mrb[0].mxu0 %v835
      %v2169 = vpop.f32.mrb[0].mxu0
      %v2170 = vadd.f32 %v2009, %v2169
      %v2171 = vpop.f32.mrb[0].mxu0
      %v2172 = vpop.f32.mrb[0].mxu0
      %v2173 = vadd.f32 %v2012, %v2172
      %v2174 = vpop.f32.mrb[0].mxu0
      %2175 = vmatprep.mubr.bf16.mxu0 0
      %2176 = vmatmul.mubr.bf16.gmra.mrb[0].mxu0 %v838
      %v2177 = vpop.f32.mrb[0].mxu0
      %v2178 = vadd.f32 %v2017, %v2177
      %v2179 = vpop.f32.mrb[0].mxu0
      %v2180 = vpop.f32.mrb[0].mxu0
      %v2181 = vadd.f32 %v2020, %v2180
      %v2182 = vpop.f32.mrb[0].mxu0
      %2183 = vmatprep.mubr.bf16.mxu0 0
      %2184 = vmatmul.mubr.bf16.gmra.mrb[0].mxu0 %v841
      %v2185 = vpop.f32.mrb[0].mxu0
      %v2186 = vadd.f32 %v2025, %v2185
      %v2187 = vpop.f32.mrb[0].mxu0
      %v2188 = vpop.f32.mrb[0].mxu0
      %v2189 = vadd.f32 %v2028, %v2188
      %v2190 = vpop.f32.mrb[0].mxu0
      %2191 = vmatprep.mubr.bf16.mxu0 0
      %2192 = vmatmul.mubr.bf16.gmra.mrb[0].mxu0 %v844
      %v2193 = vpop.f32.mrb[0].mxu0
      %v2194 = vadd.f32 %v2033, %v2193
      %v2195 = vpop.f32.mrb[0].mxu0
      %v2196 = vpop.f32.mrb[0].mxu0
      %v2197 = vadd.f32 %v2036, %v2196
      %v2198 = vpop.f32.mrb[0].mxu0
      %2199 = vmatprep.mubr.bf16.mxu0 0
      %2200 = vmatmul.mubr.bf16.gmra.mrb[0].mxu0 %v847
      %v2201 = vpop.f32.mrb[0].mxu0
      %v2202 = vadd.f32 %v2041, %v2201
      %v2203 = vpop.f32.mrb[0].mxu0
      %v2204 = vpop.f32.mrb[0].mxu0
      %v2205 = vadd.f32 %v2044, %v2204
      %v2206 = vpop.f32.mrb[0].mxu0
      %2207 = vmatprep.mubr.bf16.mxu0 0
      %2208 = vmatmul.mubr.bf16.gmra.mrb[0].mxu0 %v850
      %v2209 = vpop.f32.mrb[0].mxu0
      %v2210 = vadd.f32 %v2049, %v2209
      %v2211 = vpop.f32.mrb[0].mxu0
      %v2212 = vpop.f32.mrb[0].mxu0
      %v2213 = vadd.f32 %v2052, %v2212
      %v2214 = vpop.f32.mrb[0].mxu0
      %2215 = vmatprep.mubr.bf16.mxu0 0
      %2216 = vmatmul.mubr.bf16.gmra.mrb[0].mxu0 %v853
      %v2217 = vpop.f32.mrb[0].mxu0
      %v2218 = vadd.f32 %v2057, %v2217
      %v2219 = vpop.f32.mrb[0].mxu0
      %v2220 = vpop.f32.mrb[0].mxu0
      %v2221 = vadd.f32 %v2060, %v2220
      %v2222 = vpop.f32.mrb[0].mxu0
      %2223 = vmatprep.mubr.bf16.mxu0 0
      %2224 = vmatmul.mubr.bf16.gmra.mrb[0].mxu0 %v856
      %v2225 = vpop.f32.mrb[0].mxu0
      %v2226 = vadd.f32 %v2065, %v2225
      %v2227 = vpop.f32.mrb[0].mxu0
      %v2228 = vpop.f32.mrb[0].mxu0
      %v2229 = vadd.f32 %v2068, %v2228
      %v2230 = vpop.f32.mrb[0].mxu0
      %2231 = vmatprep.mubr.bf16.mxu0 0
      %2232 = vmatmul.mubr.bf16.gmra.mrb[0].mxu0 %v859
      %v2233 = vpop.f32.mrb[0].mxu0
      %v2234 = vadd.f32 %v2073, %v2233
      %v2235 = vpop.f32.mrb[0].mxu0
      %v2236 = vpop.f32.mrb[0].mxu0
      %v2237 = vadd.f32 %v2076, %v2236
      %v2238 = vpop.f32.mrb[0].mxu0
      %2239 = vmatprep.mubr.bf16.mxu0 0
      %2240 = vmatmul.mubr.bf16.gmra.mrb[0].mxu0 %v862
      %v2241 = vpop.f32.mrb[0].mxu0
      %v2242 = vadd.f32 %v2081, %v2241
      %v2243 = vpop.f32.mrb[0].mxu0
      %v2244 = vpop.f32.mrb[0].mxu0
      %v2245 = vadd.f32 %v2084, %v2244
      %v2246 = vpop.f32.mrb[0].mxu0
      %2247 = vmatprep.mubr.bf16.mxu0 0
      %2248 = vmatmul.mubr.bf16.gmra.mrb[0].mxu0 %v865
      %v2249 = vpop.f32.mrb[0].mxu0
      %v2250 = vadd.f32 %v2089, %v2249
      %v2251 = vpop.f32.mrb[0].mxu0
      %v2252 = vpop.f32.mrb[0].mxu0
      %v2253 = vadd.f32 %v2092, %v2252
      %v2254 = vpop.f32.mrb[0].mxu0
      %2255 = vmatprep.mubr.bf16.mxu0 0
      %2256 = vmatmul.mubr.bf16.gmra.mrb[0].mxu0 %v868
      %v2257 = vpop.f32.mrb[0].mxu0
      %v2258 = vadd.f32 %v2097, %v2257
      %v2259 = vpop.f32.mrb[0].mxu0
      %v2260 = vpop.f32.mrb[0].mxu0
      %v2261 = vadd.f32 %v2100, %v2260
      %v2262 = vpop.f32.mrb[0].mxu0
      %2263 = vmatprep.mubr.bf16.mxu0 0
      %2264 = vmatmul.mubr.bf16.gmra.mrb[0].mxu0 %v871
      %v2265 = vpop.f32.mrb[0].mxu0
      %v2266 = vadd.f32 %v2105, %v2265
      %v2267 = vpop.f32.mrb[0].mxu0
      %v2268 = vpop.f32.mrb[0].mxu0
      %v2269 = vadd.f32 %v2108, %v2268
      %v2270 = vpop.f32.mrb[0].mxu0
      %2271 = vmatprep.mubr.bf16.mxu0 0
      %2272 = vmatmul.mubr.bf16.gmra.mrb[0].mxu0 %v905
      %v2273 = vpop.f32.mrb[0].mxu0
      %v2274 = vadd.f32 %v2113, %v2273
      %v2275 = vpop.f32.mrb[0].mxu0
      %v2276 = vpop.f32.mrb[0].mxu0
      %v2277 = vadd.f32 %v2116, %v2276
      %v2278 = vpop.f32.mrb[0].mxu0
      %2279 = vmatprep.mubr.bf16.mxu0 0
      %2280 = vmatmul.mubr.bf16.gmra.mrb[0].mxu0 %v826
      %v2281 = vpop.f32.mrb[0].mxu0
      %v2282 = vadd.f32 %v2121, %v2281
      %v2283 = vpop.f32.mrb[0].mxu0
      %v2284 = vpop.f32.mrb[0].mxu0
      %v2285 = vadd.f32 %v2124, %v2284
      %v2286 = vpop.f32.mrb[0].mxu0
      %2287 = vdwg.mxu0
      %v2288 = vld [vmem:[%s3] sm:$0x1]
      %v2290 = vlaneseq
      %v2291 = vshrl.u32 %v2290, 7
      %v2292 = vsub.s32 0, %v2291
      %v2293 = vrot.slane %v2288, %v2292
      %v2295 = vmul.f32 %v2162, %v2293
      %v2296 = vmul.f32 %v2165, %v2293
      %v2297 = vmul.f32 %v2170, %v2293
      %v2298 = vmul.f32 %v2173, %v2293
      %v2299 = vmul.f32 %v2178, %v2293
      %v2300 = vmul.f32 %v2181, %v2293
      %v2301 = vmul.f32 %v2186, %v2293
      %v2302 = vmul.f32 %v2189, %v2293
      %v2303 = vmul.f32 %v2194, %v2293
      %v2304 = vmul.f32 %v2197, %v2293
      %v2305 = vmul.f32 %v2202, %v2293
      %v2306 = vmul.f32 %v2205, %v2293
      %v2307 = vmul.f32 %v2210, %v2293
      %v2308 = vmul.f32 %v2213, %v2293
      %v2309 = vmul.f32 %v2218, %v2293
      %v2310 = vmul.f32 %v2221, %v2293
      %v2311 = vmul.f32 %v2226, %v2293
      %v2312 = vmul.f32 %v2229, %v2293
      %v2313 = vmul.f32 %v2234, %v2293
      %v2314 = vmul.f32 %v2237, %v2293
      %v2315 = vmul.f32 %v2242, %v2293
      %v2316 = vmul.f32 %v2245, %v2293
      %v2317 = vmul.f32 %v2250, %v2293
      %v2318 = vmul.f32 %v2253, %v2293
      %v2319 = vmul.f32 %v2258, %v2293
      %v2320 = vmul.f32 %v2261, %v2293
      %v2321 = vmul.f32 %v2266, %v2293
      %v2322 = vmul.f32 %v2269, %v2293
      %v2323 = vmul.f32 %v2274, %v2293
      %v2324 = vmul.f32 %v2277, %v2293
      %v2325 = vmul.f32 %v2282, %v2293
      %v2326 = vmul.f32 %v2285, %v2293
      %v2327 = vld [vmem:[%s4] sm:$0x1]
      %v2329 = vlaneseq
      %v2330 = vshrl.u32 %v2329, 7
      %v2331 = vsub.s32 0, %v2330
      %v2332 = vrot.slane %v2327, %v2331
      %v2334 = vadd.f32 %v2295, %v2332
      %v2335 = vadd.f32 %v2296, %v2332
      %v2336 = vadd.f32 %v2297, %v2332
      %v2337 = vadd.f32 %v2298, %v2332
      %v2338 = vadd.f32 %v2299, %v2332
      %v2339 = vadd.f32 %v2300, %v2332
      %v2340 = vadd.f32 %v2301, %v2332
      %v2341 = vadd.f32 %v2302, %v2332
      %v2342 = vadd.f32 %v2303, %v2332
      %v2343 = vadd.f32 %v2304, %v2332
      %v2344 = vadd.f32 %v2305, %v2332
      %v2345 = vadd.f32 %v2306, %v2332
      %v2346 = vadd.f32 %v2307, %v2332
      %v2347 = vadd.f32 %v2308, %v2332
      %v2348 = vadd.f32 %v2309, %v2332
      %v2349 = vadd.f32 %v2310, %v2332
      %v2350 = vadd.f32 %v2311, %v2332
      %v2351 = vadd.f32 %v2312, %v2332
      %v2352 = vadd.f32 %v2313, %v2332
      %v2353 = vadd.f32 %v2314, %v2332
      %v2354 = vadd.f32 %v2315, %v2332
      %v2355 = vadd.f32 %v2316, %v2332
      %v2356 = vadd.f32 %v2317, %v2332
      %v2357 = vadd.f32 %v2318, %v2332
      %v2358 = vadd.f32 %v2319, %v2332
      %v2359 = vadd.f32 %v2320, %v2332
      %v2360 = vadd.f32 %v2321, %v2332
      %v2361 = vadd.f32 %v2322, %v2332
      %v2362 = vadd.f32 %v2323, %v2332
      %v2363 = vadd.f32 %v2324, %v2332
      %v2364 = vadd.f32 %v2325, %v2332
      %v2365 = vadd.f32 %v2326, %v2332
      %v2366 = vmax.f32 %v2334, 0.0
      %v2367 = vmax.f32 %v2335, 0.0
      %v2368 = vmax.f32 %v2336, 0.0
      %v2369 = vmax.f32 %v2337, 0.0
      %v2370 = vmax.f32 %v2338, 0.0
      %v2371 = vmax.f32 %v2339, 0.0
      %v2372 = vmax.f32 %v2340, 0.0
      %v2373 = vmax.f32 %v2341, 0.0
      %v2374 = vmax.f32 %v2342, 0.0
      %v2375 = vmax.f32 %v2343, 0.0
      %v2376 = vmax.f32 %v2344, 0.0
      %v2377 = vmax.f32 %v2345, 0.0
      %v2378 = vmax.f32 %v2346, 0.0
      %v2379 = vmax.f32 %v2347, 0.0
      %v2380 = vmax.f32 %v2348, 0.0
      %v2381 = vmax.f32 %v2349, 0.0
      %v2382 = vmax.f32 %v2350, 0.0
      %v2383 = vmax.f32 %v2351, 0.0
      %v2384 = vmax.f32 %v2352, 0.0
      %v2385 = vmax.f32 %v2353, 0.0
      %v2386 = vmax.f32 %v2354, 0.0
      %v2387 = vmax.f32 %v2355, 0.0
      %v2388 = vmax.f32 %v2356, 0.0
      %v2389 = vmax.f32 %v2357, 0.0
      %v2390 = vmax.f32 %v2358, 0.0
      %v2391 = vmax.f32 %v2359, 0.0
      %v2392 = vmax.f32 %v2360, 0.0
      %v2393 = vmax.f32 %v2361, 0.0
      %v2394 = vmax.f32 %v2362, 0.0
      %v2395 = vmax.f32 %v2363, 0.0
      %v2396 = vmax.f32 %v2364, 0.0
      %v2397 = vmax.f32 %v2365, 0.0
      %v2398 = vpack.c.bf16 %v2367, %v2366
      %v2399 = vpack.c.bf16 %v2369, %v2368
      %v2400 = vpack.c.bf16 %v2371, %v2370
      %v2401 = vpack.c.bf16 %v2373, %v2372
      %v2402 = vpack.c.bf16 %v2375, %v2374
      %v2403 = vpack.c.bf16 %v2377, %v2376
      %v2404 = vpack.c.bf16 %v2379, %v2378
      %v2405 = vpack.c.bf16 %v2381, %v2380
      %v2406 = vpack.c.bf16 %v2383, %v2382
      %v2407 = vpack.c.bf16 %v2385, %v2384
      %v2408 = vpack.c.bf16 %v2387, %v2386
      %v2409 = vpack.c.bf16 %v2389, %v2388
      %v2410 = vpack.c.bf16 %v2391, %v2390
      %v2411 = vpack.c.bf16 %v2393, %v2392
      %v2412 = vpack.c.bf16 %v2395, %v2394
      %v2413 = vpack.c.bf16 %v2397, %v2396
      %v2415 = vshrl.u32 %v2398, 16
      %v2417 = vrot.slane %v2415, 7
      %v2418 = vshll.u32 %v2398, 16
      %v2420 = vor.u32 %v2417, %v2418
      %v2422 = vshrl.u32 %v2399, 16
      %v2424 = vrot.slane %v2422, 7
      %v2425 = vshll.u32 %v2399, 16
      %v2427 = vor.u32 %v2424, %v2425
      %v2429 = vshrl.u32 %v2400, 16
      %v2431 = vrot.slane %v2429, 7
      %v2432 = vshll.u32 %v2400, 16
      %v2434 = vor.u32 %v2431, %v2432
      %v2436 = vshrl.u32 %v2401, 16
      %v2438 = vrot.slane %v2436, 7
      %v2439 = vshll.u32 %v2401, 16
      %v2441 = vor.u32 %v2438, %v2439
      %v2443 = vshrl.u32 %v2402, 16
      %v2445 = vrot.slane %v2443, 7
      %v2446 = vshll.u32 %v2402, 16
      %v2448 = vor.u32 %v2445, %v2446
      %v2450 = vshrl.u32 %v2403, 16
      %v2452 = vrot.slane %v2450, 7
      %v2453 = vshll.u32 %v2403, 16
      %v2455 = vor.u32 %v2452, %v2453
      %v2457 = vshrl.u32 %v2404, 16
      %v2459 = vrot.slane %v2457, 7
      %v2460 = vshll.u32 %v2404, 16
      %v2462 = vor.u32 %v2459, %v2460
      %v2464 = vshrl.u32 %v2405, 16
      %v2466 = vrot.slane %v2464, 7
      %v2467 = vshll.u32 %v2405, 16
      %v2469 = vor.u32 %v2466, %v2467
      %v2471 = vshrl.u32 %v2406, 16
      %v2473 = vrot.slane %v2471, 7
      %v2474 = vshll.u32 %v2406, 16
      %v2476 = vor.u32 %v2473, %v2474
      %v2478 = vshrl.u32 %v2407, 16
      %v2480 = vrot.slane %v2478, 7
      %v2481 = vshll.u32 %v2407, 16
      %v2483 = vor.u32 %v2480, %v2481
      %v2485 = vshrl.u32 %v2408, 16
      %v2487 = vrot.slane %v2485, 7
      %v2488 = vshll.u32 %v2408, 16
      %v2490 = vor.u32 %v2487, %v2488
      %v2492 = vshrl.u32 %v2409, 16
      %v2494 = vrot.slane %v2492, 7
      %v2495 = vshll.u32 %v2409, 16
      %v2497 = vor.u32 %v2494, %v2495
      %v2499 = vshrl.u32 %v2410, 16
      %v2501 = vrot.slane %v2499, 7
      %v2502 = vshll.u32 %v2410, 16
      %v2504 = vor.u32 %v2501, %v2502
      %v2506 = vshrl.u32 %v2411, 16
      %v2508 = vrot.slane %v2506, 7
      %v2509 = vshll.u32 %v2411, 16
      %v2511 = vor.u32 %v2508, %v2509
      %v2513 = vshrl.u32 %v2412, 16
      %v2515 = vrot.slane %v2513, 7
      %v2516 = vshll.u32 %v2412, 16
      %v2518 = vor.u32 %v2515, %v2516
      %v2520 = vshrl.u32 %v2413, 16
      %v2522 = vrot.slane %v2520, 7
      %v2523 = vshll.u32 %v2413, 16
      %v2525 = vor.u32 %v2522, %v2523
      %v2558 = vsel %vm547, 0, %v2420
      %v2559 = vsel %vm547, 0, %v2427
      %v2560 = vsel %vm547, 0, %v2434
      %v2561 = vsel %vm547, 0, %v2441
      %v2562 = vsel %vm547, 0, %v2448
      %v2563 = vsel %vm547, 0, %v2455
      %v2564 = vsel %vm547, 0, %v2462
      %v2565 = vsel %vm547, 0, %v2469
      %v2566 = vsel %vm547, 0, %v2476
      %v2567 = vsel %vm547, 0, %v2483
      %v2568 = vsel %vm547, 0, %v2490
      %v2569 = vsel %vm547, 0, %v2497
      %v2570 = vsel %vm547, 0, %v2504
      %v2571 = vsel %vm547, 0, %v2511
      %v2572 = vsel %vm547, 0, %v2518
      %v2573 = vsel %vm547, 0, %v2525
      %v2574 = vsel %vm547, %v2417, 0
      %v2575 = vsel %vm547, %v2424, 0
      %v2576 = vsel %vm547, %v2431, 0
      %v2577 = vsel %vm547, %v2438, 0
      %v2578 = vsel %vm547, %v2445, 0
      %v2579 = vsel %vm547, %v2452, 0
      %v2580 = vsel %vm547, %v2459, 0
      %v2581 = vsel %vm547, %v2466, 0
      %v2582 = vsel %vm547, %v2473, 0
      %v2583 = vsel %vm547, %v2480, 0
      %v2584 = vsel %vm547, %v2487, 0
      %v2585 = vsel %vm547, %v2494, 0
      %v2586 = vsel %vm547, %v2501, 0
      %v2587 = vsel %vm547, %v2508, 0
      %v2588 = vsel %vm547, %v2515, 0
      %v2589 = vsel %vm547, %v2522, 0
      %v2591 = vshrl.u32 %v2558, 16
      %v2593 = vshll.u32 %v2558, 16
      %v2595 = vrot.slane %v2593, 1
      %v2596 = vor.u32 %v2591, %v2595
      %v2598 = vshll.u32 %v2574, 16
      %v2600 = vrot.slane %v2598, 1
      %v2601 = vsel %vm582, %v2596, %v2600
      %v2603 = vshrl.u32 %v2559, 16
      %v2605 = vshll.u32 %v2559, 16
      %v2607 = vrot.slane %v2605, 1
      %v2608 = vor.u32 %v2603, %v2607
      %v2610 = vshll.u32 %v2575, 16
      %v2612 = vrot.slane %v2610, 1
      %v2613 = vsel %vm582, %v2608, %v2612
      %v2615 = vshrl.u32 %v2560, 16
      %v2617 = vshll.u32 %v2560, 16
      %v2619 = vrot.slane %v2617, 1
      %v2620 = vor.u32 %v2615, %v2619
      %v2622 = vshll.u32 %v2576, 16
      %v2624 = vrot.slane %v2622, 1
      %v2625 = vsel %vm582, %v2620, %v2624
      %v2627 = vshrl.u32 %v2561, 16
      %v2629 = vshll.u32 %v2561, 16
      %v2631 = vrot.slane %v2629, 1
      %v2632 = vor.u32 %v2627, %v2631
      %v2634 = vshll.u32 %v2577, 16
      %v2636 = vrot.slane %v2634, 1
      %v2637 = vsel %vm582, %v2632, %v2636
      %v2639 = vshrl.u32 %v2562, 16
      %v2641 = vshll.u32 %v2562, 16
      %v2643 = vrot.slane %v2641, 1
      %v2644 = vor.u32 %v2639, %v2643
      %v2646 = vshll.u32 %v2578, 16
      %v2648 = vrot.slane %v2646, 1
      %v2649 = vsel %vm582, %v2644, %v2648
      %v2651 = vshrl.u32 %v2563, 16
      %v2653 = vshll.u32 %v2563, 16
      %v2655 = vrot.slane %v2653, 1
      %v2656 = vor.u32 %v2651, %v2655
      %v2658 = vshll.u32 %v2579, 16
      %v2660 = vrot.slane %v2658, 1
      %v2661 = vsel %vm582, %v2656, %v2660
      %v2663 = vshrl.u32 %v2564, 16
      %v2665 = vshll.u32 %v2564, 16
      %v2667 = vrot.slane %v2665, 1
      %v2668 = vor.u32 %v2663, %v2667
      %v2670 = vshll.u32 %v2580, 16
      %v2672 = vrot.slane %v2670, 1
      %v2673 = vsel %vm582, %v2668, %v2672
      %v2675 = vshrl.u32 %v2565, 16
      %v2677 = vshll.u32 %v2565, 16
      %v2679 = vrot.slane %v2677, 1
      %v2680 = vor.u32 %v2675, %v2679
      %v2682 = vshll.u32 %v2581, 16
      %v2684 = vrot.slane %v2682, 1
      %v2685 = vsel %vm582, %v2680, %v2684
      %v2687 = vshrl.u32 %v2566, 16
      %v2689 = vshll.u32 %v2566, 16
      %v2691 = vrot.slane %v2689, 1
      %v2692 = vor.u32 %v2687, %v2691
      %v2694 = vshll.u32 %v2582, 16
      %v2696 = vrot.slane %v2694, 1
      %v2697 = vsel %vm582, %v2692, %v2696
      %v2699 = vshrl.u32 %v2567, 16
      %v2701 = vshll.u32 %v2567, 16
      %v2703 = vrot.slane %v2701, 1
      %v2704 = vor.u32 %v2699, %v2703
      %v2706 = vshll.u32 %v2583, 16
      %v2708 = vrot.slane %v2706, 1
      %v2709 = vsel %vm582, %v2704, %v2708
      %v2711 = vshrl.u32 %v2568, 16
      %v2713 = vshll.u32 %v2568, 16
      %v2715 = vrot.slane %v2713, 1
      %v2716 = vor.u32 %v2711, %v2715
      %v2718 = vshll.u32 %v2584, 16
      %v2720 = vrot.slane %v2718, 1
      %v2721 = vsel %vm582, %v2716, %v2720
      %v2723 = vshrl.u32 %v2569, 16
      %v2725 = vshll.u32 %v2569, 16
      %v2727 = vrot.slane %v2725, 1
      %v2728 = vor.u32 %v2723, %v2727
      %v2730 = vshll.u32 %v2585, 16
      %v2732 = vrot.slane %v2730, 1
      %v2733 = vsel %vm582, %v2728, %v2732
      %v2735 = vshrl.u32 %v2570, 16
      %v2737 = vshll.u32 %v2570, 16
      %v2739 = vrot.slane %v2737, 1
      %v2740 = vor.u32 %v2735, %v2739
      %v2742 = vshll.u32 %v2586, 16
      %v2744 = vrot.slane %v2742, 1
      %v2745 = vsel %vm582, %v2740, %v2744
      %v2747 = vshrl.u32 %v2571, 16
      %v2749 = vshll.u32 %v2571, 16
      %v2751 = vrot.slane %v2749, 1
      %v2752 = vor.u32 %v2747, %v2751
      %v2754 = vshll.u32 %v2587, 16
      %v2756 = vrot.slane %v2754, 1
      %v2757 = vsel %vm582, %v2752, %v2756
      %v2759 = vshrl.u32 %v2572, 16
      %v2761 = vshll.u32 %v2572, 16
      %v2763 = vrot.slane %v2761, 1
      %v2764 = vor.u32 %v2759, %v2763
      %v2766 = vshll.u32 %v2588, 16
      %v2768 = vrot.slane %v2766, 1
      %v2769 = vsel %vm582, %v2764, %v2768
      %v2815 = vrot.slane %v2558, 1
      %v2816 = vrot.slane %v2574, 1
      %v2817 = vsel %vm823, %v2815, %v2816
      %v2818 = vrot.slane %v2559, 1
      %v2819 = vrot.slane %v2575, 1
      %v2820 = vsel %vm823, %v2818, %v2819
      %v2821 = vrot.slane %v2560, 1
      %v2822 = vrot.slane %v2576, 1
      %v2823 = vsel %vm823, %v2821, %v2822
      %v2824 = vrot.slane %v2561, 1
      %v2825 = vrot.slane %v2577, 1
      %v2826 = vsel %vm823, %v2824, %v2825
      %v2827 = vrot.slane %v2562, 1
      %v2828 = vrot.slane %v2578, 1
      %v2829 = vsel %vm823, %v2827, %v2828
      %v2830 = vrot.slane %v2563, 1
      %v2831 = vrot.slane %v2579, 1
      %v2832 = vsel %vm823, %v2830, %v2831
      %v2833 = vrot.slane %v2564, 1
      %v2834 = vrot.slane %v2580, 1
      %v2835 = vsel %vm823, %v2833, %v2834
      %v2836 = vrot.slane %v2565, 1
      %v2837 = vrot.slane %v2581, 1
      %v2838 = vsel %vm823, %v2836, %v2837
      %v2839 = vrot.slane %v2566, 1
      %v2840 = vrot.slane %v2582, 1
      %v2841 = vsel %vm823, %v2839, %v2840
      %v2842 = vrot.slane %v2567, 1
      %v2843 = vrot.slane %v2583, 1
      %v2844 = vsel %vm823, %v2842, %v2843
      %v2845 = vrot.slane %v2568, 1
      %v2846 = vrot.slane %v2584, 1
      %v2847 = vsel %vm823, %v2845, %v2846
      %v2848 = vrot.slane %v2569, 1
      %v2849 = vrot.slane %v2585, 1
      %v2850 = vsel %vm823, %v2848, %v2849
      %v2851 = vrot.slane %v2570, 1
      %v2852 = vrot.slane %v2586, 1
      %v2853 = vsel %vm823, %v2851, %v2852
      %v2854 = vrot.slane %v2571, 1
      %v2855 = vrot.slane %v2587, 1
      %v2856 = vsel %vm823, %v2854, %v2855
      %v2857 = vrot.slane %v2572, 1
      %v2858 = vrot.slane %v2588, 1
      %v2859 = vsel %vm823, %v2857, %v2858
      %v2876 = vshrl.u32 %v2573, 16
      %v2878 = vshll.u32 %v2573, 16
      %v2880 = vrot.slane %v2878, 1
      %v2881 = vor.u32 %v2876, %v2880
      %v2883 = vshll.u32 %v2589, 16
      %v2885 = vrot.slane %v2883, 1
      %v2886 = vsel %vm582, %v2881, %v2885
      %v2890 = vrot.slane %v2573, 1
      %v2891 = vrot.slane %v2589, 1
      %v2892 = vsel %vm823, %v2890, %v2891
      %v2894 = vld [vmem:[%s2] sm:$0xf]
      %v2895 = vld [vmem:[%s2 + $0x4] sm:$0xf]
      %v2896 = vld [vmem:[%s2 + $0x8] sm:$0xf]
      %v2897 = vld [vmem:[%s2 + $0xc] sm:$0xf]
      %v2898 = vld [vmem:[%s2 + $0x10] sm:$0xf]
      %v2899 = vld [vmem:[%s2 + $0x14] sm:$0xf]
      %v2900 = vld [vmem:[%s2 + $0x18] sm:$0xf]
      %v2901 = vld [vmem:[%s2 + $0x1c] sm:$0xf]
      %v2902 = vld [vmem:[%s2 + $0x20] sm:$0xf]
      %v2903 = vld [vmem:[%s2 + $0x24] sm:$0xf]
      %v2904 = vld [vmem:[%s2 + $0x28] sm:$0xf]
      %v2905 = vld [vmem:[%s2 + $0x2c] sm:$0xf]
      %v2906 = vld [vmem:[%s2 + $0x30] sm:$0xf]
      %v2907 = vld [vmem:[%s2 + $0x34] sm:$0xf]
      %v2908 = vld [vmem:[%s2 + $0x38] sm:$0xf]
      %v2909 = vld [vmem:[%s2 + $0x3c] sm:$0xf]
      %v2910 = vld [vmem:[%s2 + $0x40] sm:$0xf]
      %v2911 = vld [vmem:[%s2 + $0x44] sm:$0xf]
      %v2912 = vld [vmem:[%s2 + $0x48] sm:$0xf]
      %v2913 = vld [vmem:[%s2 + $0x4c] sm:$0xf]
      %v2914 = vld [vmem:[%s2 + $0x50] sm:$0xf]
      %v2915 = vld [vmem:[%s2 + $0x54] sm:$0xf]
      %v2916 = vld [vmem:[%s2 + $0x58] sm:$0xf]
      %v2917 = vld [vmem:[%s2 + $0x5c] sm:$0xf]
      %v2918 = vld [vmem:[%s2 + $0x60] sm:$0xf]
      %v2919 = vld [vmem:[%s2 + $0x64] sm:$0xf]
      %v2920 = vld [vmem:[%s2 + $0x68] sm:$0xf]
      %v2921 = vld [vmem:[%s2 + $0x6c] sm:$0xf]
      %v2922 = vld [vmem:[%s2 + $0x70] sm:$0xf]
      %v2923 = vld [vmem:[%s2 + $0x74] sm:$0xf]
      %v2924 = vld [vmem:[%s2 + $0x78] sm:$0xf]
      %v2925 = vld [vmem:[%s2 + $0x7c] sm:$0xf]
      %v2926 = vld [vmem:[%s2 + $0x80] sm:$0xf]
      %v2927 = vld [vmem:[%s2 + $0x84] sm:$0xf]
      %v2928 = vld [vmem:[%s2 + $0x88] sm:$0xf]
      %v2929 = vld [vmem:[%s2 + $0x8c] sm:$0xf]
      %v2930 = vld [vmem:[%s2 + $0x90] sm:$0xf]
      %v2931 = vld [vmem:[%s2 + $0x94] sm:$0xf]
      %v2932 = vld [vmem:[%s2 + $0x98] sm:$0xf]
      %v2933 = vld [vmem:[%s2 + $0x9c] sm:$0xf]
      %v2934 = vld [vmem:[%s2 + $0xa0] sm:$0xf]
      %v2935 = vld [vmem:[%s2 + $0xa4] sm:$0xf]
      %v2936 = vld [vmem:[%s2 + $0xa8] sm:$0xf]
      %v2937 = vld [vmem:[%s2 + $0xac] sm:$0xf]
      %v2938 = vld [vmem:[%s2 + $0xb0] sm:$0xf]
      %v2939 = vld [vmem:[%s2 + $0xb4] sm:$0xf]
      %v2940 = vld [vmem:[%s2 + $0xb8] sm:$0xf]
      %v2941 = vld [vmem:[%s2 + $0xbc] sm:$0xf]
      %v2942 = vld [vmem:[%s2 + $0xc0] sm:$0xf]
      %v2943 = vld [vmem:[%s2 + $0xc4] sm:$0xf]
      %v2944 = vld [vmem:[%s2 + $0xc8] sm:$0xf]
      %v2945 = vld [vmem:[%s2 + $0xcc] sm:$0xf]
      %v2946 = vld [vmem:[%s2 + $0xd0] sm:$0xf]
      %v2947 = vld [vmem:[%s2 + $0xd4] sm:$0xf]
      %v2948 = vld [vmem:[%s2 + $0xd8] sm:$0xf]
      %v2949 = vld [vmem:[%s2 + $0xdc] sm:$0xf]
      %v2950 = vld [vmem:[%s2 + $0xe0] sm:$0xf]
      %v2951 = vld [vmem:[%s2 + $0xe4] sm:$0xf]
      %v2952 = vld [vmem:[%s2 + $0xe8] sm:$0xf]
      %v2953 = vld [vmem:[%s2 + $0xec] sm:$0xf]
      %v2954 = vld [vmem:[%s2 + $0xf0] sm:$0xf]
      %v2955 = vld [vmem:[%s2 + $0xf4] sm:$0xf]
      %v2956 = vld [vmem:[%s2 + $0xf8] sm:$0xf]
      %v2957 = vld [vmem:[%s2 + $0xfc] sm:$0xf]
      %v2958 = vld [vmem:[%s2 + $0x100] sm:$0xf]
      %v2959 = vld [vmem:[%s2 + $0x104] sm:$0xf]
      %v2960 = vld [vmem:[%s2 + $0x108] sm:$0xf]
      %v2961 = vld [vmem:[%s2 + $0x10c] sm:$0xf]
      %v2962 = vld [vmem:[%s2 + $0x110] sm:$0xf]
      %v2963 = vld [vmem:[%s2 + $0x114] sm:$0xf]
      %v2964 = vld [vmem:[%s2 + $0x118] sm:$0xf]
      %v2965 = vld [vmem:[%s2 + $0x11c] sm:$0xf]
      %v2966 = vld [vmem:[%s2 + $0x120] sm:$0xf]
      %v2967 = vld [vmem:[%s2 + $0x124] sm:$0xf]
      %v2968 = vld [vmem:[%s2 + $0x128] sm:$0xf]
      %v2969 = vld [vmem:[%s2 + $0x12c] sm:$0xf]
      %v2970 = vld [vmem:[%s2 + $0x130] sm:$0xf]
      %v2971 = vld [vmem:[%s2 + $0x134] sm:$0xf]
      %v2972 = vld [vmem:[%s2 + $0x138] sm:$0xf]
      %v2973 = vld [vmem:[%s2 + $0x13c] sm:$0xf]
      %v2974 = vld [vmem:[%s2 + $0x140] sm:$0xf]
      %v2975 = vld [vmem:[%s2 + $0x144] sm:$0xf]
      %v2976 = vld [vmem:[%s2 + $0x148] sm:$0xf]
      %v2977 = vld [vmem:[%s2 + $0x14c] sm:$0xf]
      %v2978 = vld [vmem:[%s2 + $0x150] sm:$0xf]
      %v2979 = vld [vmem:[%s2 + $0x154] sm:$0xf]
      %v2980 = vld [vmem:[%s2 + $0x158] sm:$0xf]
      %v2981 = vld [vmem:[%s2 + $0x15c] sm:$0xf]
      %v2982 = vld [vmem:[%s2 + $0x160] sm:$0xf]
      %v2983 = vld [vmem:[%s2 + $0x164] sm:$0xf]
      %v2984 = vld [vmem:[%s2 + $0x168] sm:$0xf]
      %v2985 = vld [vmem:[%s2 + $0x16c] sm:$0xf]
      %v2986 = vld [vmem:[%s2 + $0x170] sm:$0xf]
      %v2987 = vld [vmem:[%s2 + $0x174] sm:$0xf]
      %v2988 = vld [vmem:[%s2 + $0x178] sm:$0xf]
      %v2989 = vld [vmem:[%s2 + $0x17c] sm:$0xf]
      %v2990 = vld [vmem:[%s2 + $0x180] sm:$0xf]
      %v2991 = vld [vmem:[%s2 + $0x184] sm:$0xf]
      %v2992 = vld [vmem:[%s2 + $0x188] sm:$0xf]
      %v2993 = vld [vmem:[%s2 + $0x18c] sm:$0xf]
      %v2994 = vld [vmem:[%s2 + $0x190] sm:$0xf]
      %v2995 = vld [vmem:[%s2 + $0x194] sm:$0xf]
      %v2996 = vld [vmem:[%s2 + $0x198] sm:$0xf]
      %v2997 = vld [vmem:[%s2 + $0x19c] sm:$0xf]
      %v2998 = vld [vmem:[%s2 + $0x1a0] sm:$0xf]
      %v2999 = vld [vmem:[%s2 + $0x1a4] sm:$0xf]
      %v3000 = vld [vmem:[%s2 + $0x1a8] sm:$0xf]
      %v3001 = vld [vmem:[%s2 + $0x1ac] sm:$0xf]
      %v3002 = vld [vmem:[%s2 + $0x1b0] sm:$0xf]
      %v3003 = vld [vmem:[%s2 + $0x1b4] sm:$0xf]
      %v3004 = vld [vmem:[%s2 + $0x1b8] sm:$0xf]
      %v3005 = vld [vmem:[%s2 + $0x1bc] sm:$0xf]
      %v3006 = vld [vmem:[%s2 + $0x1c0] sm:$0xf]
      %v3007 = vld [vmem:[%s2 + $0x1c4] sm:$0xf]
      %v3008 = vld [vmem:[%s2 + $0x1c8] sm:$0xf]
      %v3009 = vld [vmem:[%s2 + $0x1cc] sm:$0xf]
      %v3010 = vld [vmem:[%s2 + $0x1d0] sm:$0xf]
      %v3011 = vld [vmem:[%s2 + $0x1d4] sm:$0xf]
      %v3012 = vld [vmem:[%s2 + $0x1d8] sm:$0xf]
      %v3013 = vld [vmem:[%s2 + $0x1dc] sm:$0xf]
      %v3014 = vld [vmem:[%s2 + $0x1e0] sm:$0xf]
      %v3015 = vld [vmem:[%s2 + $0x1e4] sm:$0xf]
      %v3016 = vld [vmem:[%s2 + $0x1e8] sm:$0xf]
      %v3017 = vld [vmem:[%s2 + $0x1ec] sm:$0xf]
      %v3018 = vld [vmem:[%s2 + $0x1f0] sm:$0xf]
      %v3019 = vld [vmem:[%s2 + $0x1f4] sm:$0xf]
      %v3020 = vld [vmem:[%s2 + $0x1f8] sm:$0xf]
      %v3021 = vld [vmem:[%s2 + $0x1fc] sm:$0xf]
      %v3022 = vld [vmem:[%s2 + $0x200] sm:$0xf]
      %v3023 = vld [vmem:[%s2 + $0x204] sm:$0xf]
      %v3024 = vld [vmem:[%s2 + $0x208] sm:$0xf]
      %v3025 = vld [vmem:[%s2 + $0x20c] sm:$0xf]
      %v3026 = vld [vmem:[%s2 + $0x210] sm:$0xf]
      %v3027 = vld [vmem:[%s2 + $0x214] sm:$0xf]
      %v3028 = vld [vmem:[%s2 + $0x218] sm:$0xf]
      %v3029 = vld [vmem:[%s2 + $0x21c] sm:$0xf]
      %v3030 = vld [vmem:[%s2 + $0x220] sm:$0xf]
      %v3031 = vld [vmem:[%s2 + $0x224] sm:$0xf]
      %v3032 = vld [vmem:[%s2 + $0x228] sm:$0xf]
      %v3033 = vld [vmem:[%s2 + $0x22c] sm:$0xf]
      %v3034 = vld [vmem:[%s2 + $0x230] sm:$0xf]
      %v3035 = vld [vmem:[%s2 + $0x234] sm:$0xf]
      %v3036 = vld [vmem:[%s2 + $0x238] sm:$0xf]
      %v3037 = vld [vmem:[%s2 + $0x23c] sm:$0xf]
      %v3182 = vunpack.c.l.b16 %v2894
      %v3183 = vunpack.c.l.b16 %v2895
      %v3184 = vunpack.c.l.b16 %v2896
      %v3185 = vunpack.c.l.b16 %v2897
      %v3186 = vunpack.c.l.b16 %v2898
      %v3187 = vunpack.c.l.b16 %v2899
      %v3188 = vunpack.c.l.b16 %v2900
      %v3189 = vunpack.c.l.b16 %v2901
      %v3190 = vunpack.c.l.b16 %v2902
      %v3191 = vunpack.c.l.b16 %v2903
      %v3192 = vunpack.c.l.b16 %v2904
      %v3193 = vunpack.c.l.b16 %v2905
      %v3194 = vunpack.c.l.b16 %v2906
      %v3195 = vunpack.c.l.b16 %v2907
      %v3196 = vunpack.c.l.b16 %v2908
      %v3197 = vunpack.c.l.b16 %v2909
      %v3198 = vunpack.c.l.b16 %v2910
      %v3199 = vunpack.c.l.b16 %v2911
      %v3200 = vunpack.c.l.b16 %v2912
      %v3201 = vunpack.c.l.b16 %v2913
      %v3202 = vunpack.c.l.b16 %v2914
      %v3203 = vunpack.c.l.b16 %v2915
      %v3204 = vunpack.c.l.b16 %v2916
      %v3205 = vunpack.c.l.b16 %v2917
      %v3206 = vunpack.c.l.b16 %v2918
      %v3207 = vunpack.c.l.b16 %v2919
      %v3208 = vunpack.c.l.b16 %v2920
      %v3209 = vunpack.c.l.b16 %v2921
      %v3210 = vunpack.c.l.b16 %v2922
      %v3211 = vunpack.c.l.b16 %v2923
      %v3212 = vunpack.c.l.b16 %v2924
      %v3213 = vunpack.c.l.b16 %v2925
      %v3214 = vunpack.c.l.b16 %v2926
      %v3215 = vunpack.c.l.b16 %v2927
      %v3216 = vunpack.c.l.b16 %v2928
      %v3217 = vunpack.c.l.b16 %v2929
      %v3218 = vunpack.c.l.b16 %v2930
      %v3219 = vunpack.c.l.b16 %v2931
      %v3220 = vunpack.c.l.b16 %v2932
      %v3221 = vunpack.c.l.b16 %v2933
      %v3222 = vunpack.c.l.b16 %v2934
      %v3223 = vunpack.c.l.b16 %v2935
      %v3224 = vunpack.c.l.b16 %v2936
      %v3225 = vunpack.c.l.b16 %v2937
      %v3226 = vunpack.c.l.b16 %v2938
      %v3227 = vunpack.c.l.b16 %v2939
      %v3228 = vunpack.c.l.b16 %v2940
      %v3229 = vunpack.c.l.b16 %v2941
      %v3230 = vunpack.c.l.b16 %v2942
      %v3231 = vunpack.c.l.b16 %v2943
      %v3232 = vunpack.c.l.b16 %v2944
      %v3233 = vunpack.c.l.b16 %v2945
      %v3234 = vunpack.c.l.b16 %v2946
      %v3235 = vunpack.c.l.b16 %v2947
      %v3236 = vunpack.c.l.b16 %v2948
      %v3237 = vunpack.c.l.b16 %v2949
      %v3238 = vunpack.c.l.b16 %v2950
      %v3239 = vunpack.c.l.b16 %v2951
      %v3240 = vunpack.c.l.b16 %v2952
      %v3241 = vunpack.c.l.b16 %v2953
      %v3242 = vunpack.c.l.b16 %v2954
      %v3243 = vunpack.c.l.b16 %v2955
      %v3244 = vunpack.c.l.b16 %v2956
      %v3245 = vunpack.c.l.b16 %v2957
      %v3246 = vunpack.c.l.b16 %v2958
      %v3247 = vunpack.c.l.b16 %v2959
      %v3248 = vunpack.c.l.b16 %v2960
      %v3249 = vunpack.c.l.b16 %v2961
      %v3250 = vunpack.c.l.b16 %v2962
      %v3251 = vunpack.c.l.b16 %v2963
      %v3252 = vunpack.c.l.b16 %v2964
      %v3253 = vunpack.c.l.b16 %v2965
      %v3254 = vunpack.c.l.b16 %v2966
      %v3255 = vunpack.c.l.b16 %v2967
      %v3256 = vunpack.c.l.b16 %v2968
      %v3257 = vunpack.c.l.b16 %v2969
      %v3258 = vunpack.c.l.b16 %v2970
      %v3259 = vunpack.c.l.b16 %v2971
      %v3260 = vunpack.c.l.b16 %v2972
      %v3261 = vunpack.c.l.b16 %v2973
      %v3262 = vunpack.c.l.b16 %v2974
      %v3263 = vunpack.c.l.b16 %v2975
      %v3264 = vunpack.c.l.b16 %v2976
      %v3265 = vunpack.c.l.b16 %v2977
      %v3266 = vunpack.c.l.b16 %v2978
      %v3267 = vunpack.c.l.b16 %v2979
      %v3268 = vunpack.c.l.b16 %v2980
      %v3269 = vunpack.c.l.b16 %v2981
      %v3270 = vunpack.c.l.b16 %v2982
      %v3271 = vunpack.c.l.b16 %v2983
      %v3272 = vunpack.c.l.b16 %v2984
      %v3273 = vunpack.c.l.b16 %v2985
      %v3274 = vunpack.c.l.b16 %v2986
      %v3275 = vunpack.c.l.b16 %v2987
      %v3276 = vunpack.c.l.b16 %v2988
      %v3277 = vunpack.c.l.b16 %v2989
      %v3278 = vunpack.c.l.b16 %v2990
      %v3279 = vunpack.c.l.b16 %v2991
      %v3280 = vunpack.c.l.b16 %v2992
      %v3281 = vunpack.c.l.b16 %v2993
      %v3282 = vunpack.c.l.b16 %v2994
      %v3283 = vunpack.c.l.b16 %v2995
      %v3284 = vunpack.c.l.b16 %v2996
      %v3285 = vunpack.c.l.b16 %v2997
      %v3286 = vunpack.c.l.b16 %v2998
      %v3287 = vunpack.c.l.b16 %v2999
      %v3288 = vunpack.c.l.b16 %v3000
      %v3289 = vunpack.c.l.b16 %v3001
      %v3290 = vunpack.c.l.b16 %v3002
      %v3291 = vunpack.c.l.b16 %v3003
      %v3292 = vunpack.c.l.b16 %v3004
      %v3293 = vunpack.c.l.b16 %v3005
      %v3294 = vunpack.c.l.b16 %v3006
      %v3295 = vunpack.c.l.b16 %v3007
      %v3296 = vunpack.c.l.b16 %v3008
      %v3297 = vunpack.c.l.b16 %v3009
      %v3298 = vunpack.c.l.b16 %v3010
      %v3299 = vunpack.c.l.b16 %v3011
      %v3300 = vunpack.c.l.b16 %v3012
      %v3301 = vunpack.c.l.b16 %v3013
      %v3302 = vunpack.c.l.b16 %v3014
      %v3303 = vunpack.c.l.b16 %v3015
      %v3304 = vunpack.c.l.b16 %v3016
      %v3305 = vunpack.c.l.b16 %v3017
      %v3306 = vunpack.c.l.b16 %v3018
      %v3307 = vunpack.c.l.b16 %v3019
      %v3308 = vunpack.c.l.b16 %v3020
      %v3309 = vunpack.c.l.b16 %v3021
      %v3310 = vunpack.c.l.b16 %v3022
      %v3311 = vunpack.c.l.b16 %v3023
      %v3312 = vunpack.c.l.b16 %v3024
      %v3313 = vunpack.c.l.b16 %v3025
      %v3314 = vunpack.c.l.b16 %v3026
      %v3315 = vunpack.c.l.b16 %v3027
      %v3316 = vunpack.c.l.b16 %v3028
      %v3317 = vunpack.c.l.b16 %v3029
      %v3318 = vunpack.c.l.b16 %v3030
      %v3319 = vunpack.c.l.b16 %v3031
      %v3320 = vunpack.c.l.b16 %v3032
      %v3321 = vunpack.c.l.b16 %v3033
      %v3322 = vunpack.c.l.b16 %v3034
      %v3323 = vunpack.c.l.b16 %v3035
      %v3324 = vunpack.c.l.b16 %v3036
      %v3325 = vunpack.c.l.b16 %v3037
      %v3326 = vpack.c.b16 %v3183, %v3182
      %v3327 = vpack.c.b16 %v3185, %v3184
      %v3328 = vpack.c.b16 %v3187, %v3186
      %v3329 = vpack.c.b16 %v3189, %v3188
      %v3330 = vpack.c.b16 %v3191, %v3190
      %v3331 = vpack.c.b16 %v3193, %v3192
      %v3332 = vpack.c.b16 %v3195, %v3194
      %v3333 = vpack.c.b16 %v3197, %v3196
      %v3334 = vpack.c.b16 %v3199, %v3198
      %v3335 = vpack.c.b16 %v3201, %v3200
      %v3336 = vpack.c.b16 %v3203, %v3202
      %v3337 = vpack.c.b16 %v3205, %v3204
      %v3338 = vpack.c.b16 %v3207, %v3206
      %v3339 = vpack.c.b16 %v3209, %v3208
      %v3340 = vpack.c.b16 %v3211, %v3210
      %v3341 = vpack.c.b16 %v3213, %v3212
      %v3342 = vpack.c.b16 %v3215, %v3214
      %v3343 = vpack.c.b16 %v3217, %v3216
      %v3344 = vpack.c.b16 %v3219, %v3218
      %v3345 = vpack.c.b16 %v3221, %v3220
      %v3346 = vpack.c.b16 %v3223, %v3222
      %v3347 = vpack.c.b16 %v3225, %v3224
      %v3348 = vpack.c.b16 %v3227, %v3226
      %v3349 = vpack.c.b16 %v3229, %v3228
      %v3350 = vpack.c.b16 %v3231, %v3230
      %v3351 = vpack.c.b16 %v3233, %v3232
      %v3352 = vpack.c.b16 %v3235, %v3234
      %v3353 = vpack.c.b16 %v3237, %v3236
      %v3354 = vpack.c.b16 %v3239, %v3238
      %v3355 = vpack.c.b16 %v3241, %v3240
      %v3356 = vpack.c.b16 %v3243, %v3242
      %v3357 = vpack.c.b16 %v3245, %v3244
      %v3358 = vpack.c.b16 %v3247, %v3246
      %v3359 = vpack.c.b16 %v3249, %v3248
      %v3360 = vpack.c.b16 %v3251, %v3250
      %v3361 = vpack.c.b16 %v3253, %v3252
      %v3362 = vpack.c.b16 %v3255, %v3254
      %v3363 = vpack.c.b16 %v3257, %v3256
      %v3364 = vpack.c.b16 %v3259, %v3258
      %v3365 = vpack.c.b16 %v3261, %v3260
      %v3366 = vpack.c.b16 %v3263, %v3262
      %v3367 = vpack.c.b16 %v3265, %v3264
      %v3368 = vpack.c.b16 %v3267, %v3266
      %v3369 = vpack.c.b16 %v3269, %v3268
      %v3370 = vpack.c.b16 %v3271, %v3270
      %v3371 = vpack.c.b16 %v3273, %v3272
      %v3372 = vpack.c.b16 %v3275, %v3274
      %v3373 = vpack.c.b16 %v3277, %v3276
      %v3374 = vpack.c.b16 %v3279, %v3278
      %v3375 = vpack.c.b16 %v3281, %v3280
      %v3376 = vpack.c.b16 %v3283, %v3282
      %v3377 = vpack.c.b16 %v3285, %v3284
      %v3378 = vpack.c.b16 %v3287, %v3286
      %v3379 = vpack.c.b16 %v3289, %v3288
      %v3380 = vpack.c.b16 %v3291, %v3290
      %v3381 = vpack.c.b16 %v3293, %v3292
      %v3382 = vpack.c.b16 %v3295, %v3294
      %v3383 = vpack.c.b16 %v3297, %v3296
      %v3384 = vpack.c.b16 %v3299, %v3298
      %v3385 = vpack.c.b16 %v3301, %v3300
      %v3386 = vpack.c.b16 %v3303, %v3302
      %v3387 = vpack.c.b16 %v3305, %v3304
      %v3388 = vpack.c.b16 %v3307, %v3306
      %v3389 = vpack.c.b16 %v3309, %v3308
      %v3390 = vpack.c.b16 %v3311, %v3310
      %v3391 = vpack.c.b16 %v3313, %v3312
      %v3392 = vpack.c.b16 %v3315, %v3314
      %v3393 = vpack.c.b16 %v3317, %v3316
      %v3394 = vpack.c.b16 %v3319, %v3318
      %v3395 = vpack.c.b16 %v3321, %v3320
      %v3396 = vpack.c.b16 %v3323, %v3322
      %v3397 = vpack.c.b16 %v3325, %v3324
      %3470 = vmatprep.subr.bf16.mxu0 0
      %3471 = vmatpush1.bf16.msra.mxu0 %v3326
      %3472 = vmatprep.subr.bf16.mxu0 0
      %3473 = vmatpush1.bf16.msra.mxu0 %v3327
      %3474 = vmatprep.subr.bf16.mxu0 0
      %3475 = vmatpush1.bf16.msra.mxu0 %v3328
      %3476 = vmatprep.subr.bf16.mxu0 0
      %3477 = vmatpush1.bf16.msra.mxu0 %v3329
      %3478 = vmatprep.subr.bf16.mxu0 0
      %3479 = vmatpush1.bf16.msra.mxu0 %v3330
      %3480 = vmatprep.subr.bf16.mxu0 0
      %3481 = vmatpush1.bf16.msra.mxu0 %v3331
      %3482 = vmatprep.subr.bf16.mxu0 0
      %3483 = vmatpush1.bf16.msra.mxu0 %v3332
      %3484 = vmatprep.subr.bf16.mxu0 0
      %3485 = vmatpush1.bf16.msra.mxu0 %v3333
      %3486 = vmatprep.subr.bf16.mxu0 0
      %3487 = vmatpush1.bf16.msra.mxu0 %v3334
      %3488 = vmatprep.subr.bf16.mxu0 0
      %3489 = vmatpush1.bf16.msra.mxu0 %v3335
      %3490 = vmatprep.subr.bf16.mxu0 0
      %3491 = vmatpush1.bf16.msra.mxu0 %v3336
      %3492 = vmatprep.subr.bf16.mxu0 0
      %3493 = vmatpush1.bf16.msra.mxu0 %v3337
      %3494 = vmatprep.subr.bf16.mxu0 0
      %3495 = vmatpush1.bf16.msra.mxu0 %v3338
      %3496 = vmatprep.subr.bf16.mxu0 0
      %3497 = vmatpush1.bf16.msra.mxu0 %v3339
      %3498 = vmatprep.subr.bf16.mxu0 0
      %3499 = vmatpush1.bf16.msra.mxu0 %v3340
      %3500 = vmatprep.subr.bf16.mxu0 0
      %3501 = vmatpush1.bf16.msra.mxu0 %v3341
      %3502 = vmatprep.mubr.bf16.mxu0 %v594
      %3503 = vmatmul.mubr.bf16.gmra.mrb[0].mxu0 %v548
      %v3504 = vpop.f32.mrb[0].mxu0
      %v3505 = vadd.f32 0.0, %v3504
      %v3506 = vpop.f32.mrb[0].mxu0
      %v3507 = vpop.f32.mrb[0].mxu0
      %v3508 = vadd.f32 0.0, %v3507
      %v3509 = vpop.f32.mrb[0].mxu0
      %3510 = vmatprep.mubr.bf16.mxu0 %v2601
      %3511 = vmatmul.mubr.bf16.gmra.mrb[0].mxu0 %v2558
      %v3512 = vpop.f32.mrb[0].mxu0
      %v3513 = vadd.f32 0.0, %v3512
      %v3514 = vpop.f32.mrb[0].mxu0
      %v3515 = vpop.f32.mrb[0].mxu0
      %v3516 = vadd.f32 0.0, %v3515
      %v3517 = vpop.f32.mrb[0].mxu0
      %3518 = vmatprep.mubr.bf16.mxu0 %v2613
      %3519 = vmatmul.mubr.bf16.gmra.mrb[0].mxu0 %v2559
      %v3520 = vpop.f32.mrb[0].mxu0
      %v3521 = vadd.f32 0.0, %v3520
      %v3522 = vpop.f32.mrb[0].mxu0
      %v3523 = vpop.f32.mrb[0].mxu0
      %v3524 = vadd.f32 0.0, %v3523
      %v3525 = vpop.f32.mrb[0].mxu0
      %3526 = vmatprep.mubr.bf16.mxu0 %v2625
      %3527 = vmatmul.mubr.bf16.gmra.mrb[0].mxu0 %v2560
      %v3528 = vpop.f32.mrb[0].mxu0
      %v3529 = vadd.f32 0.0, %v3528
      %v3530 = vpop.f32.mrb[0].mxu0
      %v3531 = vpop.f32.mrb[0].mxu0
      %v3532 = vadd.f32 0.0, %v3531
      %v3533 = vpop.f32.mrb[0].mxu0
      %3534 = vmatprep.mubr.bf16.mxu0 %v2637
      %3535 = vmatmul.mubr.bf16.gmra.mrb[0].mxu0 %v2561
      %v3536 = vpop.f32.mrb[0].mxu0
      %v3537 = vadd.f32 0.0, %v3536
      %v3538 = vpop.f32.mrb[0].mxu0
      %v3539 = vpop.f32.mrb[0].mxu0
      %v3540 = vadd.f32 0.0, %v3539
      %v3541 = vpop.f32.mrb[0].mxu0
      %3542 = vmatprep.mubr.bf16.mxu0 %v2649
      %3543 = vmatmul.mubr.bf16.gmra.mrb[0].mxu0 %v2562
      %v3544 = vpop.f32.mrb[0].mxu0
      %v3545 = vadd.f32 0.0, %v3544
      %v3546 = vpop.f32.mrb[0].mxu0
      %v3547 = vpop.f32.mrb[0].mxu0
      %v3548 = vadd.f32 0.0, %v3547
      %v3549 = vpop.f32.mrb[0].mxu0
      %3550 = vmatprep.mubr.bf16.mxu0 %v2661
      %3551 = vmatmul.mubr.bf16.gmra.mrb[0].mxu0 %v2563
      %v3552 = vpop.f32.mrb[0].mxu0
      %v3553 = vadd.f32 0.0, %v3552
      %v3554 = vpop.f32.mrb[0].mxu0
      %v3555 = vpop.f32.mrb[0].mxu0
      %v3556 = vadd.f32 0.0, %v3555
      %v3557 = vpop.f32.mrb[0].mxu0
      %3558 = vmatprep.mubr.bf16.mxu0 %v2673
      %3559 = vmatmul.mubr.bf16.gmra.mrb[0].mxu0 %v2564
      %v3560 = vpop.f32.mrb[0].mxu0
      %v3561 = vadd.f32 0.0, %v3560
      %v3562 = vpop.f32.mrb[0].mxu0
      %v3563 = vpop.f32.mrb[0].mxu0
      %v3564 = vadd.f32 0.0, %v3563
      %v3565 = vpop.f32.mrb[0].mxu0
      %3566 = vmatprep.mubr.bf16.mxu0 %v2685
      %3567 = vmatmul.mubr.bf16.gmra.mrb[0].mxu0 %v2565
      %v3568 = vpop.f32.mrb[0].mxu0
      %v3569 = vadd.f32 0.0, %v3568
      %v3570 = vpop.f32.mrb[0].mxu0
      %v3571 = vpop.f32.mrb[0].mxu0
      %v3572 = vadd.f32 0.0, %v3571
      %v3573 = vpop.f32.mrb[0].mxu0
      %3574 = vmatprep.mubr.bf16.mxu0 %v2697
      %3575 = vmatmul.mubr.bf16.gmra.mrb[0].mxu0 %v2566
      %v3576 = vpop.f32.mrb[0].mxu0
      %v3577 = vadd.f32 0.0, %v3576
      %v3578 = vpop.f32.mrb[0].mxu0
      %v3579 = vpop.f32.mrb[0].mxu0
      %v3580 = vadd.f32 0.0, %v3579
      %v3581 = vpop.f32.mrb[0].mxu0
      %3582 = vmatprep.mubr.bf16.mxu0 %v2709
      %3583 = vmatmul.mubr.bf16.gmra.mrb[0].mxu0 %v2567
      %v3584 = vpop.f32.mrb[0].mxu0
      %v3585 = vadd.f32 0.0, %v3584
      %v3586 = vpop.f32.mrb[0].mxu0
      %v3587 = vpop.f32.mrb[0].mxu0
      %v3588 = vadd.f32 0.0, %v3587
      %v3589 = vpop.f32.mrb[0].mxu0
      %3590 = vmatprep.mubr.bf16.mxu0 %v2721
      %3591 = vmatmul.mubr.bf16.gmra.mrb[0].mxu0 %v2568
      %v3592 = vpop.f32.mrb[0].mxu0
      %v3593 = vadd.f32 0.0, %v3592
      %v3594 = vpop.f32.mrb[0].mxu0
      %v3595 = vpop.f32.mrb[0].mxu0
      %v3596 = vadd.f32 0.0, %v3595
      %v3597 = vpop.f32.mrb[0].mxu0
      %3598 = vmatprep.mubr.bf16.mxu0 %v2733
      %3599 = vmatmul.mubr.bf16.gmra.mrb[0].mxu0 %v2569
      %v3600 = vpop.f32.mrb[0].mxu0
      %v3601 = vadd.f32 0.0, %v3600
      %v3602 = vpop.f32.mrb[0].mxu0
      %v3603 = vpop.f32.mrb[0].mxu0
      %v3604 = vadd.f32 0.0, %v3603
      %v3605 = vpop.f32.mrb[0].mxu0
      %3606 = vmatprep.mubr.bf16.mxu0 %v2745
      %3607 = vmatmul.mubr.bf16.gmra.mrb[0].mxu0 %v2570
      %v3608 = vpop.f32.mrb[0].mxu0
      %v3609 = vadd.f32 0.0, %v3608
      %v3610 = vpop.f32.mrb[0].mxu0
      %v3611 = vpop.f32.mrb[0].mxu0
      %v3612 = vadd.f32 0.0, %v3611
      %v3613 = vpop.f32.mrb[0].mxu0
      %3614 = vmatprep.mubr.bf16.mxu0 %v2757
      %3615 = vmatmul.mubr.bf16.gmra.mrb[0].mxu0 %v2571
      %v3616 = vpop.f32.mrb[0].mxu0
      %v3617 = vadd.f32 0.0, %v3616
      %v3618 = vpop.f32.mrb[0].mxu0
      %v3619 = vpop.f32.mrb[0].mxu0
      %v3620 = vadd.f32 0.0, %v3619
      %v3621 = vpop.f32.mrb[0].mxu0
      %3622 = vmatprep.mubr.bf16.mxu0 %v2769
      %3623 = vmatmul.mubr.bf16.gmra.mrb[0].mxu0 %v2572
      %v3624 = vpop.f32.mrb[0].mxu0
      %v3625 = vadd.f32 0.0, %v3624
      %v3626 = vpop.f32.mrb[0].mxu0
      %v3627 = vpop.f32.mrb[0].mxu0
      %v3628 = vadd.f32 0.0, %v3627
      %v3629 = vpop.f32.mrb[0].mxu0
      %3630 = vdwg.mxu0
      %3631 = vmatprep.subr.bf16.mxu0 0
      %3632 = vmatpush1.bf16.msra.mxu0 %v3342
      %3633 = vmatprep.subr.bf16.mxu0 0
      %3634 = vmatpush1.bf16.msra.mxu0 %v3343
      %3635 = vmatprep.subr.bf16.mxu0 0
      %3636 = vmatpush1.bf16.msra.mxu0 %v3344
      %3637 = vmatprep.subr.bf16.mxu0 0
      %3638 = vmatpush1.bf16.msra.mxu0 %v3345
      %3639 = vmatprep.subr.bf16.mxu0 0
      %3640 = vmatpush1.bf16.msra.mxu0 %v3346
      %3641 = vmatprep.subr.bf16.mxu0 0
      %3642 = vmatpush1.bf16.msra.mxu0 %v3347
      %3643 = vmatprep.subr.bf16.mxu0 0
      %3644 = vmatpush1.bf16.msra.mxu0 %v3348
      %3645 = vmatprep.subr.bf16.mxu0 0
      %3646 = vmatpush1.bf16.msra.mxu0 %v3349
      %3647 = vmatprep.subr.bf16.mxu0 0
      %3648 = vmatpush1.bf16.msra.mxu0 %v3350
      %3649 = vmatprep.subr.bf16.mxu0 0
      %3650 = vmatpush1.bf16.msra.mxu0 %v3351
      %3651 = vmatprep.subr.bf16.mxu0 0
      %3652 = vmatpush1.bf16.msra.mxu0 %v3352
      %3653 = vmatprep.subr.bf16.mxu0 0
      %3654 = vmatpush1.bf16.msra.mxu0 %v3353
      %3655 = vmatprep.subr.bf16.mxu0 0
      %3656 = vmatpush1.bf16.msra.mxu0 %v3354
      %3657 = vmatprep.subr.bf16.mxu0 0
      %3658 = vmatpush1.bf16.msra.mxu0 %v3355
      %3659 = vmatprep.subr.bf16.mxu0 0
      %3660 = vmatpush1.bf16.msra.mxu0 %v3356
      %3661 = vmatprep.subr.bf16.mxu0 0
      %3662 = vmatpush1.bf16.msra.mxu0 %v3357
      %3663 = vmatprep.mubr.bf16.mxu0 %v2558
      %3664 = vmatmul.mubr.bf16.gmra.mrb[0].mxu0 %v826
      %v3665 = vpop.f32.mrb[0].mxu0
      %v3666 = vadd.f32 %v3505, %v3665
      %v3667 = vpop.f32.mrb[0].mxu0
      %v3668 = vpop.f32.mrb[0].mxu0
      %v3669 = vadd.f32 %v3508, %v3668
      %v3670 = vpop.f32.mrb[0].mxu0
      %3671 = vmatprep.mubr.bf16.mxu0 %v2559
      %3672 = vmatmul.mubr.bf16.gmra.mrb[0].mxu0 %v2817
      %v3673 = vpop.f32.mrb[0].mxu0
      %v3674 = vadd.f32 %v3513, %v3673
      %v3675 = vpop.f32.mrb[0].mxu0
      %v3676 = vpop.f32.mrb[0].mxu0
      %v3677 = vadd.f32 %v3516, %v3676
      %v3678 = vpop.f32.mrb[0].mxu0
      %3679 = vmatprep.mubr.bf16.mxu0 %v2560
      %3680 = vmatmul.mubr.bf16.gmra.mrb[0].mxu0 %v2820
      %v3681 = vpop.f32.mrb[0].mxu0
      %v3682 = vadd.f32 %v3521, %v3681
      %v3683 = vpop.f32.mrb[0].mxu0
      %v3684 = vpop.f32.mrb[0].mxu0
      %v3685 = vadd.f32 %v3524, %v3684
      %v3686 = vpop.f32.mrb[0].mxu0
      %3687 = vmatprep.mubr.bf16.mxu0 %v2561
      %3688 = vmatmul.mubr.bf16.gmra.mrb[0].mxu0 %v2823
      %v3689 = vpop.f32.mrb[0].mxu0
      %v3690 = vadd.f32 %v3529, %v3689
      %v3691 = vpop.f32.mrb[0].mxu0
      %v3692 = vpop.f32.mrb[0].mxu0
      %v3693 = vadd.f32 %v3532, %v3692
      %v3694 = vpop.f32.mrb[0].mxu0
      %3695 = vmatprep.mubr.bf16.mxu0 %v2562
      %3696 = vmatmul.mubr.bf16.gmra.mrb[0].mxu0 %v2826
      %v3697 = vpop.f32.mrb[0].mxu0
      %v3698 = vadd.f32 %v3537, %v3697
      %v3699 = vpop.f32.mrb[0].mxu0
      %v3700 = vpop.f32.mrb[0].mxu0
      %v3701 = vadd.f32 %v3540, %v3700
      %v3702 = vpop.f32.mrb[0].mxu0
      %3703 = vmatprep.mubr.bf16.mxu0 %v2563
      %3704 = vmatmul.mubr.bf16.gmra.mrb[0].mxu0 %v2829
      %v3705 = vpop.f32.mrb[0].mxu0
      %v3706 = vadd.f32 %v3545, %v3705
      %v3707 = vpop.f32.mrb[0].mxu0
      %v3708 = vpop.f32.mrb[0].mxu0
      %v3709 = vadd.f32 %v3548, %v3708
      %v3710 = vpop.f32.mrb[0].mxu0
      %3711 = vmatprep.mubr.bf16.mxu0 %v2564
      %3712 = vmatmul.mubr.bf16.gmra.mrb[0].mxu0 %v2832
      %v3713 = vpop.f32.mrb[0].mxu0
      %v3714 = vadd.f32 %v3553, %v3713
      %v3715 = vpop.f32.mrb[0].mxu0
      %v3716 = vpop.f32.mrb[0].mxu0
      %v3717 = vadd.f32 %v3556, %v3716
      %v3718 = vpop.f32.mrb[0].mxu0
      %3719 = vmatprep.mubr.bf16.mxu0 %v2565
      %3720 = vmatmul.mubr.bf16.gmra.mrb[0].mxu0 %v2835
      %v3721 = vpop.f32.mrb[0].mxu0
      %v3722 = vadd.f32 %v3561, %v3721
      %v3723 = vpop.f32.mrb[0].mxu0
      %v3724 = vpop.f32.mrb[0].mxu0
      %v3725 = vadd.f32 %v3564, %v3724
      %v3726 = vpop.f32.mrb[0].mxu0
      %3727 = vmatprep.mubr.bf16.mxu0 %v2566
      %3728 = vmatmul.mubr.bf16.gmra.mrb[0].mxu0 %v2838
      %v3729 = vpop.f32.mrb[0].mxu0
      %v3730 = vadd.f32 %v3569, %v3729
      %v3731 = vpop.f32.mrb[0].mxu0
      %v3732 = vpop.f32.mrb[0].mxu0
      %v3733 = vadd.f32 %v3572, %v3732
      %v3734 = vpop.f32.mrb[0].mxu0
      %3735 = vmatprep.mubr.bf16.mxu0 %v2567
      %3736 = vmatmul.mubr.bf16.gmra.mrb[0].mxu0 %v2841
      %v3737 = vpop.f32.mrb[0].mxu0
      %v3738 = vadd.f32 %v3577, %v3737
      %v3739 = vpop.f32.mrb[0].mxu0
      %v3740 = vpop.f32.mrb[0].mxu0
      %v3741 = vadd.f32 %v3580, %v3740
      %v3742 = vpop.f32.mrb[0].mxu0
      %3743 = vmatprep.mubr.bf16.mxu0 %v2568
      %3744 = vmatmul.mubr.bf16.gmra.mrb[0].mxu0 %v2844
      %v3745 = vpop.f32.mrb[0].mxu0
      %v3746 = vadd.f32 %v3585, %v3745
      %v3747 = vpop.f32.mrb[0].mxu0
      %v3748 = vpop.f32.mrb[0].mxu0
      %v3749 = vadd.f32 %v3588, %v3748
      %v3750 = vpop.f32.mrb[0].mxu0
      %3751 = vmatprep.mubr.bf16.mxu0 %v2569
      %3752 = vmatmul.mubr.bf16.gmra.mrb[0].mxu0 %v2847
      %v3753 = vpop.f32.mrb[0].mxu0
      %v3754 = vadd.f32 %v3593, %v3753
      %v3755 = vpop.f32.mrb[0].mxu0
      %v3756 = vpop.f32.mrb[0].mxu0
      %v3757 = vadd.f32 %v3596, %v3756
      %v3758 = vpop.f32.mrb[0].mxu0
      %3759 = vmatprep.mubr.bf16.mxu0 %v2570
      %3760 = vmatmul.mubr.bf16.gmra.mrb[0].mxu0 %v2850
      %v3761 = vpop.f32.mrb[0].mxu0
      %v3762 = vadd.f32 %v3601, %v3761
      %v3763 = vpop.f32.mrb[0].mxu0
      %v3764 = vpop.f32.mrb[0].mxu0
      %v3765 = vadd.f32 %v3604, %v3764
      %v3766 = vpop.f32.mrb[0].mxu0
      %3767 = vmatprep.mubr.bf16.mxu0 %v2571
      %3768 = vmatmul.mubr.bf16.gmra.mrb[0].mxu0 %v2853
      %v3769 = vpop.f32.mrb[0].mxu0
      %v3770 = vadd.f32 %v3609, %v3769
      %v3771 = vpop.f32.mrb[0].mxu0
      %v3772 = vpop.f32.mrb[0].mxu0
      %v3773 = vadd.f32 %v3612, %v3772
      %v3774 = vpop.f32.mrb[0].mxu0
      %3775 = vmatprep.mubr.bf16.mxu0 %v2572
      %3776 = vmatmul.mubr.bf16.gmra.mrb[0].mxu0 %v2856
      %v3777 = vpop.f32.mrb[0].mxu0
      %v3778 = vadd.f32 %v3617, %v3777
      %v3779 = vpop.f32.mrb[0].mxu0
      %v3780 = vpop.f32.mrb[0].mxu0
      %v3781 = vadd.f32 %v3620, %v3780
      %v3782 = vpop.f32.mrb[0].mxu0
      %3783 = vmatprep.mubr.bf16.mxu0 %v2573
      %3784 = vmatmul.mubr.bf16.gmra.mrb[0].mxu0 %v2859
      %v3785 = vpop.f32.mrb[0].mxu0
      %v3786 = vadd.f32 %v3625, %v3785
      %v3787 = vpop.f32.mrb[0].mxu0
      %v3788 = vpop.f32.mrb[0].mxu0
      %v3789 = vadd.f32 %v3628, %v3788
      %v3790 = vpop.f32.mrb[0].mxu0
      %3791 = vdwg.mxu0
      %3792 = vmatprep.subr.bf16.mxu0 0
      %3793 = vmatpush1.bf16.msra.mxu0 %v3358
      %3794 = vmatprep.subr.bf16.mxu0 0
      %3795 = vmatpush1.bf16.msra.mxu0 %v3359
      %3796 = vmatprep.subr.bf16.mxu0 0
      %3797 = vmatpush1.bf16.msra.mxu0 %v3360
      %3798 = vmatprep.subr.bf16.mxu0 0
      %3799 = vmatpush1.bf16.msra.mxu0 %v3361
      %3800 = vmatprep.subr.bf16.mxu0 0
      %3801 = vmatpush1.bf16.msra.mxu0 %v3362
      %3802 = vmatprep.subr.bf16.mxu0 0
      %3803 = vmatpush1.bf16.msra.mxu0 %v3363
      %3804 = vmatprep.subr.bf16.mxu0 0
      %3805 = vmatpush1.bf16.msra.mxu0 %v3364
      %3806 = vmatprep.subr.bf16.mxu0 0
      %3807 = vmatpush1.bf16.msra.mxu0 %v3365
      %3808 = vmatprep.subr.bf16.mxu0 0
      %3809 = vmatpush1.bf16.msra.mxu0 %v3366
      %3810 = vmatprep.subr.bf16.mxu0 0
      %3811 = vmatpush1.bf16.msra.mxu0 %v3367
      %3812 = vmatprep.subr.bf16.mxu0 0
      %3813 = vmatpush1.bf16.msra.mxu0 %v3368
      %3814 = vmatprep.subr.bf16.mxu0 0
      %3815 = vmatpush1.bf16.msra.mxu0 %v3369
      %3816 = vmatprep.subr.bf16.mxu0 0
      %3817 = vmatpush1.bf16.msra.mxu0 %v3370
      %3818 = vmatprep.subr.bf16.mxu0 0
      %3819 = vmatpush1.bf16.msra.mxu0 %v3371
      %3820 = vmatprep.subr.bf16.mxu0 0
      %3821 = vmatpush1.bf16.msra.mxu0 %v3372
      %3822 = vmatprep.subr.bf16.mxu0 0
      %3823 = vmatpush1.bf16.msra.mxu0 %v3373
      %3824 = vmatprep.mubr.bf16.mxu0 %v2817
      %3825 = vmatmul.mubr.bf16.gmra.mrb[0].mxu0 %v2601
      %v3826 = vpop.f32.mrb[0].mxu0
      %v3827 = vadd.f32 %v3666, %v3826
      %v3828 = vpop.f32.mrb[0].mxu0
      %v3829 = vpop.f32.mrb[0].mxu0
      %v3830 = vadd.f32 %v3669, %v3829
      %v3831 = vpop.f32.mrb[0].mxu0
      %3832 = vmatprep.mubr.bf16.mxu0 %v2820
      %3833 = vmatmul.mubr.bf16.gmra.mrb[0].mxu0 %v2613
      %v3834 = vpop.f32.mrb[0].mxu0
      %v3835 = vadd.f32 %v3674, %v3834
      %v3836 = vpop.f32.mrb[0].mxu0
      %v3837 = vpop.f32.mrb[0].mxu0
      %v3838 = vadd.f32 %v3677, %v3837
      %v3839 = vpop.f32.mrb[0].mxu0
      %3840 = vmatprep.mubr.bf16.mxu0 %v2823
      %3841 = vmatmul.mubr.bf16.gmra.mrb[0].mxu0 %v2625
      %v3842 = vpop.f32.mrb[0].mxu0
      %v3843 = vadd.f32 %v3682, %v3842
      %v3844 = vpop.f32.mrb[0].mxu0
      %v3845 = vpop.f32.mrb[0].mxu0
      %v3846 = vadd.f32 %v3685, %v3845
      %v3847 = vpop.f32.mrb[0].mxu0
      %3848 = vmatprep.mubr.bf16.mxu0 %v2826
      %3849 = vmatmul.mubr.bf16.gmra.mrb[0].mxu0 %v2637
      %v3850 = vpop.f32.mrb[0].mxu0
      %v3851 = vadd.f32 %v3690, %v3850
      %v3852 = vpop.f32.mrb[0].mxu0
      %v3853 = vpop.f32.mrb[0].mxu0
      %v3854 = vadd.f32 %v3693, %v3853
      %v3855 = vpop.f32.mrb[0].mxu0
      %3856 = vmatprep.mubr.bf16.mxu0 %v2829
      %3857 = vmatmul.mubr.bf16.gmra.mrb[0].mxu0 %v2649
      %v3858 = vpop.f32.mrb[0].mxu0
      %v3859 = vadd.f32 %v3698, %v3858
      %v3860 = vpop.f32.mrb[0].mxu0
      %v3861 = vpop.f32.mrb[0].mxu0
      %v3862 = vadd.f32 %v3701, %v3861
      %v3863 = vpop.f32.mrb[0].mxu0
      %3864 = vmatprep.mubr.bf16.mxu0 %v2832
      %3865 = vmatmul.mubr.bf16.gmra.mrb[0].mxu0 %v2661
      %v3866 = vpop.f32.mrb[0].mxu0
      %v3867 = vadd.f32 %v3706, %v3866
      %v3868 = vpop.f32.mrb[0].mxu0
      %v3869 = vpop.f32.mrb[0].mxu0
      %v3870 = vadd.f32 %v3709, %v3869
      %v3871 = vpop.f32.mrb[0].mxu0
      %3872 = vmatprep.mubr.bf16.mxu0 %v2835
      %3873 = vmatmul.mubr.bf16.gmra.mrb[0].mxu0 %v2673
      %v3874 = vpop.f32.mrb[0].mxu0
      %v3875 = vadd.f32 %v3714, %v3874
      %v3876 = vpop.f32.mrb[0].mxu0
      %v3877 = vpop.f32.mrb[0].mxu0
      %v3878 = vadd.f32 %v3717, %v3877
      %v3879 = vpop.f32.mrb[0].mxu0
      %3880 = vmatprep.mubr.bf16.mxu0 %v2838
      %3881 = vmatmul.mubr.bf16.gmra.mrb[0].mxu0 %v2685
      %v3882 = vpop.f32.mrb[0].mxu0
      %v3883 = vadd.f32 %v3722, %v3882
      %v3884 = vpop.f32.mrb[0].mxu0
      %v3885 = vpop.f32.mrb[0].mxu0
      %v3886 = vadd.f32 %v3725, %v3885
      %v3887 = vpop.f32.mrb[0].mxu0
      %3888 = vmatprep.mubr.bf16.mxu0 %v2841
      %3889 = vmatmul.mubr.bf16.gmra.mrb[0].mxu0 %v2697
      %v3890 = vpop.f32.mrb[0].mxu0
      %v3891 = vadd.f32 %v3730, %v3890
      %v3892 = vpop.f32.mrb[0].mxu0
      %v3893 = vpop.f32.mrb[0].mxu0
      %v3894 = vadd.f32 %v3733, %v3893
      %v3895 = vpop.f32.mrb[0].mxu0
      %3896 = vmatprep.mubr.bf16.mxu0 %v2844
      %3897 = vmatmul.mubr.bf16.gmra.mrb[0].mxu0 %v2709
      %v3898 = vpop.f32.mrb[0].mxu0
      %v3899 = vadd.f32 %v3738, %v3898
      %v3900 = vpop.f32.mrb[0].mxu0
      %v3901 = vpop.f32.mrb[0].mxu0
      %v3902 = vadd.f32 %v3741, %v3901
      %v3903 = vpop.f32.mrb[0].mxu0
      %3904 = vmatprep.mubr.bf16.mxu0 %v2847
      %3905 = vmatmul.mubr.bf16.gmra.mrb[0].mxu0 %v2721
      %v3906 = vpop.f32.mrb[0].mxu0
      %v3907 = vadd.f32 %v3746, %v3906
      %v3908 = vpop.f32.mrb[0].mxu0
      %v3909 = vpop.f32.mrb[0].mxu0
      %v3910 = vadd.f32 %v3749, %v3909
      %v3911 = vpop.f32.mrb[0].mxu0
      %3912 = vmatprep.mubr.bf16.mxu0 %v2850
      %3913 = vmatmul.mubr.bf16.gmra.mrb[0].mxu0 %v2733
      %v3914 = vpop.f32.mrb[0].mxu0
      %v3915 = vadd.f32 %v3754, %v3914
      %v3916 = vpop.f32.mrb[0].mxu0
      %v3917 = vpop.f32.mrb[0].mxu0
      %v3918 = vadd.f32 %v3757, %v3917
      %v3919 = vpop.f32.mrb[0].mxu0
      %3920 = vmatprep.mubr.bf16.mxu0 %v2853
      %3921 = vmatmul.mubr.bf16.gmra.mrb[0].mxu0 %v2745
      %v3922 = vpop.f32.mrb[0].mxu0
      %v3923 = vadd.f32 %v3762, %v3922
      %v3924 = vpop.f32.mrb[0].mxu0
      %v3925 = vpop.f32.mrb[0].mxu0
      %v3926 = vadd.f32 %v3765, %v3925
      %v3927 = vpop.f32.mrb[0].mxu0
      %3928 = vmatprep.mubr.bf16.mxu0 %v2856
      %3929 = vmatmul.mubr.bf16.gmra.mrb[0].mxu0 %v2757
      %v3930 = vpop.f32.mrb[0].mxu0
      %v3931 = vadd.f32 %v3770, %v3930
      %v3932 = vpop.f32.mrb[0].mxu0
      %v3933 = vpop.f32.mrb[0].mxu0
      %v3934 = vadd.f32 %v3773, %v3933
      %v3935 = vpop.f32.mrb[0].mxu0
      %3936 = vmatprep.mubr.bf16.mxu0 %v2859
      %3937 = vmatmul.mubr.bf16.gmra.mrb[0].mxu0 %v2769
      %v3938 = vpop.f32.mrb[0].mxu0
      %v3939 = vadd.f32 %v3778, %v3938
      %v3940 = vpop.f32.mrb[0].mxu0
      %v3941 = vpop.f32.mrb[0].mxu0
      %v3942 = vadd.f32 %v3781, %v3941
      %v3943 = vpop.f32.mrb[0].mxu0
      %3944 = vmatprep.mubr.bf16.mxu0 %v2892
      %3945 = vmatmul.mubr.bf16.gmra.mrb[0].mxu0 %v2886
      %v3946 = vpop.f32.mrb[0].mxu0
      %v3947 = vadd.f32 %v3786, %v3946
      %v3948 = vpop.f32.mrb[0].mxu0
      %v3949 = vpop.f32.mrb[0].mxu0
      %v3950 = vadd.f32 %v3789, %v3949
      %v3951 = vpop.f32.mrb[0].mxu0
      %3952 = vdwg.mxu0
      %3953 = vmatprep.subr.bf16.mxu0 0
      %3954 = vmatpush1.bf16.msra.mxu0 %v3374
      %3955 = vmatprep.subr.bf16.mxu0 0
      %3956 = vmatpush1.bf16.msra.mxu0 %v3375
      %3957 = vmatprep.subr.bf16.mxu0 0
      %3958 = vmatpush1.bf16.msra.mxu0 %v3376
      %3959 = vmatprep.subr.bf16.mxu0 0
      %3960 = vmatpush1.bf16.msra.mxu0 %v3377
      %3961 = vmatprep.subr.bf16.mxu0 0
      %3962 = vmatpush1.bf16.msra.mxu0 %v3378
      %3963 = vmatprep.subr.bf16.mxu0 0
      %3964 = vmatpush1.bf16.msra.mxu0 %v3379
      %3965 = vmatprep.subr.bf16.mxu0 0
      %3966 = vmatpush1.bf16.msra.mxu0 %v3380
      %3967 = vmatprep.subr.bf16.mxu0 0
      %3968 = vmatpush1.bf16.msra.mxu0 %v3381
      %3969 = vmatprep.subr.bf16.mxu0 0
      %3970 = vmatpush1.bf16.msra.mxu0 %v3382
      %3971 = vmatprep.subr.bf16.mxu0 0
      %3972 = vmatpush1.bf16.msra.mxu0 %v3383
      %3973 = vmatprep.subr.bf16.mxu0 0
      %3974 = vmatpush1.bf16.msra.mxu0 %v3384
      %3975 = vmatprep.subr.bf16.mxu0 0
      %3976 = vmatpush1.bf16.msra.mxu0 %v3385
      %3977 = vmatprep.subr.bf16.mxu0 0
      %3978 = vmatpush1.bf16.msra.mxu0 %v3386
      %3979 = vmatprep.subr.bf16.mxu0 0
      %3980 = vmatpush1.bf16.msra.mxu0 %v3387
      %3981 = vmatprep.subr.bf16.mxu0 0
      %3982 = vmatpush1.bf16.msra.mxu0 %v3388
      %3983 = vmatprep.subr.bf16.mxu0 0
      %3984 = vmatpush1.bf16.msra.mxu0 %v3389
      %3985 = vmatprep.mubr.bf16.mxu0 %v2613
      %3986 = vmatmul.mubr.bf16.gmra.mrb[0].mxu0 %v2559
      %v3987 = vpop.f32.mrb[0].mxu0
      %v3988 = vadd.f32 %v3827, %v3987
      %v3989 = vpop.f32.mrb[0].mxu0
      %v3990 = vpop.f32.mrb[0].mxu0
      %v3991 = vadd.f32 %v3830, %v3990
      %v3992 = vpop.f32.mrb[0].mxu0
      %3993 = vmatprep.mubr.bf16.mxu0 %v2625
      %3994 = vmatmul.mubr.bf16.gmra.mrb[0].mxu0 %v2560
      %v3995 = vpop.f32.mrb[0].mxu0
      %v3996 = vadd.f32 %v3835, %v3995
      %v3997 = vpop.f32.mrb[0].mxu0
      %v3998 = vpop.f32.mrb[0].mxu0
      %v3999 = vadd.f32 %v3838, %v3998
      %v4000 = vpop.f32.mrb[0].mxu0
      %4001 = vmatprep.mubr.bf16.mxu0 %v2637
      %4002 = vmatmul.mubr.bf16.gmra.mrb[0].mxu0 %v2561
      %v4003 = vpop.f32.mrb[0].mxu0
      %v4004 = vadd.f32 %v3843, %v4003
      %v4005 = vpop.f32.mrb[0].mxu0
      %v4006 = vpop.f32.mrb[0].mxu0
      %v4007 = vadd.f32 %v3846, %v4006
      %v4008 = vpop.f32.mrb[0].mxu0
      %4009 = vmatprep.mubr.bf16.mxu0 %v2649
      %4010 = vmatmul.mubr.bf16.gmra.mrb[0].mxu0 %v2562
      %v4011 = vpop.f32.mrb[0].mxu0
      %v4012 = vadd.f32 %v3851, %v4011
      %v4013 = vpop.f32.mrb[0].mxu0
      %v4014 = vpop.f32.mrb[0].mxu0
      %v4015 = vadd.f32 %v3854, %v4014
      %v4016 = vpop.f32.mrb[0].mxu0
      %4017 = vmatprep.mubr.bf16.mxu0 %v2661
      %4018 = vmatmul.mubr.bf16.gmra.mrb[0].mxu0 %v2563
      %v4019 = vpop.f32.mrb[0].mxu0
      %v4020 = vadd.f32 %v3859, %v4019
      %v4021 = vpop.f32.mrb[0].mxu0
      %v4022 = vpop.f32.mrb[0].mxu0
      %v4023 = vadd.f32 %v3862, %v4022
      %v4024 = vpop.f32.mrb[0].mxu0
      %4025 = vmatprep.mubr.bf16.mxu0 %v2673
      %4026 = vmatmul.mubr.bf16.gmra.mrb[0].mxu0 %v2564
      %v4027 = vpop.f32.mrb[0].mxu0
      %v4028 = vadd.f32 %v3867, %v4027
      %v4029 = vpop.f32.mrb[0].mxu0
      %v4030 = vpop.f32.mrb[0].mxu0
      %v4031 = vadd.f32 %v3870, %v4030
      %v4032 = vpop.f32.mrb[0].mxu0
      %4033 = vmatprep.mubr.bf16.mxu0 %v2685
      %4034 = vmatmul.mubr.bf16.gmra.mrb[0].mxu0 %v2565
      %v4035 = vpop.f32.mrb[0].mxu0
      %v4036 = vadd.f32 %v3875, %v4035
      %v4037 = vpop.f32.mrb[0].mxu0
      %v4038 = vpop.f32.mrb[0].mxu0
      %v4039 = vadd.f32 %v3878, %v4038
      %v4040 = vpop.f32.mrb[0].mxu0
      %4041 = vmatprep.mubr.bf16.mxu0 %v2697
      %4042 = vmatmul.mubr.bf16.gmra.mrb[0].mxu0 %v2566
      %v4043 = vpop.f32.mrb[0].mxu0
      %v4044 = vadd.f32 %v3883, %v4043
      %v4045 = vpop.f32.mrb[0].mxu0
      %v4046 = vpop.f32.mrb[0].mxu0
      %v4047 = vadd.f32 %v3886, %v4046
      %v4048 = vpop.f32.mrb[0].mxu0
      %4049 = vmatprep.mubr.bf16.mxu0 %v2709
      %4050 = vmatmul.mubr.bf16.gmra.mrb[0].mxu0 %v2567
      %v4051 = vpop.f32.mrb[0].mxu0
      %v4052 = vadd.f32 %v3891, %v4051
      %v4053 = vpop.f32.mrb[0].mxu0
      %v4054 = vpop.f32.mrb[0].mxu0
      %v4055 = vadd.f32 %v3894, %v4054
      %v4056 = vpop.f32.mrb[0].mxu0
      %4057 = vmatprep.mubr.bf16.mxu0 %v2721
      %4058 = vmatmul.mubr.bf16.gmra.mrb[0].mxu0 %v2568
      %v4059 = vpop.f32.mrb[0].mxu0
      %v4060 = vadd.f32 %v3899, %v4059
      %v4061 = vpop.f32.mrb[0].mxu0
      %v4062 = vpop.f32.mrb[0].mxu0
      %v4063 = vadd.f32 %v3902, %v4062
      %v4064 = vpop.f32.mrb[0].mxu0
      %4065 = vmatprep.mubr.bf16.mxu0 %v2733
      %4066 = vmatmul.mubr.bf16.gmra.mrb[0].mxu0 %v2569
      %v4067 = vpop.f32.mrb[0].mxu0
      %v4068 = vadd.f32 %v3907, %v4067
      %v4069 = vpop.f32.mrb[0].mxu0
      %v4070 = vpop.f32.mrb[0].mxu0
      %v4071 = vadd.f32 %v3910, %v4070
      %v4072 = vpop.f32.mrb[0].mxu0
      %4073 = vmatprep.mubr.bf16.mxu0 %v2745
      %4074 = vmatmul.mubr.bf16.gmra.mrb[0].mxu0 %v2570
      %v4075 = vpop.f32.mrb[0].mxu0
      %v4076 = vadd.f32 %v3915, %v4075
      %v4077 = vpop.f32.mrb[0].mxu0
      %v4078 = vpop.f32.mrb[0].mxu0
      %v4079 = vadd.f32 %v3918, %v4078
      %v4080 = vpop.f32.mrb[0].mxu0
      %4081 = vmatprep.mubr.bf16.mxu0 %v2757
      %4082 = vmatmul.mubr.bf16.gmra.mrb[0].mxu0 %v2571
      %v4083 = vpop.f32.mrb[0].mxu0
      %v4084 = vadd.f32 %v3923, %v4083
      %v4085 = vpop.f32.mrb[0].mxu0
      %v4086 = vpop.f32.mrb[0].mxu0
      %v4087 = vadd.f32 %v3926, %v4086
      %v4088 = vpop.f32.mrb[0].mxu0
      %4089 = vmatprep.mubr.bf16.mxu0 %v2769
      %4090 = vmatmul.mubr.bf16.gmra.mrb[0].mxu0 %v2572
      %v4091 = vpop.f32.mrb[0].mxu0
      %v4092 = vadd.f32 %v3931, %v4091
      %v4093 = vpop.f32.mrb[0].mxu0
      %v4094 = vpop.f32.mrb[0].mxu0
      %v4095 = vadd.f32 %v3934, %v4094
      %v4096 = vpop.f32.mrb[0].mxu0
      %4097 = vmatprep.mubr.bf16.mxu0 %v2886
      %4098 = vmatmul.mubr.bf16.gmra.mrb[0].mxu0 %v2573
      %v4099 = vpop.f32.mrb[0].mxu0
      %v4100 = vadd.f32 %v3939, %v4099
      %v4101 = vpop.f32.mrb[0].mxu0
      %v4102 = vpop.f32.mrb[0].mxu0
      %v4103 = vadd.f32 %v3942, %v4102
      %v4104 = vpop.f32.mrb[0].mxu0
      %4105 = vmatprep.mubr.bf16.mxu0 %v594
      %4106 = vmatmul.mubr.bf16.gmra.mrb[0].mxu0 %v548
      %v4107 = vpop.f32.mrb[0].mxu0
      %v4108 = vadd.f32 %v3947, %v4107
      %v4109 = vpop.f32.mrb[0].mxu0
      %v4110 = vpop.f32.mrb[0].mxu0
      %v4111 = vadd.f32 %v3950, %v4110
      %v4112 = vpop.f32.mrb[0].mxu0
      %4113 = vdwg.mxu0
      %4114 = vmatprep.subr.bf16.mxu0 0
      %4115 = vmatpush1.bf16.msra.mxu0 %v3390
      %4116 = vmatprep.subr.bf16.mxu0 0
      %4117 = vmatpush1.bf16.msra.mxu0 %v3391
      %4118 = vmatprep.subr.bf16.mxu0 0
      %4119 = vmatpush1.bf16.msra.mxu0 %v3392
      %4120 = vmatprep.subr.bf16.mxu0 0
      %4121 = vmatpush1.bf16.msra.mxu0 %v3393
      %4122 = vmatprep.subr.bf16.mxu0 0
      %4123 = vmatpush1.bf16.msra.mxu0 %v3394
      %4124 = vmatprep.subr.bf16.mxu0 0
      %4125 = vmatpush1.bf16.msra.mxu0 %v3395
      %4126 = vmatprep.subr.bf16.mxu0 0
      %4127 = vmatpush1.bf16.msra.mxu0 %v3396
      %4128 = vmatprep.subr.bf16.mxu0 0
      %4129 = vmatpush1.bf16.msra.mxu0 %v3397
      %4130 = vmatprep.subr.bf16.mxu0 0
      %4131 = vmatpush1.bf16.msra.mxu0 0
      %4132 = vmatprep.subr.bf16.mxu0 0
      %4133 = vmatpush1.bf16.msra.mxu0 0
      %4134 = vmatprep.subr.bf16.mxu0 0
      %4135 = vmatpush1.bf16.msra.mxu0 0
      %4136 = vmatprep.subr.bf16.mxu0 0
      %4137 = vmatpush1.bf16.msra.mxu0 0
      %4138 = vmatprep.subr.bf16.mxu0 0
      %4139 = vmatpush1.bf16.msra.mxu0 0
      %4140 = vmatprep.subr.bf16.mxu0 0
      %4141 = vmatpush1.bf16.msra.mxu0 0
      %4142 = vmatprep.subr.bf16.mxu0 0
      %4143 = vmatpush1.bf16.msra.mxu0 0
      %4144 = vmatprep.subr.bf16.mxu0 0
      %4145 = vmatpush1.bf16.msra.mxu0 0
      %4146 = vmatprep.mubr.bf16.mxu0 0
      %4147 = vmatmul.mubr.bf16.gmra.mrb[0].mxu0 %v2820
      %v4148 = vpop.f32.mrb[0].mxu0
      %v4149 = vadd.f32 %v3988, %v4148
      %v4150 = vpop.f32.mrb[0].mxu0
      %v4151 = vpop.f32.mrb[0].mxu0
      %v4152 = vadd.f32 %v3991, %v4151
      %v4153 = vpop.f32.mrb[0].mxu0
      %4154 = vmatprep.mubr.bf16.mxu0 0
      %4155 = vmatmul.mubr.bf16.gmra.mrb[0].mxu0 %v2823
      %v4156 = vpop.f32.mrb[0].mxu0
      %v4157 = vadd.f32 %v3996, %v4156
      %v4158 = vpop.f32.mrb[0].mxu0
      %v4159 = vpop.f32.mrb[0].mxu0
      %v4160 = vadd.f32 %v3999, %v4159
      %v4161 = vpop.f32.mrb[0].mxu0
      %4162 = vmatprep.mubr.bf16.mxu0 0
      %4163 = vmatmul.mubr.bf16.gmra.mrb[0].mxu0 %v2826
      %v4164 = vpop.f32.mrb[0].mxu0
      %v4165 = vadd.f32 %v4004, %v4164
      %v4166 = vpop.f32.mrb[0].mxu0
      %v4167 = vpop.f32.mrb[0].mxu0
      %v4168 = vadd.f32 %v4007, %v4167
      %v4169 = vpop.f32.mrb[0].mxu0
      %4170 = vmatprep.mubr.bf16.mxu0 0
      %4171 = vmatmul.mubr.bf16.gmra.mrb[0].mxu0 %v2829
      %v4172 = vpop.f32.mrb[0].mxu0
      %v4173 = vadd.f32 %v4012, %v4172
      %v4174 = vpop.f32.mrb[0].mxu0
      %v4175 = vpop.f32.mrb[0].mxu0
      %v4176 = vadd.f32 %v4015, %v4175
      %v4177 = vpop.f32.mrb[0].mxu0
      %4178 = vmatprep.mubr.bf16.mxu0 0
      %4179 = vmatmul.mubr.bf16.gmra.mrb[0].mxu0 %v2832
      %v4180 = vpop.f32.mrb[0].mxu0
      %v4181 = vadd.f32 %v4020, %v4180
      %v4182 = vpop.f32.mrb[0].mxu0
      %v4183 = vpop.f32.mrb[0].mxu0
      %v4184 = vadd.f32 %v4023, %v4183
      %v4185 = vpop.f32.mrb[0].mxu0
      %4186 = vmatprep.mubr.bf16.mxu0 0
      %4187 = vmatmul.mubr.bf16.gmra.mrb[0].mxu0 %v2835
      %v4188 = vpop.f32.mrb[0].mxu0
      %v4189 = vadd.f32 %v4028, %v4188
      %v4190 = vpop.f32.mrb[0].mxu0
      %v4191 = vpop.f32.mrb[0].mxu0
      %v4192 = vadd.f32 %v4031, %v4191
      %v4193 = vpop.f32.mrb[0].mxu0
      %4194 = vmatprep.mubr.bf16.mxu0 0
      %4195 = vmatmul.mubr.bf16.gmra.mrb[0].mxu0 %v2838
      %v4196 = vpop.f32.mrb[0].mxu0
      %v4197 = vadd.f32 %v4036, %v4196
      %v4198 = vpop.f32.mrb[0].mxu0
      %v4199 = vpop.f32.mrb[0].mxu0
      %v4200 = vadd.f32 %v4039, %v4199
      %v4201 = vpop.f32.mrb[0].mxu0
      %4202 = vmatprep.mubr.bf16.mxu0 0
      %4203 = vmatmul.mubr.bf16.gmra.mrb[0].mxu0 %v2841
      %v4204 = vpop.f32.mrb[0].mxu0
      %v4205 = vadd.f32 %v4044, %v4204
      %v4206 = vpop.f32.mrb[0].mxu0
      %v4207 = vpop.f32.mrb[0].mxu0
      %v4208 = vadd.f32 %v4047, %v4207
      %v4209 = vpop.f32.mrb[0].mxu0
      %4210 = vmatprep.mubr.bf16.mxu0 0
      %4211 = vmatmul.mubr.bf16.gmra.mrb[0].mxu0 %v2844
      %v4212 = vpop.f32.mrb[0].mxu0
      %v4213 = vadd.f32 %v4052, %v4212
      %v4214 = vpop.f32.mrb[0].mxu0
      %v4215 = vpop.f32.mrb[0].mxu0
      %v4216 = vadd.f32 %v4055, %v4215
      %v4217 = vpop.f32.mrb[0].mxu0
      %4218 = vmatprep.mubr.bf16.mxu0 0
      %4219 = vmatmul.mubr.bf16.gmra.mrb[0].mxu0 %v2847
      %v4220 = vpop.f32.mrb[0].mxu0
      %v4221 = vadd.f32 %v4060, %v4220
      %v4222 = vpop.f32.mrb[0].mxu0
      %v4223 = vpop.f32.mrb[0].mxu0
      %v4224 = vadd.f32 %v4063, %v4223
      %v4225 = vpop.f32.mrb[0].mxu0
      %4226 = vmatprep.mubr.bf16.mxu0 0
      %4227 = vmatmul.mubr.bf16.gmra.mrb[0].mxu0 %v2850
      %v4228 = vpop.f32.mrb[0].mxu0
      %v4229 = vadd.f32 %v4068, %v4228
      %v4230 = vpop.f32.mrb[0].mxu0
      %v4231 = vpop.f32.mrb[0].mxu0
      %v4232 = vadd.f32 %v4071, %v4231
      %v4233 = vpop.f32.mrb[0].mxu0
      %4234 = vmatprep.mubr.bf16.mxu0 0
      %4235 = vmatmul.mubr.bf16.gmra.mrb[0].mxu0 %v2853
      %v4236 = vpop.f32.mrb[0].mxu0
      %v4237 = vadd.f32 %v4076, %v4236
      %v4238 = vpop.f32.mrb[0].mxu0
      %v4239 = vpop.f32.mrb[0].mxu0
      %v4240 = vadd.f32 %v4079, %v4239
      %v4241 = vpop.f32.mrb[0].mxu0
      %4242 = vmatprep.mubr.bf16.mxu0 0
      %4243 = vmatmul.mubr.bf16.gmra.mrb[0].mxu0 %v2856
      %v4244 = vpop.f32.mrb[0].mxu0
      %v4245 = vadd.f32 %v4084, %v4244
      %v4246 = vpop.f32.mrb[0].mxu0
      %v4247 = vpop.f32.mrb[0].mxu0
      %v4248 = vadd.f32 %v4087, %v4247
      %v4249 = vpop.f32.mrb[0].mxu0
      %4250 = vmatprep.mubr.bf16.mxu0 0
      %4251 = vmatmul.mubr.bf16.gmra.mrb[0].mxu0 %v2859
      %v4252 = vpop.f32.mrb[0].mxu0
      %v4253 = vadd.f32 %v4092, %v4252
      %v4254 = vpop.f32.mrb[0].mxu0
      %v4255 = vpop.f32.mrb[0].mxu0
      %v4256 = vadd.f32 %v4095, %v4255
      %v4257 = vpop.f32.mrb[0].mxu0
      %4258 = vmatprep.mubr.bf16.mxu0 0
      %4259 = vmatmul.mubr.bf16.gmra.mrb[0].mxu0 %v2892
      %v4260 = vpop.f32.mrb[0].mxu0
      %v4261 = vadd.f32 %v4100, %v4260
      %v4262 = vpop.f32.mrb[0].mxu0
      %v4263 = vpop.f32.mrb[0].mxu0
      %v4264 = vadd.f32 %v4103, %v4263
      %v4265 = vpop.f32.mrb[0].mxu0
      %4266 = vmatprep.mubr.bf16.mxu0 0
      %4267 = vmatmul.mubr.bf16.gmra.mrb[0].mxu0 %v826
      %v4268 = vpop.f32.mrb[0].mxu0
      %v4269 = vadd.f32 %v4108, %v4268
      %v4270 = vpop.f32.mrb[0].mxu0
      %v4271 = vpop.f32.mrb[0].mxu0
      %v4272 = vadd.f32 %v4111, %v4271
      %v4273 = vpop.f32.mrb[0].mxu0
      %4274 = vdwg.mxu0
      %v4275 = vld [vmem:[%s5] sm:$0x1]
      %v4277 = vlaneseq
      %v4278 = vshrl.u32 %v4277, 7
      %v4279 = vsub.s32 0, %v4278
      %v4280 = vrot.slane %v4275, %v4279
      %v4282 = vmul.f32 %v4149, %v4280
      %v4283 = vmul.f32 %v4152, %v4280
      %v4284 = vmul.f32 %v4157, %v4280
      %v4285 = vmul.f32 %v4160, %v4280
      %v4286 = vmul.f32 %v4165, %v4280
      %v4287 = vmul.f32 %v4168, %v4280
      %v4288 = vmul.f32 %v4173, %v4280
      %v4289 = vmul.f32 %v4176, %v4280
      %v4290 = vmul.f32 %v4181, %v4280
      %v4291 = vmul.f32 %v4184, %v4280
      %v4292 = vmul.f32 %v4189, %v4280
      %v4293 = vmul.f32 %v4192, %v4280
      %v4294 = vmul.f32 %v4197, %v4280
      %v4295 = vmul.f32 %v4200, %v4280
      %v4296 = vmul.f32 %v4205, %v4280
      %v4297 = vmul.f32 %v4208, %v4280
      %v4298 = vmul.f32 %v4213, %v4280
      %v4299 = vmul.f32 %v4216, %v4280
      %v4300 = vmul.f32 %v4221, %v4280
      %v4301 = vmul.f32 %v4224, %v4280
      %v4302 = vmul.f32 %v4229, %v4280
      %v4303 = vmul.f32 %v4232, %v4280
      %v4304 = vmul.f32 %v4237, %v4280
      %v4305 = vmul.f32 %v4240, %v4280
      %v4306 = vmul.f32 %v4245, %v4280
      %v4307 = vmul.f32 %v4248, %v4280
      %v4308 = vmul.f32 %v4253, %v4280
      %v4309 = vmul.f32 %v4256, %v4280
      %v4310 = vmul.f32 %v4261, %v4280
      %v4311 = vmul.f32 %v4264, %v4280
      %v4312 = vmul.f32 %v4269, %v4280
      %v4313 = vmul.f32 %v4272, %v4280
      %v4314 = vld [vmem:[%s6] sm:$0x1]
      %v4316 = vlaneseq
      %v4317 = vshrl.u32 %v4316, 7
      %v4318 = vsub.s32 0, %v4317
      %v4319 = vrot.slane %v4314, %v4318
      %v4321 = vadd.f32 %v4282, %v4319
      %v4322 = vadd.f32 %v4283, %v4319
      %v4323 = vadd.f32 %v4284, %v4319
      %v4324 = vadd.f32 %v4285, %v4319
      %v4325 = vadd.f32 %v4286, %v4319
      %v4326 = vadd.f32 %v4287, %v4319
      %v4327 = vadd.f32 %v4288, %v4319
      %v4328 = vadd.f32 %v4289, %v4319
      %v4329 = vadd.f32 %v4290, %v4319
      %v4330 = vadd.f32 %v4291, %v4319
      %v4331 = vadd.f32 %v4292, %v4319
      %v4332 = vadd.f32 %v4293, %v4319
      %v4333 = vadd.f32 %v4294, %v4319
      %v4334 = vadd.f32 %v4295, %v4319
      %v4335 = vadd.f32 %v4296, %v4319
      %v4336 = vadd.f32 %v4297, %v4319
      %v4337 = vadd.f32 %v4298, %v4319
      %v4338 = vadd.f32 %v4299, %v4319
      %v4339 = vadd.f32 %v4300, %v4319
      %v4340 = vadd.f32 %v4301, %v4319
      %v4341 = vadd.f32 %v4302, %v4319
      %v4342 = vadd.f32 %v4303, %v4319
      %v4343 = vadd.f32 %v4304, %v4319
      %v4344 = vadd.f32 %v4305, %v4319
      %v4345 = vadd.f32 %v4306, %v4319
      %v4346 = vadd.f32 %v4307, %v4319
      %v4347 = vadd.f32 %v4308, %v4319
      %v4348 = vadd.f32 %v4309, %v4319
      %v4349 = vadd.f32 %v4310, %v4319
      %v4350 = vadd.f32 %v4311, %v4319
      %v4351 = vadd.f32 %v4312, %v4319
      %v4352 = vadd.f32 %v4313, %v4319
      %v4353 = vunpack.c.l.bf16 %v280
      %v4354 = vunpack.c.l.bf16 %v281
      %v4355 = vunpack.c.l.bf16 %v282
      %v4356 = vunpack.c.l.bf16 %v283
      %v4357 = vunpack.c.l.bf16 %v284
      %v4358 = vunpack.c.l.bf16 %v285
      %v4359 = vunpack.c.l.bf16 %v286
      %v4360 = vunpack.c.l.bf16 %v287
      %v4361 = vunpack.c.l.bf16 %v288
      %v4362 = vunpack.c.l.bf16 %v289
      %v4363 = vunpack.c.l.bf16 %v290
      %v4364 = vunpack.c.l.bf16 %v291
      %v4365 = vunpack.c.l.bf16 %v292
      %v4366 = vunpack.c.l.bf16 %v293
      %v4367 = vunpack.c.l.bf16 %v294
      %v4368 = vunpack.c.l.bf16 %v295
      %v4369 = vunpack.c.l.bf16 %v296
      %v4370 = vunpack.c.l.bf16 %v297
      %v4371 = vunpack.c.l.bf16 %v298
      %v4372 = vunpack.c.l.bf16 %v299
      %v4373 = vunpack.c.l.bf16 %v300
      %v4374 = vunpack.c.l.bf16 %v301
      %v4375 = vunpack.c.l.bf16 %v302
      %v4376 = vunpack.c.l.bf16 %v303
      %v4377 = vunpack.c.l.bf16 %v304
      %v4378 = vunpack.c.l.bf16 %v305
      %v4379 = vunpack.c.l.bf16 %v306
      %v4380 = vunpack.c.l.bf16 %v307
      %v4381 = vunpack.c.l.bf16 %v308
      %v4382 = vunpack.c.l.bf16 %v309
      %v4383 = vunpack.c.l.bf16 %v310
      %v4384 = vunpack.c.l.bf16 %v311
      %v4385 = vadd.f32 %v4321, %v4353
      %v4386 = vadd.f32 %v4322, %v4354
      %v4387 = vadd.f32 %v4323, %v4355
      %v4388 = vadd.f32 %v4324, %v4356
      %v4389 = vadd.f32 %v4325, %v4357
      %v4390 = vadd.f32 %v4326, %v4358
      %v4391 = vadd.f32 %v4327, %v4359
      %v4392 = vadd.f32 %v4328, %v4360
      %v4393 = vadd.f32 %v4329, %v4361
      %v4394 = vadd.f32 %v4330, %v4362
      %v4395 = vadd.f32 %v4331, %v4363
      %v4396 = vadd.f32 %v4332, %v4364
      %v4397 = vadd.f32 %v4333, %v4365
      %v4398 = vadd.f32 %v4334, %v4366
      %v4399 = vadd.f32 %v4335, %v4367
      %v4400 = vadd.f32 %v4336, %v4368
      %v4401 = vadd.f32 %v4337, %v4369
      %v4402 = vadd.f32 %v4338, %v4370
      %v4403 = vadd.f32 %v4339, %v4371
      %v4404 = vadd.f32 %v4340, %v4372
      %v4405 = vadd.f32 %v4341, %v4373
      %v4406 = vadd.f32 %v4342, %v4374
      %v4407 = vadd.f32 %v4343, %v4375
      %v4408 = vadd.f32 %v4344, %v4376
      %v4409 = vadd.f32 %v4345, %v4377
      %v4410 = vadd.f32 %v4346, %v4378
      %v4411 = vadd.f32 %v4347, %v4379
      %v4412 = vadd.f32 %v4348, %v4380
      %v4413 = vadd.f32 %v4349, %v4381
      %v4414 = vadd.f32 %v4350, %v4382
      %v4415 = vadd.f32 %v4351, %v4383
      %v4416 = vadd.f32 %v4352, %v4384
      %v4417 = vmax.f32 %v4385, 0.0
      %v4418 = vmax.f32 %v4386, 0.0
      %v4419 = vmax.f32 %v4387, 0.0
      %v4420 = vmax.f32 %v4388, 0.0
      %v4421 = vmax.f32 %v4389, 0.0
      %v4422 = vmax.f32 %v4390, 0.0
      %v4423 = vmax.f32 %v4391, 0.0
      %v4424 = vmax.f32 %v4392, 0.0
      %v4425 = vmax.f32 %v4393, 0.0
      %v4426 = vmax.f32 %v4394, 0.0
      %v4427 = vmax.f32 %v4395, 0.0
      %v4428 = vmax.f32 %v4396, 0.0
      %v4429 = vmax.f32 %v4397, 0.0
      %v4430 = vmax.f32 %v4398, 0.0
      %v4431 = vmax.f32 %v4399, 0.0
      %v4432 = vmax.f32 %v4400, 0.0
      %v4433 = vmax.f32 %v4401, 0.0
      %v4434 = vmax.f32 %v4402, 0.0
      %v4435 = vmax.f32 %v4403, 0.0
      %v4436 = vmax.f32 %v4404, 0.0
      %v4437 = vmax.f32 %v4405, 0.0
      %v4438 = vmax.f32 %v4406, 0.0
      %v4439 = vmax.f32 %v4407, 0.0
      %v4440 = vmax.f32 %v4408, 0.0
      %v4441 = vmax.f32 %v4409, 0.0
      %v4442 = vmax.f32 %v4410, 0.0
      %v4443 = vmax.f32 %v4411, 0.0
      %v4444 = vmax.f32 %v4412, 0.0
      %v4445 = vmax.f32 %v4413, 0.0
      %v4446 = vmax.f32 %v4414, 0.0
      %v4447 = vmax.f32 %v4415, 0.0
      %v4448 = vmax.f32 %v4416, 0.0
      %4449 = vst [vmem:[%s278] sm:$0xff] %v4417
      %4450 = vst [vmem:[%s278 + $0x8] sm:$0xff] %v4418
      %4451 = vst [vmem:[%s278 + $0x10] sm:$0xff] %v4419
      %4452 = vst [vmem:[%s278 + $0x18] sm:$0xff] %v4420
      %4453 = vst [vmem:[%s278 + $0x20] sm:$0xff] %v4421
      %4454 = vst [vmem:[%s278 + $0x28] sm:$0xff] %v4422
      %4455 = vst [vmem:[%s278 + $0x30] sm:$0xff] %v4423
      %4456 = vst [vmem:[%s278 + $0x38] sm:$0xff] %v4424
      %4457 = vst [vmem:[%s278 + $0x40] sm:$0xff] %v4425
      %4458 = vst [vmem:[%s278 + $0x48] sm:$0xff] %v4426
      %4459 = vst [vmem:[%s278 + $0x50] sm:$0xff] %v4427
      %4460 = vst [vmem:[%s278 + $0x58] sm:$0xff] %v4428
      %4461 = vst [vmem:[%s278 + $0x60] sm:$0xff] %v4429
      %4462 = vst [vmem:[%s278 + $0x68] sm:$0xff] %v4430
      %4463 = vst [vmem:[%s278 + $0x70] sm:$0xff] %v4431
      %4464 = vst [vmem:[%s278 + $0x78] sm:$0xff] %v4432
      %4465 = vst [vmem:[%s278 + $0x80] sm:$0xff] %v4433
      %4466 = vst [vmem:[%s278 + $0x88] sm:$0xff] %v4434
      %4467 = vst [vmem:[%s278 + $0x90] sm:$0xff] %v4435
      %4468 = vst [vmem:[%s278 + $0x98] sm:$0xff] %v4436
      %4469 = vst [vmem:[%s278 + $0xa0] sm:$0xff] %v4437
      %4470 = vst [vmem:[%s278 + $0xa8] sm:$0xff] %v4438
      %4471 = vst [vmem:[%s278 + $0xb0] sm:$0xff] %v4439
      %4472 = vst [vmem:[%s278 + $0xb8] sm:$0xff] %v4440
      %4473 = vst [vmem:[%s278 + $0xc0] sm:$0xff] %v4441
      %4474 = vst [vmem:[%s278 + $0xc8] sm:$0xff] %v4442
      %4475 = vst [vmem:[%s278 + $0xd0] sm:$0xff] %v4443
      %4476 = vst [vmem:[%s278 + $0xd8] sm:$0xff] %v4444
      %4477 = vst [vmem:[%s278 + $0xe0] sm:$0xff] %v4445
      %4478 = vst [vmem:[%s278 + $0xe8] sm:$0xff] %v4446
      %4479 = vst [vmem:[%s278 + $0xf0] sm:$0xff] %v4447
      %4480 = vst [vmem:[%s278 + $0xf8] sm:$0xff] %v4448
      %p4481 = scmp.lt.s32.totalorder %s18, 1
      %s4482 = scalar_select %p4481, %s18, 1
      %s4483 = smul.addr %s4482, 32
      %s4484 = smul.addr %s4483, 8
      %s4485 = scalar_lea.vmem %s7, %s4484
      // Predicated region
      $region49: #{basic_block_forward.1} parent=47 // pred_check
        %p4486 = pneg %p188
      $region50: #{basic_block_forward.1} parent=47 // pred_check_branch
        %4488 = sbr.rel (%p4486) target = $region52
      $region51: #{basic_block_forward.1} parent=47 // pred_region
        _
      $region52: #{basic_block_forward.1} parent=47 // pred_fallthru
        _
    $region48: #{basic_block_forward.1} parent=5 // pred_fallthru
      _
    %p4489 = scmp.le.s32.totalorder 2, %s13
    // Predicated region
    $region53: #{basic_block_forward.1} parent=5 // pred_check
      %p4490 = pneg %p4489
    $region54: #{basic_block_forward.1} parent=5 // pred_check_branch
      %4492 = sbr.rel (%p4490) target = $region56
    $region55: #{basic_block_forward.1} parent=5 // pred_region
      %s4493 = ssub.s32 %s13, 2
      // Predicated region
      $region57: #{basic_block_forward.1} parent=55 // pred_check
        %p4494 = pneg %p194
      $region58: #{basic_block_forward.1} parent=55 // pred_check_branch
        %4496 = sbr.rel (%p4494) target = $region60
      $region59: #{basic_block_forward.1} parent=55 // pred_region
        %p4497 = scmp.lt.s32.totalorder %s19, 1
        %s4498 = scalar_select %p4497, %s19, 1
        %s4499 = smul.addr %s4498, 32
        %s4500 = smul.addr %s4499, 8
        %s4501 = scalar_lea.vmem %s7, %s4500
      $region60: #{basic_block_forward.1} parent=55 // pred_fallthru
        _
    $region56: #{basic_block_forward.1} parent=5 // pred_fallthru
      _
  $region6: #{basic_block_forward.1} parent=0 // loop_footer
    %s17 = sadd.s32 1, %s13
  $region7: #{basic_block_forward.1} parent=0 // loop_footer_branch
    %12 = sbr.rel target = $region3
  $region8: #{basic_block_forward.1} parent=0 // loop_exit
    _

</llo_original>
